<compile_context>
chip_gen: v5e
topology: v5e:2x2
jax: 0.10.0
libtpu: 0.0.40
codegen_flags: <defaults>
</compile_context>

<pallas_src>
import functools

import jax
import jax.numpy as jnp
from jax import lax
from jax.experimental import pallas as pl
from jax.experimental.pallas import tpu as pltpu

EPS = 1e-5
EXPANSION = 4
LANES = 128


def _rup(v, q):
    return (v + q - 1) // q * q


def _vmem_limit_bytes():
    """Budget-aware scoped-VMEM limit (v5e/v6e: 128 MiB phys, v7x: 64 MiB)."""
    try:
        cap = int(pltpu.get_tpu_info().vmem_capacity_bytes)
    except Exception:
        cap = 64 * 1024 * 1024
    return int(min(cap * 3 // 4, 96 * 1024 * 1024))


def _pick_tm(m, row_bytes, vmem_limit, target=512):
    """Row tile for the flattened (N*H*W) stages, derived from the VMEM budget.

    Prefers an exact divisor of m (no partial blocks); otherwise returns the
    capped target and the kernels mask out-of-range rows from the BN stats.
    """
    cap = max(64, (vmem_limit // 2) // max(row_bytes, 1))
    t = min(target, cap)
    t = max(8, (t // 8) * 8)
    if m <= t:
        return m                         # full extent -> always a legal block
    for cand in range(t, 7, -8):         # exact divisors, multiples of 8
        if m % cand == 0:
            return cand
    return t                             # partial last block (stats masked)


def _row_mask(i, tm, rows_valid):
    rows = lax.broadcasted_iota(jnp.int32, (tm, 1), 0) + i * tm
    return rows < rows_valid


# ---------------------------------------------------------------------------
# Stage 1: fused conv1(1x1) + shortcut conv(1x1) matmul, bn1 / bn_s statistics
#          (shortcut values are NOT written to HBM -- recomputed in stage 4)
# ---------------------------------------------------------------------------
def _stage1_kernel(x_ref, w_ref, y1_ref, s1_ref, q1_ref, ss_ref, qs_ref,
                   *, p_pad, rows_valid, tm):
    i = pl.program_id(0)
    # one bf16 MXU matmul sharing the activation LHS for conv1 and shortcut
    y = jnp.dot(x_ref[...], w_ref[...], preferred_element_type=jnp.float32)
    y1 = y[:, :p_pad]                    # lane-aligned split (p_pad % 128 == 0)
    sc = y[:, p_pad:]
    y1_ref[...] = y1.astype(y1_ref.dtype)

    if rows_valid % tm != 0:             # static: only for a partial last block
        valid = _row_mask(i, tm, rows_valid)
        y1 = jnp.where(valid, y1, 0.0)
        sc = jnp.where(valid, sc, 0.0)

    # per-block partial sums (megacore-safe; reduced in the wrapper)
    s1_ref[...] = jnp.sum(y1, axis=0, keepdims=True)[None]
    q1_ref[...] = jnp.sum(y1 * y1, axis=0, keepdims=True)[None]
    ss_ref[...] = jnp.sum(sc, axis=0, keepdims=True)[None]
    qs_ref[...] = jnp.sum(sc * sc, axis=0, keepdims=True)[None]


# ---------------------------------------------------------------------------
# Stage 2: folded bn1+relu, conv2(3x3, pad=1) as 9 accumulating MXU matmuls
#          over shifted views of a bf16 padded scratch, bn2 statistics
# ---------------------------------------------------------------------------
def _stage2_kernel(y1_ref, s1_ref, t1_ref, w2_ref, y2_ref, s2_ref, q2_ref,
                   pad_ref, *, hh, ww, p_pad):
    s1 = s1_ref[...].reshape(1, 1, p_pad)
    t1 = t1_ref[...].reshape(1, 1, p_pad)
    a1 = jnp.maximum(y1_ref[0].astype(jnp.float32) * s1 + t1, 0.0)   # (H,W,P)

    # scratch is uninitialized / core-local: re-zero the padded buffer each
    # step (cheap vs the 9 matmuls), then write the interior.
    pad_ref[...] = jnp.zeros_like(pad_ref)
    pad_ref[1:hh + 1, 1:ww + 1, :] = a1.astype(pad_ref.dtype)

    # 3x3 conv = 9 accumulating matmuls with shifted windows (no im2col buffer)
    acc = jnp.zeros((hh * ww, p_pad), jnp.float32)
    for t in range(9):
        kh, kw = divmod(t, 3)
        patch = pad_ref[kh:kh + hh, kw:kw + ww, :].reshape(hh * ww, p_pad)
        acc = acc + jnp.dot(patch, w2_ref[t],
                            preferred_element_type=jnp.float32)

    y2_ref[...] = acc.reshape(1, hh, ww, p_pad).astype(y2_ref.dtype)
    s2_ref[...] = jnp.sum(acc, axis=0, keepdims=True)[None]
    q2_ref[...] = jnp.sum(acc * acc, axis=0, keepdims=True)[None]


# ---------------------------------------------------------------------------
# Stage 3: folded bn2+relu, conv3(1x1), bn3 statistics
# ---------------------------------------------------------------------------
def _stage3_kernel(y2_ref, s2_ref, t2_ref, w3_ref, z3_ref, s3_ref, q3_ref,
                   *, rows_valid, tm):
    i = pl.program_id(0)
    a2 = jnp.maximum(y2_ref[...].astype(jnp.float32) * s2_ref[...]
                     + t2_ref[...], 0.0)
    z3 = jnp.dot(a2.astype(jnp.bfloat16), w3_ref[...],
                 preferred_element_type=jnp.float32)
    z3_ref[...] = z3.astype(z3_ref.dtype)

    if rows_valid % tm != 0:
        valid = _row_mask(i, tm, rows_valid)
        z3 = jnp.where(valid, z3, 0.0)

    s3_ref[...] = jnp.sum(z3, axis=0, keepdims=True)[None]
    q3_ref[...] = jnp.sum(z3 * z3, axis=0, keepdims=True)[None]


# ---------------------------------------------------------------------------
# Stage 4: folded bn3 + recomputed shortcut (x @ ws, folded bn_s) + add + relu
# ---------------------------------------------------------------------------
def _stage4_kernel(z3_ref, x_ref, ws_ref, s3_ref, t3_ref, ss_ref, ts_ref,
                   o_ref):
    sc = jnp.dot(x_ref[...], ws_ref[...], preferred_element_type=jnp.float32)
    main = z3_ref[...].astype(jnp.float32) * s3_ref[...] + t3_ref[...]
    o_ref[...] = jnp.maximum(main + sc * ss_ref[...] + ts_ref[...], 0.0)


def _fold_bn(s_part, q_part, gamma_p, beta_p, count):
    """Reduce per-block partial sums and fold batch stats into scale/shift."""
    s = jnp.sum(s_part, axis=(0, 1))
    q = jnp.sum(q_part, axis=(0, 1))
    mean = s / count
    var = jnp.maximum(q / count - mean * mean, 0.0)       # biased variance
    scale = gamma_p * lax.rsqrt(var + EPS)
    shift = beta_p - mean * scale
    return (scale.reshape(1, -1).astype(jnp.float32),
            shift.reshape(1, -1).astype(jnp.float32))


def _forward_nhwc(x, params):
    n, hh, ww, cin = x.shape
    planes = params['w1'].shape[0]
    cout = params['w3'].shape[0]
    m = n * hh * ww

    cin_p = _rup(cin, LANES)
    p_p = _rup(planes, LANES)
    co_p = _rup(cout, LANES)

    vlim = _vmem_limit_bytes()
    row_bytes = 4 * (cin_p + p_p + 2 * co_p)       # bf16 + double-buffering
    tm = _pick_tm(m, row_bytes, vlim)
    gblk = pl.cdiv(m, tm)

    # ---- weight / parameter preprocessing (tiny, XLA-side) ----------------
    def pad2(a, r, c):
        return jnp.pad(a, ((0, r - a.shape[0]), (0, c - a.shape[1])))

    w1 = pad2(jnp.transpose(params['w1'][:, :, 0, 0]), cin_p, p_p)
    wsc = pad2(jnp.transpose(params['ws'][:, :, 0, 0]), cin_p, co_p)
    w1s = jnp.concatenate([w1, wsc], axis=1).astype(jnp.bfloat16)   # (Cin,P+Co)
    w2t = jnp.transpose(params['w2'], (2, 3, 1, 0))                 # (3,3,in,out)
    w2r = jnp.pad(w2t, ((0, 0), (0, 0), (0, p_p - planes), (0, p_p - planes))
                  ).reshape(9, p_p, p_p).astype(jnp.bfloat16)
    w3p = pad2(jnp.transpose(params['w3'][:, :, 0, 0]), p_p, co_p
               ).astype(jnp.bfloat16)
    ws4 = wsc.astype(jnp.bfloat16)

    def pad1(v, c):
        return jnp.pad(v.astype(jnp.float32), (0, c - v.shape[0]))

    g1, b1 = pad1(params['g1'], p_p), pad1(params['b1'], p_p)
    g2, b2 = pad1(params['g2'], p_p), pad1(params['b2'], p_p)
    g3, b3 = pad1(params['g3'], co_p), pad1(params['b3'], co_p)
    gs, bs = pad1(params['gs'], co_p), pad1(params['bs'], co_p)

    x_flat = jnp.pad(x.reshape(m, cin), ((0, 0), (0, cin_p - cin))
                     ).astype(jnp.bfloat16)

    cp = pltpu.CompilerParams(dimension_semantics=("parallel",),
                              vmem_limit_bytes=vlim)

    # ---- stage 1: fused conv1 + shortcut matmul, bn1 / bn_s stats ---------
    y1, s1p, q1p, ssp, qsp = pl.pallas_call(
        functools.partial(_stage1_kernel, p_pad=p_p, rows_valid=m, tm=tm),
        grid=(gblk,),
        in_specs=[pl.BlockSpec((tm, cin_p), lambda i: (i, 0)),
                  pl.BlockSpec((cin_p, p_p + co_p), lambda i: (0, 0))],
        out_specs=[pl.BlockSpec((tm, p_p), lambda i: (i, 0)),
                   pl.BlockSpec((1, 1, p_p), lambda i: (i, 0, 0)),
                   pl.BlockSpec((1, 1, p_p), lambda i: (i, 0, 0)),
                   pl.BlockSpec((1, 1, co_p), lambda i: (i, 0, 0)),
                   pl.BlockSpec((1, 1, co_p), lambda i: (i, 0, 0))],
        out_shape=[jax.ShapeDtypeStruct((m, p_p), jnp.bfloat16),
                   jax.ShapeDtypeStruct((gblk, 1, p_p), jnp.float32),
                   jax.ShapeDtypeStruct((gblk, 1, p_p), jnp.float32),
                   jax.ShapeDtypeStruct((gblk, 1, co_p), jnp.float32),
                   jax.ShapeDtypeStruct((gblk, 1, co_p), jnp.float32)],
        compiler_params=cp,
    )(x_flat, w1s)

    s1, t1 = _fold_bn(s1p, q1p, g1, b1, m)
    ss, ts = _fold_bn(ssp, qsp, gs, bs, m)

    # ---- stage 2: folded bn1+relu, 3x3 conv (9 accumulating matmuls) ------
    y2, s2p, q2p = pl.pallas_call(
        functools.partial(_stage2_kernel, hh=hh, ww=ww, p_pad=p_p),
        grid=(n,),
        in_specs=[pl.BlockSpec((1, hh, ww, p_p), lambda b: (b, 0, 0, 0)),
                  pl.BlockSpec((1, p_p), lambda b: (0, 0)),
                  pl.BlockSpec((1, p_p), lambda b: (0, 0)),
                  pl.BlockSpec((9, p_p, p_p), lambda b: (0, 0, 0))],
        out_specs=[pl.BlockSpec((1, hh, ww, p_p), lambda b: (b, 0, 0, 0)),
                   pl.BlockSpec((1, 1, p_p), lambda b: (b, 0, 0)),
                   pl.BlockSpec((1, 1, p_p), lambda b: (b, 0, 0))],
        out_shape=[jax.ShapeDtypeStruct((n, hh, ww, p_p), jnp.bfloat16),
                   jax.ShapeDtypeStruct((n, 1, p_p), jnp.float32),
                   jax.ShapeDtypeStruct((n, 1, p_p), jnp.float32)],
        scratch_shapes=[pltpu.VMEM((hh + 2, ww + 2, p_p), jnp.bfloat16)],
        compiler_params=cp,
    )(y1.reshape(n, hh, ww, p_p), s1, t1, w2r)

    s2, t2 = _fold_bn(s2p, q2p, g2, b2, m)

    # ---- stage 3: folded bn2+relu, conv3 1x1, bn3 stats --------------------
    z3, s3p, q3p = pl.pallas_call(
        functools.partial(_stage3_kernel, rows_valid=m, tm=tm),
        grid=(gblk,),
        in_specs=[pl.BlockSpec((tm, p_p), lambda i: (i, 0)),
                  pl.BlockSpec((1, p_p), lambda i: (0, 0)),
                  pl.BlockSpec((1, p_p), lambda i: (0, 0)),
                  pl.BlockSpec((p_p, co_p), lambda i: (0, 0))],
        out_specs=[pl.BlockSpec((tm, co_p), lambda i: (i, 0)),
                   pl.BlockSpec((1, 1, co_p), lambda i: (i, 0, 0)),
                   pl.BlockSpec((1, 1, co_p), lambda i: (i, 0, 0))],
        out_shape=[jax.ShapeDtypeStruct((m, co_p), jnp.bfloat16),
                   jax.ShapeDtypeStruct((gblk, 1, co_p), jnp.float32),
                   jax.ShapeDtypeStruct((gblk, 1, co_p), jnp.float32)],
        compiler_params=cp,
    )(y2.reshape(m, p_p), s2, t2, w3p)

    s3, t3 = _fold_bn(s3p, q3p, g3, b3, m)

    # ---- stage 4: bn3 + recomputed shortcut (x@ws, bn_s) + add + relu -----
    out_flat = pl.pallas_call(
        _stage4_kernel,
        grid=(gblk,),
        in_specs=[pl.BlockSpec((tm, co_p), lambda i: (i, 0)),
                  pl.BlockSpec((tm, cin_p), lambda i: (i, 0)),
                  pl.BlockSpec((cin_p, co_p), lambda i: (0, 0)),
                  pl.BlockSpec((1, co_p), lambda i: (0, 0)),
                  pl.BlockSpec((1, co_p), lambda i: (0, 0)),
                  pl.BlockSpec((1, co_p), lambda i: (0, 0)),
                  pl.BlockSpec((1, co_p), lambda i: (0, 0))],
        out_specs=pl.BlockSpec((tm, co_p), lambda i: (i, 0)),
        out_shape=jax.ShapeDtypeStruct((m, co_p), jnp.float32),
        compiler_params=cp,
    )(z3, x_flat, ws4, s3, t3, ss, ts)

    return out_flat[:, :cout].reshape(n, hh, ww, cout)


# NHWC hot path (no layout transposes)
bottleneck_forward_nhwc = jax.jit(_forward_nhwc)


@jax.jit
def bottleneck_forward(x_nchw, params):
    """NCHW adapter matching the PyTorch module interface."""
    x = jnp.transpose(x_nchw, (0, 2, 3, 1))
    out = _forward_nhwc(x, params)
    return jnp.transpose(out, (0, 3, 1, 2))


# ---------------------------------------------------------------------------
# Pure-JAX reference (mirrors the PyTorch forward, NCHW, training-mode BN)
# ---------------------------------------------------------------------------
def ref_forward(x, params):
    dn = ('NCHW', 'OIHW', 'NCHW')

    def bn(y, g, b):
        mean = jnp.mean(y, axis=(0, 2, 3), keepdims=True)
        var = jnp.mean((y - mean) ** 2, axis=(0, 2, 3), keepdims=True)
        return ((y - mean) / jnp.sqrt(var + EPS)
                * g.reshape(1, -1, 1, 1) + b.reshape(1, -1, 1, 1))

    def conv(a, w, pad):
        return lax.conv_general_dilated(a, w, (1, 1), pad,
                                        dimension_numbers=dn)

    out = jax.nn.relu(bn(conv(x, params['w1'], 'VALID'),
                         params['g1'], params['b1']))
    out = jax.nn.relu(bn(conv(out, params['w2'], 'SAME'),
                         params['g2'], params['b2']))
    out = bn(conv(out, params['w3'], 'VALID'), params['g3'], params['b3'])
    sc = bn(conv(x, params['ws'], 'VALID'), params['gs'], params['bs'])
    return jax.nn.relu(out + sc)


if __name__ == "__main__":
    key = jax.random.PRNGKey(0)
    N, Cin, H, W = 2, 32, 8, 8          # in_planes = 32
    planes = 16
    Cout = EXPANSION * planes           # 64 -> projection shortcut is active
    ks = jax.random.split(key, 13)

    params = {
        'w1': 0.1 * jax.random.normal(ks[0], (planes, Cin, 1, 1), jnp.float32),
        'w2': 0.1 * jax.random.normal(ks[1], (planes, planes, 3, 3), jnp.float32),
        'w3': 0.1 * jax.random.normal(ks[2], (Cout, planes, 1, 1), jnp.float32),
        'ws': 0.1 * jax.random.normal(ks[3], (Cout, Cin, 1, 1), jnp.float32),
        'g1': 1.0 + 0.1 * jax.random.normal(ks[4], (planes,), jnp.float32),
        'b1': 0.1 * jax.random.normal(ks[5], (planes,), jnp.float32),
        'g2': 1.0 + 0.1 * jax.random.normal(ks[6], (planes,), jnp.float32),
        'b2': 0.1 * jax.random.normal(ks[7], (planes,), jnp.float32),
        'g3': 1.0 + 0.1 * jax.random.normal(ks[8], (Cout,), jnp.float32),
        'b3': 0.1 * jax.random.normal(ks[9], (Cout,), jnp.float32),
        'gs': 1.0 + 0.1 * jax.random.normal(ks[10], (Cout,), jnp.float32),
        'bs': 0.1 * jax.random.normal(ks[11], (Cout,), jnp.float32),
    }
    x = jax.random.normal(ks[12], (N, Cin, H, W), jnp.float32)

    out = jax.block_until_ready(bottleneck_forward(x, params))
    ref = jax.block_until_ready(ref_forward(x, params))

    assert out.shape == (N, Cout, H, W)
    # Matmuls run in bf16 on the MXU (f32 accumulation) and inter-stage
    # activations are stored in bf16, so the tolerance is looser than a
    # pure-f32 comparison.
    max_diff = float(jnp.max(jnp.abs(out - ref)))
    assert jnp.allclose(out, ref, atol=1e-1, rtol=1e-1), \
        f"max abs diff {max_diff}"

    print("KERNEL_OK")
</pallas_src>

<mosaic_0001>
module attributes {stable_mosaic.version = 11 : i64} {
  func.func @_stage1_kernel(%arg0: i32, %arg1: memref<128x128xbf16, #tpu.memory_space<vmem>>, %arg2: memref<128x256xbf16, #tpu.memory_space<vmem>>, %arg3: memref<128x128xbf16, #tpu.memory_space<vmem>>, %arg4: memref<1x1x128xf32, #tpu.memory_space<vmem>>, %arg5: memref<1x1x128xf32, #tpu.memory_space<vmem>>, %arg6: memref<1x1x128xf32, #tpu.memory_space<vmem>>, %arg7: memref<1x1x128xf32, #tpu.memory_space<vmem>>) attributes {dimension_semantics = [#tpu.dimension_semantics<parallel>], iteration_bounds = array<i64: 1>, scalar_prefetch = 0 : i64, scratch_operands = 0 : i64, tpu.core_type = #tpu.core_type<tc>, window_params = [{transform_indices = @transform_0, window_bounds = array<i64: 128, 128>}, {pipeline_mode = #tpu.pipeline_mode<synchronous>, transform_indices = @transform_1, window_bounds = array<i64: 128, 256>}, {transform_indices = @transform_2, window_bounds = array<i64: 128, 128>}, {transform_indices = @transform_3, window_bounds = array<i64: 1, 1, 128>}, {transform_indices = @transform_4, window_bounds = array<i64: 1, 1, 128>}, {transform_indices = @transform_5, window_bounds = array<i64: 1, 1, 128>}, {transform_indices = @transform_6, window_bounds = array<i64: 1, 1, 128>}]} {
    %c0 = arith.constant 0 : index
    %c0_0 = arith.constant 0 : index
    %0 = vector.load %arg1[%c0, %c0_0] : memref<128x128xbf16, #tpu.memory_space<vmem>>, vector<128x128xbf16>
    %c0_1 = arith.constant 0 : index
    %c0_2 = arith.constant 0 : index
    %1 = vector.load %arg2[%c0_1, %c0_2] : memref<128x256xbf16, #tpu.memory_space<vmem>>, vector<128x256xbf16>
    %cst = arith.constant dense<0.000000e+00> : vector<128x256xf32>
    %2 = tpu.matmul %0, %1, %cst {dimension_numbers = #tpu.dot_dimension_numbers<[1], [0], [0], [1], [0, 0, 1, 1], [], []>} : vector<128x128xbf16>, vector<128x256xbf16>, vector<128x256xf32> -> vector<128x256xf32>
    %3 = vector.extract_strided_slice %2 {offsets = [0, 0], sizes = [128, 128], strides = [1, 1]} : vector<128x256xf32> to vector<128x128xf32>
    %4 = vector.extract_strided_slice %2 {offsets = [0, 128], sizes = [128, 128], strides = [1, 1]} : vector<128x256xf32> to vector<128x128xf32>
    %5 = arith.truncf %3 : vector<128x128xf32> to vector<128x128xbf16>
    %c0_3 = arith.constant 0 : index
    %c0_4 = arith.constant 0 : index
    %6 = vector.load %arg3[%c0_3, %c0_4] : memref<128x128xbf16, #tpu.memory_space<vmem>>, vector<128x128xbf16>
    tpu.vector_store %arg3[%c0_3, %c0_4], %5 {strides = array<i32>} : memref<128x128xbf16, #tpu.memory_space<vmem>>, vector<128x128xbf16>,
    %cst_5 = arith.constant dense<0.000000e+00> : vector<128xf32>
    %7 = vector.multi_reduction <add>, %3, %cst_5 [0] : vector<128x128xf32> to vector<128xf32>
    %8 = vector.shape_cast %7 : vector<128xf32> to vector<1x128xf32>
    %9 = vector.shape_cast %8 : vector<1x128xf32> to vector<1x1x128xf32>
    %c0_6 = arith.constant 0 : index
    %c0_7 = arith.constant 0 : index
    %c0_8 = arith.constant 0 : index
    %10 = vector.load %arg4[%c0_6, %c0_7, %c0_8] : memref<1x1x128xf32, #tpu.memory_space<vmem>>, vector<1x1x128xf32>
    tpu.vector_store %arg4[%c0_6, %c0_7, %c0_8], %9 {strides = array<i32>} : memref<1x1x128xf32, #tpu.memory_space<vmem>>, vector<1x1x128xf32>,
    %11 = arith.mulf %3, %3 : vector<128x128xf32>
    %cst_9 = arith.constant dense<0.000000e+00> : vector<128xf32>
    %12 = vector.multi_reduction <add>, %11, %cst_9 [0] : vector<128x128xf32> to vector<128xf32>
    %13 = vector.shape_cast %12 : vector<128xf32> to vector<1x128xf32>
    %14 = vector.shape_cast %13 : vector<1x128xf32> to vector<1x1x128xf32>
    %c0_10 = arith.constant 0 : index
    %c0_11 = arith.constant 0 : index
    %c0_12 = arith.constant 0 : index
    %15 = vector.load %arg5[%c0_10, %c0_11, %c0_12] : memref<1x1x128xf32, #tpu.memory_space<vmem>>, vector<1x1x128xf32>
    tpu.vector_store %arg5[%c0_10, %c0_11, %c0_12], %14 {strides = array<i32>} : memref<1x1x128xf32, #tpu.memory_space<vmem>>, vector<1x1x128xf32>,
    %cst_13 = arith.constant dense<0.000000e+00> : vector<128xf32>
    %16 = vector.multi_reduction <add>, %4, %cst_13 [0] : vector<128x128xf32> to vector<128xf32>
    %17 = vector.shape_cast %16 : vector<128xf32> to vector<1x128xf32>
    %18 = vector.shape_cast %17 : vector<1x128xf32> to vector<1x1x128xf32>
    %c0_14 = arith.constant 0 : index
    %c0_15 = arith.constant 0 : index
    %c0_16 = arith.constant 0 : index
    %19 = vector.load %arg6[%c0_14, %c0_15, %c0_16] : memref<1x1x128xf32, #tpu.memory_space<vmem>>, vector<1x1x128xf32>
    tpu.vector_store %arg6[%c0_14, %c0_15, %c0_16], %18 {strides = array<i32>} : memref<1x1x128xf32, #tpu.memory_space<vmem>>, vector<1x1x128xf32>,
    %20 = arith.mulf %4, %4 : vector<128x128xf32>
    %cst_17 = arith.constant dense<0.000000e+00> : vector<128xf32>
    %21 = vector.multi_reduction <add>, %20, %cst_17 [0] : vector<128x128xf32> to vector<128xf32>
    %22 = vector.shape_cast %21 : vector<128xf32> to vector<1x128xf32>
    %23 = vector.shape_cast %22 : vector<1x128xf32> to vector<1x1x128xf32>
    %c0_18 = arith.constant 0 : index
    %c0_19 = arith.constant 0 : index
    %c0_20 = arith.constant 0 : index
    %24 = vector.load %arg7[%c0_18, %c0_19, %c0_20] : memref<1x1x128xf32, #tpu.memory_space<vmem>>, vector<1x1x128xf32>
    tpu.vector_store %arg7[%c0_18, %c0_19, %c0_20], %23 {strides = array<i32>} : memref<1x1x128xf32, #tpu.memory_space<vmem>>, vector<1x1x128xf32>,
    return
  }
  func.func @transform_0(%arg0: i32) -> (i32, i32) {
    %c0_i32 = arith.constant 0 : i32
    %c0_i32_0 = arith.constant 0 : i32
    return %arg0, %c0_i32 : i32, i32
  }
  func.func @transform_1(%arg0: i32) -> (i32, i32) {
    %c0_i32 = arith.constant 0 : i32
    %c0_i32_0 = arith.constant 0 : i32
    %c0_i32_1 = arith.constant 0 : i32
    return %c0_i32, %c0_i32_0 : i32, i32
  }
  func.func @transform_2(%arg0: i32) -> (i32, i32) {
    %c0_i32 = arith.constant 0 : i32
    %c0_i32_0 = arith.constant 0 : i32
    return %arg0, %c0_i32 : i32, i32
  }
  func.func @transform_3(%arg0: i32) -> (i32, i32, i32) {
    %c0_i32 = arith.constant 0 : i32
    %c0_i32_0 = arith.constant 0 : i32
    %c0_i32_1 = arith.constant 0 : i32
    return %arg0, %c0_i32, %c0_i32_0 : i32, i32, i32
  }
  func.func @transform_4(%arg0: i32) -> (i32, i32, i32) {
    %c0_i32 = arith.constant 0 : i32
    %c0_i32_0 = arith.constant 0 : i32
    %c0_i32_1 = arith.constant 0 : i32
    return %arg0, %c0_i32, %c0_i32_0 : i32, i32, i32
  }
  func.func @transform_5(%arg0: i32) -> (i32, i32, i32) {
    %c0_i32 = arith.constant 0 : i32
    %c0_i32_0 = arith.constant 0 : i32
    %c0_i32_1 = arith.constant 0 : i32
    return %arg0, %c0_i32, %c0_i32_0 : i32, i32, i32
  }
  func.func @transform_6(%arg0: i32) -> (i32, i32, i32) {
    %c0_i32 = arith.constant 0 : i32
    %c0_i32_0 = arith.constant 0 : i32
    %c0_i32_1 = arith.constant 0 : i32
    return %arg0, %c0_i32, %c0_i32_0 : i32, i32, i32
  }
}

module attributes {stable_mosaic.version = 11 : i64} {
  func.func @_stage2_kernel(%arg0: i32, %arg1: memref<1x8x8x128xbf16, #tpu.memory_space<vmem>>, %arg2: memref<1x128xf32, #tpu.memory_space<vmem>>, %arg3: memref<1x128xf32, #tpu.memory_space<vmem>>, %arg4: memref<9x128x128xbf16, #tpu.memory_space<vmem>>, %arg5: memref<1x8x8x128xbf16, #tpu.memory_space<vmem>>, %arg6: memref<1x1x128xf32, #tpu.memory_space<vmem>>, %arg7: memref<1x1x128xf32, #tpu.memory_space<vmem>>, %arg8: memref<10x10x128xbf16, #tpu.memory_space<vmem>>) attributes {dimension_semantics = [#tpu.dimension_semantics<parallel>], iteration_bounds = array<i64: 2>, scalar_prefetch = 0 : i64, scratch_operands = 1 : i64, tpu.core_type = #tpu.core_type<tc>, window_params = [{transform_indices = @transform_0, window_bounds = array<i64: 1, 8, 8, 128>}, {pipeline_mode = #tpu.pipeline_mode<synchronous>, transform_indices = @transform_1, window_bounds = array<i64: 1, 128>}, {pipeline_mode = #tpu.pipeline_mode<synchronous>, transform_indices = @transform_2, window_bounds = array<i64: 1, 128>}, {pipeline_mode = #tpu.pipeline_mode<synchronous>, transform_indices = @transform_3, window_bounds = array<i64: 9, 128, 128>}, {transform_indices = @transform_4, window_bounds = array<i64: 1, 8, 8, 128>}, {transform_indices = @transform_5, window_bounds = array<i64: 1, 1, 128>}, {transform_indices = @transform_6, window_bounds = array<i64: 1, 1, 128>}]} {
    %c0 = arith.constant 0 : index
    %c0_0 = arith.constant 0 : index
    %0 = vector.load %arg2[%c0, %c0_0] : memref<1x128xf32, #tpu.memory_space<vmem>>, vector<1x128xf32>
    %1 = vector.shape_cast %0 : vector<1x128xf32> to vector<1x1x128xf32>
    %c0_1 = arith.constant 0 : index
    %c0_2 = arith.constant 0 : index
    %2 = vector.load %arg3[%c0_1, %c0_2] : memref<1x128xf32, #tpu.memory_space<vmem>>, vector<1x128xf32>
    %3 = vector.shape_cast %2 : vector<1x128xf32> to vector<1x1x128xf32>
    %c0_3 = arith.constant 0 : index
    %c0_4 = arith.constant 0 : index
    %c0_5 = arith.constant 0 : index
    %c0_6 = arith.constant 0 : index
    %4 = vector.load %arg1[%c0_3, %c0_4, %c0_5, %c0_6] : memref<1x8x8x128xbf16, #tpu.memory_space<vmem>>, vector<1x8x8x128xbf16>
    %5 = vector.shape_cast %4 : vector<1x8x8x128xbf16> to vector<8x8x128xbf16>
    %6 = arith.extf %5 : vector<8x8x128xbf16> to vector<8x8x128xf32>
    %7 = vector.broadcast %1 : vector<1x1x128xf32> to vector<8x8x128xf32>
    %8 = arith.mulf %6, %7 : vector<8x8x128xf32>
    %9 = vector.broadcast %3 : vector<1x1x128xf32> to vector<8x8x128xf32>
    %10 = arith.addf %8, %9 : vector<8x8x128xf32>
    %cst = arith.constant 0.000000e+00 : f32
    %11 = vector.broadcast %cst : f32 to vector<8x8x128xf32>
    %12 = arith.maximumf %10, %11 : vector<8x8x128xf32>
    %cst_7 = arith.constant 0.000000e+00 : bf16
    %13 = vector.broadcast %cst_7 : bf16 to vector<10x10x128xbf16>
    %c0_8 = arith.constant 0 : index
    %c0_9 = arith.constant 0 : index
    %c0_10 = arith.constant 0 : index
    %14 = vector.load %arg8[%c0_8, %c0_9, %c0_10] : memref<10x10x128xbf16, #tpu.memory_space<vmem>>, vector<10x10x128xbf16>
    tpu.vector_store %arg8[%c0_8, %c0_9, %c0_10], %13 {strides = array<i32>} : memref<10x10x128xbf16, #tpu.memory_space<vmem>>, vector<10x10x128xbf16>,
    %15 = arith.truncf %12 : vector<8x8x128xf32> to vector<8x8x128xbf16>
    %c1 = arith.constant 1 : index
    %c1_11 = arith.constant 1 : index
    %c0_12 = arith.constant 0 : index
    %16 = vector.load %arg8[%c1, %c1_11, %c0_12] : memref<10x10x128xbf16, #tpu.memory_space<vmem>>, vector<8x8x128xbf16>
    tpu.vector_store %arg8[%c1, %c1_11, %c0_12], %15 {strides = array<i32>} : memref<10x10x128xbf16, #tpu.memory_space<vmem>>, vector<8x8x128xbf16>,
    %cst_13 = arith.constant 0.000000e+00 : f32
    %17 = vector.broadcast %cst_13 : f32 to vector<64x128xf32>
    %c0_14 = arith.constant 0 : index
    %c0_15 = arith.constant 0 : index
    %c0_16 = arith.constant 0 : index
    %18 = vector.load %arg8[%c0_14, %c0_15, %c0_16] : memref<10x10x128xbf16, #tpu.memory_space<vmem>>, vector<8x8x128xbf16>
    %19 = vector.shape_cast %18 : vector<8x8x128xbf16> to vector<64x128xbf16>
    %c0_17 = arith.constant 0 : index
    %c0_18 = arith.constant 0 : index
    %c0_19 = arith.constant 0 : index
    %20 = vector.load %arg4[%c0_17, %c0_18, %c0_19] : memref<9x128x128xbf16, #tpu.memory_space<vmem>>, vector<1x128x128xbf16>
    %21 = vector.shape_cast %20 : vector<1x128x128xbf16> to vector<128x128xbf16>
    %cst_20 = arith.constant dense<0.000000e+00> : vector<64x128xf32>
    %22 = tpu.matmul %19, %21, %cst_20 {dimension_numbers = #tpu.dot_dimension_numbers<[1], [0], [0], [1], [0, 0, 1, 1], [], []>} : vector<64x128xbf16>, vector<128x128xbf16>, vector<64x128xf32> -> vector<64x128xf32>
    %23 = arith.addf %17, %22 : vector<64x128xf32>
    %c0_21 = arith.constant 0 : index
    %c1_22 = arith.constant 1 : index
    %c0_23 = arith.constant 0 : index
    %24 = vector.load %arg8[%c0_21, %c1_22, %c0_23] : memref<10x10x128xbf16, #tpu.memory_space<vmem>>, vector<8x8x128xbf16>
    %25 = vector.shape_cast %24 : vector<8x8x128xbf16> to vector<64x128xbf16>
    %c1_24 = arith.constant 1 : index
    %c0_25 = arith.constant 0 : index
    %c0_26 = arith.constant 0 : index
    %26 = vector.load %arg4[%c1_24, %c0_25, %c0_26] : memref<9x128x128xbf16, #tpu.memory_space<vmem>>, vector<1x128x128xbf16>
    %27 = vector.shape_cast %26 : vector<1x128x128xbf16> to vector<128x128xbf16>
    %cst_27 = arith.constant dense<0.000000e+00> : vector<64x128xf32>
    %28 = tpu.matmul %25, %27, %cst_27 {dimension_numbers = #tpu.dot_dimension_numbers<[1], [0], [0], [1], [0, 0, 1, 1], [], []>} : vector<64x128xbf16>, vector<128x128xbf16>, vector<64x128xf32> -> vector<64x128xf32>
    %29 = arith.addf %23, %28 : vector<64x128xf32>
    %c0_28 = arith.constant 0 : index
    %c2 = arith.constant 2 : index
    %c0_29 = arith.constant 0 : index
    %30 = vector.load %arg8[%c0_28, %c2, %c0_29] : memref<10x10x128xbf16, #tpu.memory_space<vmem>>, vector<8x8x128xbf16>
    %31 = vector.shape_cast %30 : vector<8x8x128xbf16> to vector<64x128xbf16>
    %c2_30 = arith.constant 2 : index
    %c0_31 = arith.constant 0 : index
    %c0_32 = arith.constant 0 : index
    %32 = vector.load %arg4[%c2_30, %c0_31, %c0_32] : memref<9x128x128xbf16, #tpu.memory_space<vmem>>, vector<1x128x128xbf16>
    %33 = vector.shape_cast %32 : vector<1x128x128xbf16> to vector<128x128xbf16>
    %cst_33 = arith.constant dense<0.000000e+00> : vector<64x128xf32>
    %34 = tpu.matmul %31, %33, %cst_33 {dimension_numbers = #tpu.dot_dimension_numbers<[1], [0], [0], [1], [0, 0, 1, 1], [], []>} : vector<64x128xbf16>, vector<128x128xbf16>, vector<64x128xf32> -> vector<64x128xf32>
    %35 = arith.addf %29, %34 : vector<64x128xf32>
    %c1_34 = arith.constant 1 : index
    %c0_35 = arith.constant 0 : index
    %c0_36 = arith.constant 0 : index
    %36 = vector.load %arg8[%c1_34, %c0_35, %c0_36] : memref<10x10x128xbf16, #tpu.memory_space<vmem>>, vector<8x8x128xbf16>
    %37 = vector.shape_cast %36 : vector<8x8x128xbf16> to vector<64x128xbf16>
    %c3 = arith.constant 3 : index
    %c0_37 = arith.constant 0 : index
    %c0_38 = arith.constant 0 : index
    %38 = vector.load %arg4[%c3, %c0_37, %c0_38] : memref<9x128x128xbf16, #tpu.memory_space<vmem>>, vector<1x128x128xbf16>
    %39 = vector.shape_cast %38 : vector<1x128x128xbf16> to vector<128x128xbf16>
    %cst_39 = arith.constant dense<0.000000e+00> : vector<64x128xf32>
    %40 = tpu.matmul %37, %39, %cst_39 {dimension_numbers = #tpu.dot_dimension_numbers<[1], [0], [0], [1], [0, 0, 1, 1], [], []>} : vector<64x128xbf16>, vector<128x128xbf16>, vector<64x128xf32> -> vector<64x128xf32>
    %41 = arith.addf %35, %40 : vector<64x128xf32>
    %c1_40 = arith.constant 1 : index
    %c1_41 = arith.constant 1 : index
    %c0_42 = arith.constant 0 : index
    %42 = vector.load %arg8[%c1_40, %c1_41, %c0_42] : memref<10x10x128xbf16, #tpu.memory_space<vmem>>, vector<8x8x128xbf16>
    %43 = vector.shape_cast %42 : vector<8x8x128xbf16> to vector<64x128xbf16>
    %c4 = arith.constant 4 : index
    %c0_43 = arith.constant 0 : index
    %c0_44 = arith.constant 0 : index
    %44 = vector.load %arg4[%c4, %c0_43, %c0_44] : memref<9x128x128xbf16, #tpu.memory_space<vmem>>, vector<1x128x128xbf16>
    %45 = vector.shape_cast %44 : vector<1x128x128xbf16> to vector<128x128xbf16>
    %cst_45 = arith.constant dense<0.000000e+00> : vector<64x128xf32>
    %46 = tpu.matmul %43, %45, %cst_45 {dimension_numbers = #tpu.dot_dimension_numbers<[1], [0], [0], [1], [0, 0, 1, 1], [], []>} : vector<64x128xbf16>, vector<128x128xbf16>, vector<64x128xf32> -> vector<64x128xf32>
    %47 = arith.addf %41, %46 : vector<64x128xf32>
    %c1_46 = arith.constant 1 : index
    %c2_47 = arith.constant 2 : index
    %c0_48 = arith.constant 0 : index
    %48 = vector.load %arg8[%c1_46, %c2_47, %c0_48] : memref<10x10x128xbf16, #tpu.memory_space<vmem>>, vector<8x8x128xbf16>
    %49 = vector.shape_cast %48 : vector<8x8x128xbf16> to vector<64x128xbf16>
    %c5 = arith.constant 5 : index
    %c0_49 = arith.constant 0 : index
    %c0_50 = arith.constant 0 : index
    %50 = vector.load %arg4[%c5, %c0_49, %c0_50] : memref<9x128x128xbf16, #tpu.memory_space<vmem>>, vector<1x128x128xbf16>
    %51 = vector.shape_cast %50 : vector<1x128x128xbf16> to vector<128x128xbf16>
    %cst_51 = arith.constant dense<0.000000e+00> : vector<64x128xf32>
    %52 = tpu.matmul %49, %51, %cst_51 {dimension_numbers = #tpu.dot_dimension_numbers<[1], [0], [0], [1], [0, 0, 1, 1], [], []>} : vector<64x128xbf16>, vector<128x128xbf16>, vector<64x128xf32> -> vector<64x128xf32>
    %53 = arith.addf %47, %52 : vector<64x128xf32>
    %c2_52 = arith.constant 2 : index
    %c0_53 = arith.constant 0 : index
    %c0_54 = arith.constant 0 : index
    %54 = vector.load %arg8[%c2_52, %c0_53, %c0_54] : memref<10x10x128xbf16, #tpu.memory_space<vmem>>, vector<8x8x128xbf16>
    %55 = vector.shape_cast %54 : vector<8x8x128xbf16> to vector<64x128xbf16>
    %c6 = arith.constant 6 : index
    %c0_55 = arith.constant 0 : index
    %c0_56 = arith.constant 0 : index
    %56 = vector.load %arg4[%c6, %c0_55, %c0_56] : memref<9x128x128xbf16, #tpu.memory_space<vmem>>, vector<1x128x128xbf16>
    %57 = vector.shape_cast %56 : vector<1x128x128xbf16> to vector<128x128xbf16>
    %cst_57 = arith.constant dense<0.000000e+00> : vector<64x128xf32>
    %58 = tpu.matmul %55, %57, %cst_57 {dimension_numbers = #tpu.dot_dimension_numbers<[1], [0], [0], [1], [0, 0, 1, 1], [], []>} : vector<64x128xbf16>, vector<128x128xbf16>, vector<64x128xf32> -> vector<64x128xf32>
    %59 = arith.addf %53, %58 : vector<64x128xf32>
    %c2_58 = arith.constant 2 : index
    %c1_59 = arith.constant 1 : index
    %c0_60 = arith.constant 0 : index
    %60 = vector.load %arg8[%c2_58, %c1_59, %c0_60] : memref<10x10x128xbf16, #tpu.memory_space<vmem>>, vector<8x8x128xbf16>
    %61 = vector.shape_cast %60 : vector<8x8x128xbf16> to vector<64x128xbf16>
    %c7 = arith.constant 7 : index
    %c0_61 = arith.constant 0 : index
    %c0_62 = arith.constant 0 : index
    %62 = vector.load %arg4[%c7, %c0_61, %c0_62] : memref<9x128x128xbf16, #tpu.memory_space<vmem>>, vector<1x128x128xbf16>
    %63 = vector.shape_cast %62 : vector<1x128x128xbf16> to vector<128x128xbf16>
    %cst_63 = arith.constant dense<0.000000e+00> : vector<64x128xf32>
    %64 = tpu.matmul %61, %63, %cst_63 {dimension_numbers = #tpu.dot_dimension_numbers<[1], [0], [0], [1], [0, 0, 1, 1], [], []>} : vector<64x128xbf16>, vector<128x128xbf16>, vector<64x128xf32> -> vector<64x128xf32>
    %65 = arith.addf %59, %64 : vector<64x128xf32>
    %c2_64 = arith.constant 2 : index
    %c2_65 = arith.constant 2 : index
    %c0_66 = arith.constant 0 : index
    %66 = vector.load %arg8[%c2_64, %c2_65, %c0_66] : memref<10x10x128xbf16, #tpu.memory_space<vmem>>, vector<8x8x128xbf16>
    %67 = vector.shape_cast %66 : vector<8x8x128xbf16> to vector<64x128xbf16>
    %c8 = arith.constant 8 : index
    %c0_67 = arith.constant 0 : index
    %c0_68 = arith.constant 0 : index
    %68 = vector.load %arg4[%c8, %c0_67, %c0_68] : memref<9x128x128xbf16, #tpu.memory_space<vmem>>, vector<1x128x128xbf16>
    %69 = vector.shape_cast %68 : vector<1x128x128xbf16> to vector<128x128xbf16>
    %cst_69 = arith.constant dense<0.000000e+00> : vector<64x128xf32>
    %70 = tpu.matmul %67, %69, %cst_69 {dimension_numbers = #tpu.dot_dimension_numbers<[1], [0], [0], [1], [0, 0, 1, 1], [], []>} : vector<64x128xbf16>, vector<128x128xbf16>, vector<64x128xf32> -> vector<64x128xf32>
    %71 = arith.addf %65, %70 : vector<64x128xf32>
    %72 = vector.shape_cast %71 : vector<64x128xf32> to vector<1x8x8x128xf32>
    %73 = arith.truncf %72 : vector<1x8x8x128xf32> to vector<1x8x8x128xbf16>
    %c0_70 = arith.constant 0 : index
    %c0_71 = arith.constant 0 : index
    %c0_72 = arith.constant 0 : index
    %c0_73 = arith.constant 0 : index
    %74 = vector.load %arg5[%c0_70, %c0_71, %c0_72, %c0_73] : memref<1x8x8x128xbf16, #tpu.memory_space<vmem>>, vector<1x8x8x128xbf16>
    tpu.vector_store %arg5[%c0_70, %c0_71, %c0_72, %c0_73], %73 {strides = array<i32>} : memref<1x8x8x128xbf16, #tpu.memory_space<vmem>>, vector<1x8x8x128xbf16>,
    %cst_74 = arith.constant dense<0.000000e+00> : vector<128xf32>
    %75 = vector.multi_reduction <add>, %71, %cst_74 [0] : vector<64x128xf32> to vector<128xf32>
    %76 = vector.shape_cast %75 : vector<128xf32> to vector<1x128xf32>
    %77 = vector.shape_cast %76 : vector<1x128xf32> to vector<1x1x128xf32>
    %c0_75 = arith.constant 0 : index
    %c0_76 = arith.constant 0 : index
    %c0_77 = arith.constant 0 : index
    %78 = vector.load %arg6[%c0_75, %c0_76, %c0_77] : memref<1x1x128xf32, #tpu.memory_space<vmem>>, vector<1x1x128xf32>
    tpu.vector_store %arg6[%c0_75, %c0_76, %c0_77], %77 {strides = array<i32>} : memref<1x1x128xf32, #tpu.memory_space<vmem>>, vector<1x1x128xf32>,
    %79 = arith.mulf %71, %71 : vector<64x128xf32>
    %cst_78 = arith.constant dense<0.000000e+00> : vector<128xf32>
    %80 = vector.multi_reduction <add>, %79, %cst_78 [0] : vector<64x128xf32> to vector<128xf32>
    %81 = vector.shape_cast %80 : vector<128xf32> to vector<1x128xf32>
    %82 = vector.shape_cast %81 : vector<1x128xf32> to vector<1x1x128xf32>
    %c0_79 = arith.constant 0 : index
    %c0_80 = arith.constant 0 : index
    %c0_81 = arith.constant 0 : index
    %83 = vector.load %arg7[%c0_79, %c0_80, %c0_81] : memref<1x1x128xf32, #tpu.memory_space<vmem>>, vector<1x1x128xf32>
    tpu.vector_store %arg7[%c0_79, %c0_80, %c0_81], %82 {strides = array<i32>} : memref<1x1x128xf32, #tpu.memory_space<vmem>>, vector<1x1x128xf32>,
    return
  }
  func.func @transform_0(%arg0: i32) -> (i32, i32, i32, i32) {
    %c0_i32 = arith.constant 0 : i32
    %c0_i32_0 = arith.constant 0 : i32
    %c0_i32_1 = arith.constant 0 : i32
    %c0_i32_2 = arith.constant 0 : i32
    return %arg0, %c0_i32, %c0_i32_0, %c0_i32_1 : i32, i32, i32, i32
  }
  func.func @transform_1(%arg0: i32) -> (i32, i32) {
    %c0_i32 = arith.constant 0 : i32
    %c0_i32_0 = arith.constant 0 : i32
    %c0_i32_1 = arith.constant 0 : i32
    return %c0_i32, %c0_i32_0 : i32, i32
  }
  func.func @transform_2(%arg0: i32) -> (i32, i32) {
    %c0_i32 = arith.constant 0 : i32
    %c0_i32_0 = arith.constant 0 : i32
    %c0_i32_1 = arith.constant 0 : i32
    return %c0_i32, %c0_i32_0 : i32, i32
  }
  func.func @transform_3(%arg0: i32) -> (i32, i32, i32) {
    %c0_i32 = arith.constant 0 : i32
    %c0_i32_0 = arith.constant 0 : i32
    %c0_i32_1 = arith.constant 0 : i32
    %c0_i32_2 = arith.constant 0 : i32
    return %c0_i32, %c0_i32_0, %c0_i32_1 : i32, i32, i32
  }
  func.func @transform_4(%arg0: i32) -> (i32, i32, i32, i32) {
    %c0_i32 = arith.constant 0 : i32
    %c0_i32_0 = arith.constant 0 : i32
    %c0_i32_1 = arith.constant 0 : i32
    %c0_i32_2 = arith.constant 0 : i32
    return %arg0, %c0_i32, %c0_i32_0, %c0_i32_1 : i32, i32, i32, i32
  }
  func.func @transform_5(%arg0: i32) -> (i32, i32, i32) {
    %c0_i32 = arith.constant 0 : i32
    %c0_i32_0 = arith.constant 0 : i32
    %c0_i32_1 = arith.constant 0 : i32
    return %arg0, %c0_i32, %c0_i32_0 : i32, i32, i32
  }
  func.func @transform_6(%arg0: i32) -> (i32, i32, i32) {
    %c0_i32 = arith.constant 0 : i32
    %c0_i32_0 = arith.constant 0 : i32
    %c0_i32_1 = arith.constant 0 : i32
    return %arg0, %c0_i32, %c0_i32_0 : i32, i32, i32
  }
}

module attributes {stable_mosaic.version = 11 : i64} {
  func.func @_stage3_kernel(%arg0: i32, %arg1: memref<128x128xbf16, #tpu.memory_space<vmem>>, %arg2: memref<1x128xf32, #tpu.memory_space<vmem>>, %arg3: memref<1x128xf32, #tpu.memory_space<vmem>>, %arg4: memref<128x128xbf16, #tpu.memory_space<vmem>>, %arg5: memref<128x128xbf16, #tpu.memory_space<vmem>>, %arg6: memref<1x1x128xf32, #tpu.memory_space<vmem>>, %arg7: memref<1x1x128xf32, #tpu.memory_space<vmem>>) attributes {dimension_semantics = [#tpu.dimension_semantics<parallel>], iteration_bounds = array<i64: 1>, scalar_prefetch = 0 : i64, scratch_operands = 0 : i64, tpu.core_type = #tpu.core_type<tc>, window_params = [{transform_indices = @transform_0, window_bounds = array<i64: 128, 128>}, {pipeline_mode = #tpu.pipeline_mode<synchronous>, transform_indices = @transform_1, window_bounds = array<i64: 1, 128>}, {pipeline_mode = #tpu.pipeline_mode<synchronous>, transform_indices = @transform_2, window_bounds = array<i64: 1, 128>}, {pipeline_mode = #tpu.pipeline_mode<synchronous>, transform_indices = @transform_3, window_bounds = array<i64: 128, 128>}, {transform_indices = @transform_4, window_bounds = array<i64: 128, 128>}, {transform_indices = @transform_5, window_bounds = array<i64: 1, 1, 128>}, {transform_indices = @transform_6, window_bounds = array<i64: 1, 1, 128>}]} {
    %c0 = arith.constant 0 : index
    %c0_0 = arith.constant 0 : index
    %0 = vector.load %arg1[%c0, %c0_0] : memref<128x128xbf16, #tpu.memory_space<vmem>>, vector<128x128xbf16>
    %1 = arith.extf %0 : vector<128x128xbf16> to vector<128x128xf32>
    %c0_1 = arith.constant 0 : index
    %c0_2 = arith.constant 0 : index
    %2 = vector.load %arg2[%c0_1, %c0_2] : memref<1x128xf32, #tpu.memory_space<vmem>>, vector<1x128xf32>
    %3 = vector.broadcast %2 : vector<1x128xf32> to vector<128x128xf32>
    %4 = arith.mulf %1, %3 : vector<128x128xf32>
    %c0_3 = arith.constant 0 : index
    %c0_4 = arith.constant 0 : index
    %5 = vector.load %arg3[%c0_3, %c0_4] : memref<1x128xf32, #tpu.memory_space<vmem>>, vector<1x128xf32>
    %6 = vector.broadcast %5 : vector<1x128xf32> to vector<128x128xf32>
    %7 = arith.addf %4, %6 : vector<128x128xf32>
    %cst = arith.constant 0.000000e+00 : f32
    %8 = vector.broadcast %cst : f32 to vector<128x128xf32>
    %9 = arith.maximumf %7, %8 : vector<128x128xf32>
    %10 = arith.truncf %9 : vector<128x128xf32> to vector<128x128xbf16>
    %c0_5 = arith.constant 0 : index
    %c0_6 = arith.constant 0 : index
    %11 = vector.load %arg4[%c0_5, %c0_6] : memref<128x128xbf16, #tpu.memory_space<vmem>>, vector<128x128xbf16>
    %cst_7 = arith.constant dense<0.000000e+00> : vector<128x128xf32>
    %12 = tpu.matmul %10, %11, %cst_7 {dimension_numbers = #tpu.dot_dimension_numbers<[1], [0], [0], [1], [0, 0, 1, 1], [], []>} : vector<128x128xbf16>, vector<128x128xbf16>, vector<128x128xf32> -> vector<128x128xf32>
    %13 = arith.truncf %12 : vector<128x128xf32> to vector<128x128xbf16>
    %c0_8 = arith.constant 0 : index
    %c0_9 = arith.constant 0 : index
    %14 = vector.load %arg5[%c0_8, %c0_9] : memref<128x128xbf16, #tpu.memory_space<vmem>>, vector<128x128xbf16>
    tpu.vector_store %arg5[%c0_8, %c0_9], %13 {strides = array<i32>} : memref<128x128xbf16, #tpu.memory_space<vmem>>, vector<128x128xbf16>,
    %cst_10 = arith.constant dense<0.000000e+00> : vector<128xf32>
    %15 = vector.multi_reduction <add>, %12, %cst_10 [0] : vector<128x128xf32> to vector<128xf32>
    %16 = vector.shape_cast %15 : vector<128xf32> to vector<1x128xf32>
    %17 = vector.shape_cast %16 : vector<1x128xf32> to vector<1x1x128xf32>
    %c0_11 = arith.constant 0 : index
    %c0_12 = arith.constant 0 : index
    %c0_13 = arith.constant 0 : index
    %18 = vector.load %arg6[%c0_11, %c0_12, %c0_13] : memref<1x1x128xf32, #tpu.memory_space<vmem>>, vector<1x1x128xf32>
    tpu.vector_store %arg6[%c0_11, %c0_12, %c0_13], %17 {strides = array<i32>} : memref<1x1x128xf32, #tpu.memory_space<vmem>>, vector<1x1x128xf32>,
    %19 = arith.mulf %12, %12 : vector<128x128xf32>
    %cst_14 = arith.constant dense<0.000000e+00> : vector<128xf32>
    %20 = vector.multi_reduction <add>, %19, %cst_14 [0] : vector<128x128xf32> to vector<128xf32>
    %21 = vector.shape_cast %20 : vector<128xf32> to vector<1x128xf32>
    %22 = vector.shape_cast %21 : vector<1x128xf32> to vector<1x1x128xf32>
    %c0_15 = arith.constant 0 : index
    %c0_16 = arith.constant 0 : index
    %c0_17 = arith.constant 0 : index
    %23 = vector.load %arg7[%c0_15, %c0_16, %c0_17] : memref<1x1x128xf32, #tpu.memory_space<vmem>>, vector<1x1x128xf32>
    tpu.vector_store %arg7[%c0_15, %c0_16, %c0_17], %22 {strides = array<i32>} : memref<1x1x128xf32, #tpu.memory_space<vmem>>, vector<1x1x128xf32>,
    return
  }
  func.func @transform_0(%arg0: i32) -> (i32, i32) {
    %c0_i32 = arith.constant 0 : i32
    %c0_i32_0 = arith.constant 0 : i32
    return %arg0, %c0_i32 : i32, i32
  }
  func.func @transform_1(%arg0: i32) -> (i32, i32) {
    %c0_i32 = arith.constant 0 : i32
    %c0_i32_0 = arith.constant 0 : i32
    %c0_i32_1 = arith.constant 0 : i32
    return %c0_i32, %c0_i32_0 : i32, i32
  }
  func.func @transform_2(%arg0: i32) -> (i32, i32) {
    %c0_i32 = arith.constant 0 : i32
    %c0_i32_0 = arith.constant 0 : i32
    %c0_i32_1 = arith.constant 0 : i32
    return %c0_i32, %c0_i32_0 : i32, i32
  }
  func.func @transform_3(%arg0: i32) -> (i32, i32) {
    %c0_i32 = arith.constant 0 : i32
    %c0_i32_0 = arith.constant 0 : i32
    %c0_i32_1 = arith.constant 0 : i32
    return %c0_i32, %c0_i32_0 : i32, i32
  }
  func.func @transform_4(%arg0: i32) -> (i32, i32) {
    %c0_i32 = arith.constant 0 : i32
    %c0_i32_0 = arith.constant 0 : i32
    return %arg0, %c0_i32 : i32, i32
  }
  func.func @transform_5(%arg0: i32) -> (i32, i32, i32) {
    %c0_i32 = arith.constant 0 : i32
    %c0_i32_0 = arith.constant 0 : i32
    %c0_i32_1 = arith.constant 0 : i32
    return %arg0, %c0_i32, %c0_i32_0 : i32, i32, i32
  }
  func.func @transform_6(%arg0: i32) -> (i32, i32, i32) {
    %c0_i32 = arith.constant 0 : i32
    %c0_i32_0 = arith.constant 0 : i32
    %c0_i32_1 = arith.constant 0 : i32
    return %arg0, %c0_i32, %c0_i32_0 : i32, i32, i32
  }
}

module attributes {stable_mosaic.version = 11 : i64} {
  func.func @_stage4_kernel(%arg0: i32, %arg1: memref<128x128xbf16, #tpu.memory_space<vmem>>, %arg2: memref<128x128xbf16, #tpu.memory_space<vmem>>, %arg3: memref<128x128xbf16, #tpu.memory_space<vmem>>, %arg4: memref<1x128xf32, #tpu.memory_space<vmem>>, %arg5: memref<1x128xf32, #tpu.memory_space<vmem>>, %arg6: memref<1x128xf32, #tpu.memory_space<vmem>>, %arg7: memref<1x128xf32, #tpu.memory_space<vmem>>, %arg8: memref<128x128xf32, #tpu.memory_space<vmem>>) attributes {dimension_semantics = [#tpu.dimension_semantics<parallel>], iteration_bounds = array<i64: 1>, scalar_prefetch = 0 : i64, scratch_operands = 0 : i64, tpu.core_type = #tpu.core_type<tc>, window_params = [{transform_indices = @transform_0, window_bounds = array<i64: 128, 128>}, {transform_indices = @transform_1, window_bounds = array<i64: 128, 128>}, {pipeline_mode = #tpu.pipeline_mode<synchronous>, transform_indices = @transform_2, window_bounds = array<i64: 128, 128>}, {pipeline_mode = #tpu.pipeline_mode<synchronous>, transform_indices = @transform_3, window_bounds = array<i64: 1, 128>}, {pipeline_mode = #tpu.pipeline_mode<synchronous>, transform_indices = @transform_4, window_bounds = array<i64: 1, 128>}, {pipeline_mode = #tpu.pipeline_mode<synchronous>, transform_indices = @transform_5, window_bounds = array<i64: 1, 128>}, {pipeline_mode = #tpu.pipeline_mode<synchronous>, transform_indices = @transform_6, window_bounds = array<i64: 1, 128>}, {transform_indices = @transform_7, window_bounds = array<i64: 128, 128>}]} {
    %c0 = arith.constant 0 : index
    %c0_0 = arith.constant 0 : index
    %0 = vector.load %arg2[%c0, %c0_0] : memref<128x128xbf16, #tpu.memory_space<vmem>>, vector<128x128xbf16>
    %c0_1 = arith.constant 0 : index
    %c0_2 = arith.constant 0 : index
    %1 = vector.load %arg3[%c0_1, %c0_2] : memref<128x128xbf16, #tpu.memory_space<vmem>>, vector<128x128xbf16>
    %cst = arith.constant dense<0.000000e+00> : vector<128x128xf32>
    %2 = tpu.matmul %0, %1, %cst {dimension_numbers = #tpu.dot_dimension_numbers<[1], [0], [0], [1], [0, 0, 1, 1], [], []>} : vector<128x128xbf16>, vector<128x128xbf16>, vector<128x128xf32> -> vector<128x128xf32>
    %c0_3 = arith.constant 0 : index
    %c0_4 = arith.constant 0 : index
    %3 = vector.load %arg1[%c0_3, %c0_4] : memref<128x128xbf16, #tpu.memory_space<vmem>>, vector<128x128xbf16>
    %4 = arith.extf %3 : vector<128x128xbf16> to vector<128x128xf32>
    %c0_5 = arith.constant 0 : index
    %c0_6 = arith.constant 0 : index
    %5 = vector.load %arg4[%c0_5, %c0_6] : memref<1x128xf32, #tpu.memory_space<vmem>>, vector<1x128xf32>
    %6 = vector.broadcast %5 : vector<1x128xf32> to vector<128x128xf32>
    %7 = arith.mulf %4, %6 : vector<128x128xf32>
    %c0_7 = arith.constant 0 : index
    %c0_8 = arith.constant 0 : index
    %8 = vector.load %arg5[%c0_7, %c0_8] : memref<1x128xf32, #tpu.memory_space<vmem>>, vector<1x128xf32>
    %9 = vector.broadcast %8 : vector<1x128xf32> to vector<128x128xf32>
    %10 = arith.addf %7, %9 : vector<128x128xf32>
    %c0_9 = arith.constant 0 : index
    %c0_10 = arith.constant 0 : index
    %11 = vector.load %arg6[%c0_9, %c0_10] : memref<1x128xf32, #tpu.memory_space<vmem>>, vector<1x128xf32>
    %12 = vector.broadcast %11 : vector<1x128xf32> to vector<128x128xf32>
    %13 = arith.mulf %2, %12 : vector<128x128xf32>
    %14 = arith.addf %10, %13 : vector<128x128xf32>
    %c0_11 = arith.constant 0 : index
    %c0_12 = arith.constant 0 : index
    %15 = vector.load %arg7[%c0_11, %c0_12] : memref<1x128xf32, #tpu.memory_space<vmem>>, vector<1x128xf32>
    %16 = vector.broadcast %15 : vector<1x128xf32> to vector<128x128xf32>
    %17 = arith.addf %14, %16 : vector<128x128xf32>
    %cst_13 = arith.constant 0.000000e+00 : f32
    %18 = vector.broadcast %cst_13 : f32 to vector<128x128xf32>
    %19 = arith.maximumf %17, %18 : vector<128x128xf32>
    %c0_14 = arith.constant 0 : index
    %c0_15 = arith.constant 0 : index
    %20 = vector.load %arg8[%c0_14, %c0_15] : memref<128x128xf32, #tpu.memory_space<vmem>>, vector<128x128xf32>
    tpu.vector_store %arg8[%c0_14, %c0_15], %19 {strides = array<i32>} : memref<128x128xf32, #tpu.memory_space<vmem>>, vector<128x128xf32>,
    return
  }
  func.func @transform_0(%arg0: i32) -> (i32, i32) {
    %c0_i32 = arith.constant 0 : i32
    %c0_i32_0 = arith.constant 0 : i32
    return %arg0, %c0_i32 : i32, i32
  }
  func.func @transform_1(%arg0: i32) -> (i32, i32) {
    %c0_i32 = arith.constant 0 : i32
    %c0_i32_0 = arith.constant 0 : i32
    return %arg0, %c0_i32 : i32, i32
  }
  func.func @transform_2(%arg0: i32) -> (i32, i32) {
    %c0_i32 = arith.constant 0 : i32
    %c0_i32_0 = arith.constant 0 : i32
    %c0_i32_1 = arith.constant 0 : i32
    return %c0_i32, %c0_i32_0 : i32, i32
  }
  func.func @transform_3(%arg0: i32) -> (i32, i32) {
    %c0_i32 = arith.constant 0 : i32
    %c0_i32_0 = arith.constant 0 : i32
    %c0_i32_1 = arith.constant 0 : i32
    return %c0_i32, %c0_i32_0 : i32, i32
  }
  func.func @transform_4(%arg0: i32) -> (i32, i32) {
    %c0_i32 = arith.constant 0 : i32
    %c0_i32_0 = arith.constant 0 : i32
    %c0_i32_1 = arith.constant 0 : i32
    return %c0_i32, %c0_i32_0 : i32, i32
  }
  func.func @transform_5(%arg0: i32) -> (i32, i32) {
    %c0_i32 = arith.constant 0 : i32
    %c0_i32_0 = arith.constant 0 : i32
    %c0_i32_1 = arith.constant 0 : i32
    return %c0_i32, %c0_i32_0 : i32, i32
  }
  func.func @transform_6(%arg0: i32) -> (i32, i32) {
    %c0_i32 = arith.constant 0 : i32
    %c0_i32_0 = arith.constant 0 : i32
    %c0_i32_1 = arith.constant 0 : i32
    return %c0_i32, %c0_i32_0 : i32, i32
  }
  func.func @transform_7(%arg0: i32) -> (i32, i32) {
    %c0_i32 = arith.constant 0 : i32
    %c0_i32_0 = arith.constant 0 : i32
    return %arg0, %c0_i32 : i32, i32
  }
}

</mosaic_0001>

<llo_original>
// kernel: bottleneck_forward.6
$region0: #{bottleneck_forward.6}
  #allocation0 [shape = 'u32[]', space=smem, size = 0x4, offset = 0x4, fixed_abs, tag = 'smem constant byte address 0x4 - core index']
  #allocation1 [shape = 'u32[72,128]{1,0:T(1,128)}', space=vmem, size = 0x9000, scoped, tag = 'internal scratch']
  %s0 = inlined_call_operand.vmem [shape: bf16[128,128], index: 0, kind: input, shape index: {}]
  %s1 = inlined_call_operand.vmem [shape: f32[1,128], index: 1, kind: input, shape index: {}]
  %s2 = inlined_call_operand.vmem [shape: f32[1,128], index: 2, kind: input, shape index: {}]
  %s3 = inlined_call_operand.vmem [shape: bf16[128,128], index: 3, kind: input, shape index: {}]
  %s4 = inlined_call_operand.vmem [shape: bf16[128,128], index: 4, kind: output, shape index: {0}]
  %s5 = inlined_call_operand.vmem [shape: f32[1,1,128], index: 5, kind: output, shape index: {1}]
  %s6 = inlined_call_operand.vmem [shape: f32[1,1,128], index: 6, kind: output, shape index: {2}]
  %7 = xla_tuple %s4, %s5, %s6
  %s8 = sld [smem:[#allocation0]]
  $region42: #{bottleneck_forward.6} parent=0
    _
  %s10 = ssub.s32 1, %s8
  %s11 = scalar_select 0, %s10, %s8
  // Predicated region
  $region2: #{bottleneck_forward.6} parent=0 // pred_check
    _
  $region3: #{bottleneck_forward.6} parent=0 // pred_check_branch
    %13 = sbr.rel (0) target = $region5
  $region4: #{bottleneck_forward.6} parent=0 // pred_region
    _
  $region5: #{bottleneck_forward.6} parent=0 // pred_fallthru
    _
  // Predicated region
  $region6: #{bottleneck_forward.6} parent=0 // pred_check
    _
  $region7: #{bottleneck_forward.6} parent=0 // pred_check_branch
    %15 = sbr.rel (0) target = $region9
  $region8: #{bottleneck_forward.6} parent=0 // pred_region
    _
  $region9: #{bottleneck_forward.6} parent=0 // pred_fallthru
    _
  // Predicated region
  $region10: #{bottleneck_forward.6} parent=0 // pred_check
    _
  $region11: #{bottleneck_forward.6} parent=0 // pred_check_branch
    %17 = sbr.rel (0) target = $region13
  $region12: #{bottleneck_forward.6} parent=0 // pred_region
    _
  $region13: #{bottleneck_forward.6} parent=0 // pred_fallthru
    _
  // Predicated region
  $region14: #{bottleneck_forward.6} parent=0 // pred_check
    _
  $region15: #{bottleneck_forward.6} parent=0 // pred_check_branch
    %19 = sbr.rel (0) target = $region17
  $region16: #{bottleneck_forward.6} parent=0 // pred_region
    _
  $region17: #{bottleneck_forward.6} parent=0 // pred_fallthru
    _
  %v20 = vld [vmem:[%s0] sm:$0xf]
  %v21 = vld [vmem:[%s0 + $0x4] sm:$0xf]
  %v22 = vld [vmem:[%s0 + $0x8] sm:$0xf]
  %v23 = vld [vmem:[%s0 + $0xc] sm:$0xf]
  %v24 = vld [vmem:[%s0 + $0x10] sm:$0xf]
  %v25 = vld [vmem:[%s0 + $0x14] sm:$0xf]
  %v26 = vld [vmem:[%s0 + $0x18] sm:$0xf]
  %v27 = vld [vmem:[%s0 + $0x1c] sm:$0xf]
  %v28 = vld [vmem:[%s0 + $0x20] sm:$0xf]
  %v29 = vld [vmem:[%s0 + $0x24] sm:$0xf]
  %v30 = vld [vmem:[%s0 + $0x28] sm:$0xf]
  %v31 = vld [vmem:[%s0 + $0x2c] sm:$0xf]
  %v32 = vld [vmem:[%s0 + $0x30] sm:$0xf]
  %v33 = vld [vmem:[%s0 + $0x34] sm:$0xf]
  %v34 = vld [vmem:[%s0 + $0x38] sm:$0xf]
  %v35 = vld [vmem:[%s0 + $0x3c] sm:$0xf]
  %v36 = vunpack.c.l.bf16 %v20
  %v37 = vunpack.c.l.bf16 %v21
  %v38 = vunpack.c.l.bf16 %v22
  %v39 = vunpack.c.l.bf16 %v23
  %v40 = vunpack.c.l.bf16 %v24
  %v41 = vunpack.c.l.bf16 %v25
  %v42 = vunpack.c.l.bf16 %v26
  %v43 = vunpack.c.l.bf16 %v27
  %v44 = vunpack.c.l.bf16 %v28
  %v45 = vunpack.c.l.bf16 %v29
  %v46 = vunpack.c.l.bf16 %v30
  %v47 = vunpack.c.l.bf16 %v31
  %v48 = vunpack.c.l.bf16 %v32
  %v49 = vunpack.c.l.bf16 %v33
  %v50 = vunpack.c.l.bf16 %v34
  %v51 = vunpack.c.l.bf16 %v35
  %v52 = vld [vmem:[%s1] sm:$0x1]
  %v54 = vperm.slane %v52, 0
  %v56 = vmul.f32 %v36, %v54
  %v57 = vmul.f32 %v37, %v54
  %v58 = vmul.f32 %v38, %v54
  %v59 = vmul.f32 %v39, %v54
  %v60 = vmul.f32 %v40, %v54
  %v61 = vmul.f32 %v41, %v54
  %v62 = vmul.f32 %v42, %v54
  %v63 = vmul.f32 %v43, %v54
  %v64 = vmul.f32 %v44, %v54
  %v65 = vmul.f32 %v45, %v54
  %v66 = vmul.f32 %v46, %v54
  %v67 = vmul.f32 %v47, %v54
  %v68 = vmul.f32 %v48, %v54
  %v69 = vmul.f32 %v49, %v54
  %v70 = vmul.f32 %v50, %v54
  %v71 = vmul.f32 %v51, %v54
  %v72 = vld [vmem:[%s2] sm:$0x1]
  %v74 = vperm.slane %v72, 0
  %v76 = vadd.f32 %v56, %v74
  %v77 = vadd.f32 %v57, %v74
  %v78 = vadd.f32 %v58, %v74
  %v79 = vadd.f32 %v59, %v74
  %v80 = vadd.f32 %v60, %v74
  %v81 = vadd.f32 %v61, %v74
  %v82 = vadd.f32 %v62, %v74
  %v83 = vadd.f32 %v63, %v74
  %v84 = vadd.f32 %v64, %v74
  %v85 = vadd.f32 %v65, %v74
  %v86 = vadd.f32 %v66, %v74
  %v87 = vadd.f32 %v67, %v74
  %v88 = vadd.f32 %v68, %v74
  %v89 = vadd.f32 %v69, %v74
  %v90 = vadd.f32 %v70, %v74
  %v91 = vadd.f32 %v71, %v74
  %v92 = vmax.f32 %v76, 0.0
  %v93 = vmax.f32 %v77, 0.0
  %v94 = vmax.f32 %v78, 0.0
  %v95 = vmax.f32 %v79, 0.0
  %v96 = vmax.f32 %v80, 0.0
  %v97 = vmax.f32 %v81, 0.0
  %v98 = vmax.f32 %v82, 0.0
  %v99 = vmax.f32 %v83, 0.0
  %v100 = vmax.f32 %v84, 0.0
  %v101 = vmax.f32 %v85, 0.0
  %v102 = vmax.f32 %v86, 0.0
  %v103 = vmax.f32 %v87, 0.0
  %v104 = vmax.f32 %v88, 0.0
  %v105 = vmax.f32 %v89, 0.0
  %v106 = vmax.f32 %v90, 0.0
  %v107 = vmax.f32 %v91, 0.0
  %v108 = vpack.c.bf16 %v93, %v92
  %v109 = vpack.c.bf16 %v95, %v94
  %v110 = vpack.c.bf16 %v97, %v96
  %v111 = vpack.c.bf16 %v99, %v98
  %v112 = vpack.c.bf16 %v101, %v100
  %v113 = vpack.c.bf16 %v103, %v102
  %v114 = vpack.c.bf16 %v105, %v104
  %v115 = vpack.c.bf16 %v107, %v106
  %v116 = vld [vmem:[%s3] sm:$0xf]
  %v117 = vld [vmem:[%s3 + $0x4] sm:$0xf]
  %v118 = vld [vmem:[%s3 + $0x8] sm:$0xf]
  %v119 = vld [vmem:[%s3 + $0xc] sm:$0xf]
  %v120 = vld [vmem:[%s3 + $0x10] sm:$0xf]
  %v121 = vld [vmem:[%s3 + $0x14] sm:$0xf]
  %v122 = vld [vmem:[%s3 + $0x18] sm:$0xf]
  %v123 = vld [vmem:[%s3 + $0x1c] sm:$0xf]
  %v124 = vld [vmem:[%s3 + $0x20] sm:$0xf]
  %v125 = vld [vmem:[%s3 + $0x24] sm:$0xf]
  %v126 = vld [vmem:[%s3 + $0x28] sm:$0xf]
  %v127 = vld [vmem:[%s3 + $0x2c] sm:$0xf]
  %v128 = vld [vmem:[%s3 + $0x30] sm:$0xf]
  %v129 = vld [vmem:[%s3 + $0x34] sm:$0xf]
  %v130 = vld [vmem:[%s3 + $0x38] sm:$0xf]
  %v131 = vld [vmem:[%s3 + $0x3c] sm:$0xf]
  %v148 = vunpack.c.l.b16 %v116
  %v149 = vunpack.c.l.b16 %v117
  %v150 = vunpack.c.l.b16 %v118
  %v151 = vunpack.c.l.b16 %v119
  %v152 = vunpack.c.l.b16 %v120
  %v153 = vunpack.c.l.b16 %v121
  %v154 = vunpack.c.l.b16 %v122
  %v155 = vunpack.c.l.b16 %v123
  %v156 = vunpack.c.l.b16 %v124
  %v157 = vunpack.c.l.b16 %v125
  %v158 = vunpack.c.l.b16 %v126
  %v159 = vunpack.c.l.b16 %v127
  %v160 = vunpack.c.l.b16 %v128
  %v161 = vunpack.c.l.b16 %v129
  %v162 = vunpack.c.l.b16 %v130
  %v163 = vunpack.c.l.b16 %v131
  %v164 = vpack.c.b16 %v149, %v148
  %v165 = vpack.c.b16 %v151, %v150
  %v166 = vpack.c.b16 %v153, %v152
  %v167 = vpack.c.b16 %v155, %v154
  %v168 = vpack.c.b16 %v157, %v156
  %v169 = vpack.c.b16 %v159, %v158
  %v170 = vpack.c.b16 %v161, %v160
  %v171 = vpack.c.b16 %v163, %v162
  %180 = vmatpush.bf16.msra.mxu0 %v171
  %181 = vmatpush.bf16.msra.mxu0 %v170
  %182 = vmatpush.bf16.msra.mxu0 %v169
  %183 = vmatpush.bf16.msra.mxu0 %v168
  %184 = vmatpush.bf16.msra.mxu0 %v167
  %185 = vmatpush.bf16.msra.mxu0 %v166
  %186 = vmatpush.bf16.msra.mxu0 %v165
  %187 = vmatpush.bf16.msra.mxu0 %v164
  %188 = vmatmul.bf16.gmra.mxu0 %v108
  %v189 = vpop.f32.mrf.mxu0
  %v190 = vadd.f32 0.0, %v189
  %v191 = vpop.f32.mrf.mxu0
  %v192 = vadd.f32 0.0, %v191
  %193 = vmatmul.bf16.gmra.mxu0 %v109
  %v194 = vpop.f32.mrf.mxu0
  %v195 = vadd.f32 0.0, %v194
  %v196 = vpop.f32.mrf.mxu0
  %v197 = vadd.f32 0.0, %v196
  %198 = vmatmul.bf16.gmra.mxu0 %v110
  %v199 = vpop.f32.mrf.mxu0
  %v200 = vadd.f32 0.0, %v199
  %v201 = vpop.f32.mrf.mxu0
  %v202 = vadd.f32 0.0, %v201
  %203 = vmatmul.bf16.gmra.mxu0 %v111
  %v204 = vpop.f32.mrf.mxu0
  %v205 = vadd.f32 0.0, %v204
  %v206 = vpop.f32.mrf.mxu0
  %v207 = vadd.f32 0.0, %v206
  %208 = vmatmul.bf16.gmra.mxu0 %v112
  %v209 = vpop.f32.mrf.mxu0
  %v210 = vadd.f32 0.0, %v209
  %v211 = vpop.f32.mrf.mxu0
  %v212 = vadd.f32 0.0, %v211
  %213 = vmatmul.bf16.gmra.mxu0 %v113
  %v214 = vpop.f32.mrf.mxu0
  %v215 = vadd.f32 0.0, %v214
  %v216 = vpop.f32.mrf.mxu0
  %v217 = vadd.f32 0.0, %v216
  %218 = vmatmul.bf16.gmra.mxu0 %v114
  %v219 = vpop.f32.mrf.mxu0
  %v220 = vadd.f32 0.0, %v219
  %v221 = vpop.f32.mrf.mxu0
  %v222 = vadd.f32 0.0, %v221
  %223 = vmatmul.bf16.gmra.mxu0 %v115
  %v224 = vpop.f32.mrf.mxu0
  %v225 = vadd.f32 0.0, %v224
  %v226 = vpop.f32.mrf.mxu0
  %v227 = vadd.f32 0.0, %v226
  %228 = vdwg.mxu0
  %v229 = vpack.c.bf16 %v190, %v190
  %v230 = vpack.c.bf16 %v192, %v192
  %v231 = vpack.c.bf16 %v195, %v195
  %v232 = vpack.c.bf16 %v197, %v197
  %v233 = vpack.c.bf16 %v200, %v200
  %v234 = vpack.c.bf16 %v202, %v202
  %v235 = vpack.c.bf16 %v205, %v205
  %v236 = vpack.c.bf16 %v207, %v207
  %v237 = vpack.c.bf16 %v210, %v210
  %v238 = vpack.c.bf16 %v212, %v212
  %v239 = vpack.c.bf16 %v215, %v215
  %v240 = vpack.c.bf16 %v217, %v217
  %v241 = vpack.c.bf16 %v220, %v220
  %v242 = vpack.c.bf16 %v222, %v222
  %v243 = vpack.c.bf16 %v225, %v225
  %v244 = vpack.c.bf16 %v227, %v227
  %245 = vst [vmem:[%s4] sm:$0xf] %v229
  %246 = vst [vmem:[%s4 + $0x4] sm:$0xf] %v230
  %247 = vst [vmem:[%s4 + $0x8] sm:$0xf] %v231
  %248 = vst [vmem:[%s4 + $0xc] sm:$0xf] %v232
  %249 = vst [vmem:[%s4 + $0x10] sm:$0xf] %v233
  %250 = vst [vmem:[%s4 + $0x14] sm:$0xf] %v234
  %251 = vst [vmem:[%s4 + $0x18] sm:$0xf] %v235
  %252 = vst [vmem:[%s4 + $0x1c] sm:$0xf] %v236
  %253 = vst [vmem:[%s4 + $0x20] sm:$0xf] %v237
  %254 = vst [vmem:[%s4 + $0x24] sm:$0xf] %v238
  %255 = vst [vmem:[%s4 + $0x28] sm:$0xf] %v239
  %256 = vst [vmem:[%s4 + $0x2c] sm:$0xf] %v240
  %257 = vst [vmem:[%s4 + $0x30] sm:$0xf] %v241
  %258 = vst [vmem:[%s4 + $0x34] sm:$0xf] %v242
  %259 = vst [vmem:[%s4 + $0x38] sm:$0xf] %v243
  %260 = vst [vmem:[%s4 + $0x3c] sm:$0xf] %v244
  %v261 = vadd.f32 %v190, %v192
  %v262 = vadd.f32 %v261, %v195
  %v263 = vadd.f32 %v262, %v197
  %v264 = vadd.f32 %v263, %v200
  %v265 = vadd.f32 %v264, %v202
  %v266 = vadd.f32 %v265, %v205
  %v267 = vadd.f32 %v266, %v207
  %v268 = vadd.f32 %v267, %v210
  %v269 = vadd.f32 %v268, %v212
  %v270 = vadd.f32 %v269, %v215
  %v271 = vadd.f32 %v270, %v217
  %v272 = vadd.f32 %v271, %v220
  %v273 = vadd.f32 %v272, %v222
  %v274 = vadd.f32 %v273, %v225
  %v275 = vadd.f32 %v274, %v227
  %v276 = vrot.slane %v275, 4
  %v277 = vadd.f32 %v275, %v276
  %v278 = vrot.slane %v277, 2
  %v279 = vadd.f32 %v277, %v278
  %v280 = vrot.slane %v279, 1
  %v281 = vadd.f32 %v279, %v280
  %282 = vst [vmem:[%s5] sm:$0x1] %v281
  %v283 = vmul.f32 %v190, %v190
  %v284 = vmul.f32 %v192, %v192
  %v285 = vmul.f32 %v195, %v195
  %v286 = vmul.f32 %v197, %v197
  %v287 = vmul.f32 %v200, %v200
  %v288 = vmul.f32 %v202, %v202
  %v289 = vmul.f32 %v205, %v205
  %v290 = vmul.f32 %v207, %v207
  %v291 = vmul.f32 %v210, %v210
  %v292 = vmul.f32 %v212, %v212
  %v293 = vmul.f32 %v215, %v215
  %v294 = vmul.f32 %v217, %v217
  %v295 = vmul.f32 %v220, %v220
  %v296 = vmul.f32 %v222, %v222
  %v297 = vmul.f32 %v225, %v225
  %v298 = vmul.f32 %v227, %v227
  %v299 = vadd.f32 %v283, %v284
  %v300 = vadd.f32 %v299, %v285
  %v301 = vadd.f32 %v300, %v286
  %v302 = vadd.f32 %v301, %v287
  %v303 = vadd.f32 %v302, %v288
  %v304 = vadd.f32 %v303, %v289
  %v305 = vadd.f32 %v304, %v290
  %v306 = vadd.f32 %v305, %v291
  %v307 = vadd.f32 %v306, %v292
  %v308 = vadd.f32 %v307, %v293
  %v309 = vadd.f32 %v308, %v294
  %v310 = vadd.f32 %v309, %v295
  %v311 = vadd.f32 %v310, %v296
  %v312 = vadd.f32 %v311, %v297
  %v313 = vadd.f32 %v312, %v298
  %v314 = vrot.slane %v313, 4
  %v315 = vadd.f32 %v313, %v314
  %v316 = vrot.slane %v315, 2
  %v317 = vadd.f32 %v315, %v316
  %v318 = vrot.slane %v317, 1
  %v319 = vadd.f32 %v317, %v318
  %320 = vst [vmem:[%s6] sm:$0x1] %v319
  // Predicated region
  $region18: #{bottleneck_forward.6} parent=0 // pred_check
    _
  $region19: #{bottleneck_forward.6} parent=0 // pred_check_branch
    %322 = sbr.rel (0) target = $region21
  $region20: #{bottleneck_forward.6} parent=0 // pred_region
    _
  $region21: #{bottleneck_forward.6} parent=0 // pred_fallthru
    _
  // Predicated region
  $region22: #{bottleneck_forward.6} parent=0 // pred_check
    _
  $region23: #{bottleneck_forward.6} parent=0 // pred_check_branch
    %324 = sbr.rel (0) target = $region25
  $region24: #{bottleneck_forward.6} parent=0 // pred_region
    _
  $region25: #{bottleneck_forward.6} parent=0 // pred_fallthru
    _
  // Predicated region
  $region26: #{bottleneck_forward.6} parent=0 // pred_check
    _
  $region27: #{bottleneck_forward.6} parent=0 // pred_check_branch
    %326 = sbr.rel (0) target = $region29
  $region28: #{bottleneck_forward.6} parent=0 // pred_region
    _
  $region29: #{bottleneck_forward.6} parent=0 // pred_fallthru
    _
  // Predicated region
  $region30: #{bottleneck_forward.6} parent=0 // pred_check
    _
  $region31: #{bottleneck_forward.6} parent=0 // pred_check_branch
    %328 = sbr.rel (0) target = $region33
  $region32: #{bottleneck_forward.6} parent=0 // pred_region
    _
  $region33: #{bottleneck_forward.6} parent=0 // pred_fallthru
    _
  // Predicated region
  $region34: #{bottleneck_forward.6} parent=0 // pred_check
    _
  $region35: #{bottleneck_forward.6} parent=0 // pred_check_branch
    %330 = sbr.rel (0) target = $region37
  $region36: #{bottleneck_forward.6} parent=0 // pred_region
    _
  $region37: #{bottleneck_forward.6} parent=0 // pred_fallthru
    _
  // Predicated region
  $region38: #{bottleneck_forward.6} parent=0 // pred_check
    _
  $region39: #{bottleneck_forward.6} parent=0 // pred_check_branch
    %332 = sbr.rel (0) target = $region41
  $region40: #{bottleneck_forward.6} parent=0 // pred_region
    _
  $region41: #{bottleneck_forward.6} parent=0 // pred_fallthru
    _

// kernel: bottleneck_forward.4
$region0: #{bottleneck_forward.4}
  #allocation0 [shape = 'u32[]', space=smem, size = 0x4, offset = 0x4, fixed_abs, tag = 'smem constant byte address 0x4 - core index']
  #allocation1 [shape = 'u32[72,128]{1,0:T(1,128)}', space=vmem, size = 0x9000, scoped, tag = 'internal scratch']
  %s0 = inlined_call_operand.vmem [shape: bf16[128,128], index: 0, kind: input, shape index: {}]
  %s1 = inlined_call_operand.vmem [shape: bf16[128,256], index: 1, kind: input, shape index: {}]
  %s2 = inlined_call_operand.vmem [shape: bf16[128,128], index: 2, kind: output, shape index: {0}]
  %s3 = inlined_call_operand.vmem [shape: f32[1,1,128], index: 3, kind: output, shape index: {1}]
  %s4 = inlined_call_operand.vmem [shape: f32[1,1,128], index: 4, kind: output, shape index: {2}]
  %s5 = inlined_call_operand.vmem [shape: f32[1,1,128], index: 5, kind: output, shape index: {3}]
  %s6 = inlined_call_operand.vmem [shape: f32[1,1,128], index: 6, kind: output, shape index: {4}]
  %7 = xla_tuple %s2, %s3, %s4, %s5, %s6
  %s8 = sld [smem:[#allocation0]]
  $region50: #{bottleneck_forward.4} parent=0
    _
  %s10 = ssub.s32 1, %s8
  %s11 = scalar_select 0, %s10, %s8
  // Predicated region
  $region2: #{bottleneck_forward.4} parent=0 // pred_check
    _
  $region3: #{bottleneck_forward.4} parent=0 // pred_check_branch
    %13 = sbr.rel (0) target = $region5
  $region4: #{bottleneck_forward.4} parent=0 // pred_region
    _
  $region5: #{bottleneck_forward.4} parent=0 // pred_fallthru
    _
  // Predicated region
  $region6: #{bottleneck_forward.4} parent=0 // pred_check
    _
  $region7: #{bottleneck_forward.4} parent=0 // pred_check_branch
    %15 = sbr.rel (0) target = $region9
  $region8: #{bottleneck_forward.4} parent=0 // pred_region
    _
  $region9: #{bottleneck_forward.4} parent=0 // pred_fallthru
    _
  %v16 = vld [vmem:[%s0] sm:$0xf]
  %v17 = vld [vmem:[%s0 + $0x4] sm:$0xf]
  %v18 = vld [vmem:[%s0 + $0x8] sm:$0xf]
  %v19 = vld [vmem:[%s0 + $0xc] sm:$0xf]
  %v20 = vld [vmem:[%s0 + $0x10] sm:$0xf]
  %v21 = vld [vmem:[%s0 + $0x14] sm:$0xf]
  %v22 = vld [vmem:[%s0 + $0x18] sm:$0xf]
  %v23 = vld [vmem:[%s0 + $0x1c] sm:$0xf]
  %v24 = vld [vmem:[%s0 + $0x20] sm:$0xf]
  %v25 = vld [vmem:[%s0 + $0x24] sm:$0xf]
  %v26 = vld [vmem:[%s0 + $0x28] sm:$0xf]
  %v27 = vld [vmem:[%s0 + $0x2c] sm:$0xf]
  %v28 = vld [vmem:[%s0 + $0x30] sm:$0xf]
  %v29 = vld [vmem:[%s0 + $0x34] sm:$0xf]
  %v30 = vld [vmem:[%s0 + $0x38] sm:$0xf]
  %v31 = vld [vmem:[%s0 + $0x3c] sm:$0xf]
  %v32 = vld [vmem:[%s1] sm:$0xff]
  %v33 = vld [vmem:[%s1 + $0x8] sm:$0xff]
  %v34 = vld [vmem:[%s1 + $0x10] sm:$0xff]
  %v35 = vld [vmem:[%s1 + $0x18] sm:$0xff]
  %v36 = vld [vmem:[%s1 + $0x20] sm:$0xff]
  %v37 = vld [vmem:[%s1 + $0x28] sm:$0xff]
  %v38 = vld [vmem:[%s1 + $0x30] sm:$0xff]
  %v39 = vld [vmem:[%s1 + $0x38] sm:$0xff]
  %v40 = vld [vmem:[%s1 + $0x40] sm:$0xff]
  %v41 = vld [vmem:[%s1 + $0x48] sm:$0xff]
  %v42 = vld [vmem:[%s1 + $0x50] sm:$0xff]
  %v43 = vld [vmem:[%s1 + $0x58] sm:$0xff]
  %v44 = vld [vmem:[%s1 + $0x60] sm:$0xff]
  %v45 = vld [vmem:[%s1 + $0x68] sm:$0xff]
  %v46 = vld [vmem:[%s1 + $0x70] sm:$0xff]
  %v47 = vld [vmem:[%s1 + $0x78] sm:$0xff]
  %v64 = vunpack.c.l.b16 %v16
  %v65 = vunpack.c.l.b16 %v17
  %v66 = vunpack.c.l.b16 %v18
  %v67 = vunpack.c.l.b16 %v19
  %v68 = vunpack.c.l.b16 %v20
  %v69 = vunpack.c.l.b16 %v21
  %v70 = vunpack.c.l.b16 %v22
  %v71 = vunpack.c.l.b16 %v23
  %v72 = vunpack.c.l.b16 %v24
  %v73 = vunpack.c.l.b16 %v25
  %v74 = vunpack.c.l.b16 %v26
  %v75 = vunpack.c.l.b16 %v27
  %v76 = vunpack.c.l.b16 %v28
  %v77 = vunpack.c.l.b16 %v29
  %v78 = vunpack.c.l.b16 %v30
  %v79 = vunpack.c.l.b16 %v31
  %v80 = vpack.c.b16 %v65, %v64
  %v81 = vpack.c.b16 %v67, %v66
  %v82 = vpack.c.b16 %v69, %v68
  %v83 = vpack.c.b16 %v71, %v70
  %v84 = vpack.c.b16 %v73, %v72
  %v85 = vpack.c.b16 %v75, %v74
  %v86 = vpack.c.b16 %v77, %v76
  %v87 = vpack.c.b16 %v79, %v78
  %v112 = vunpack.c.l.b16 %v32
  %v113 = vunpack.c.h.b16 %v32
  %v114 = vunpack.c.l.b16 %v33
  %v115 = vunpack.c.h.b16 %v33
  %v116 = vunpack.c.l.b16 %v34
  %v117 = vunpack.c.h.b16 %v34
  %v118 = vunpack.c.l.b16 %v35
  %v119 = vunpack.c.h.b16 %v35
  %v120 = vunpack.c.l.b16 %v36
  %v121 = vunpack.c.h.b16 %v36
  %v122 = vunpack.c.l.b16 %v37
  %v123 = vunpack.c.h.b16 %v37
  %v124 = vunpack.c.l.b16 %v38
  %v125 = vunpack.c.h.b16 %v38
  %v126 = vunpack.c.l.b16 %v39
  %v127 = vunpack.c.h.b16 %v39
  %v128 = vunpack.c.l.b16 %v40
  %v129 = vunpack.c.h.b16 %v40
  %v130 = vunpack.c.l.b16 %v41
  %v131 = vunpack.c.h.b16 %v41
  %v132 = vunpack.c.l.b16 %v42
  %v133 = vunpack.c.h.b16 %v42
  %v134 = vunpack.c.l.b16 %v43
  %v135 = vunpack.c.h.b16 %v43
  %v136 = vunpack.c.l.b16 %v44
  %v137 = vunpack.c.h.b16 %v44
  %v138 = vunpack.c.l.b16 %v45
  %v139 = vunpack.c.h.b16 %v45
  %v140 = vunpack.c.l.b16 %v46
  %v141 = vunpack.c.h.b16 %v46
  %v142 = vunpack.c.l.b16 %v47
  %v143 = vunpack.c.h.b16 %v47
  %v144 = vpack.c.b16 %v114, %v112
  %v145 = vpack.c.b16 %v115, %v113
  %v146 = vpack.c.b16 %v118, %v116
  %v147 = vpack.c.b16 %v119, %v117
  %v148 = vpack.c.b16 %v122, %v120
  %v149 = vpack.c.b16 %v123, %v121
  %v150 = vpack.c.b16 %v126, %v124
  %v151 = vpack.c.b16 %v127, %v125
  %v152 = vpack.c.b16 %v130, %v128
  %v153 = vpack.c.b16 %v131, %v129
  %v154 = vpack.c.b16 %v134, %v132
  %v155 = vpack.c.b16 %v135, %v133
  %v156 = vpack.c.b16 %v138, %v136
  %v157 = vpack.c.b16 %v139, %v137
  %v158 = vpack.c.b16 %v142, %v140
  %v159 = vpack.c.b16 %v143, %v141
  %176 = vmatpush.bf16.msra.mxu0 %v158
  %177 = vmatpush.bf16.msra.mxu0 %v156
  %178 = vmatpush.bf16.msra.mxu0 %v154
  %179 = vmatpush.bf16.msra.mxu0 %v152
  %180 = vmatpush.bf16.msra.mxu0 %v150
  %181 = vmatpush.bf16.msra.mxu0 %v148
  %182 = vmatpush.bf16.msra.mxu0 %v146
  %183 = vmatpush.bf16.msra.mxu0 %v144
  %184 = vmatmul.bf16.gmra.mxu0 %v80
  %v185 = vpop.f32.mrf.mxu0
  %v186 = vadd.f32 0.0, %v185
  %v187 = vpop.f32.mrf.mxu0
  %v188 = vadd.f32 0.0, %v187
  %189 = vmatmul.bf16.gmra.mxu0 %v81
  %v190 = vpop.f32.mrf.mxu0
  %v191 = vadd.f32 0.0, %v190
  %v192 = vpop.f32.mrf.mxu0
  %v193 = vadd.f32 0.0, %v192
  %194 = vmatmul.bf16.gmra.mxu0 %v82
  %v195 = vpop.f32.mrf.mxu0
  %v196 = vadd.f32 0.0, %v195
  %v197 = vpop.f32.mrf.mxu0
  %v198 = vadd.f32 0.0, %v197
  %199 = vmatmul.bf16.gmra.mxu0 %v83
  %v200 = vpop.f32.mrf.mxu0
  %v201 = vadd.f32 0.0, %v200
  %v202 = vpop.f32.mrf.mxu0
  %v203 = vadd.f32 0.0, %v202
  %204 = vmatmul.bf16.gmra.mxu0 %v84
  %v205 = vpop.f32.mrf.mxu0
  %v206 = vadd.f32 0.0, %v205
  %v207 = vpop.f32.mrf.mxu0
  %v208 = vadd.f32 0.0, %v207
  %209 = vmatmul.bf16.gmra.mxu0 %v85
  %v210 = vpop.f32.mrf.mxu0
  %v211 = vadd.f32 0.0, %v210
  %v212 = vpop.f32.mrf.mxu0
  %v213 = vadd.f32 0.0, %v212
  %214 = vmatmul.bf16.gmra.mxu0 %v86
  %v215 = vpop.f32.mrf.mxu0
  %v216 = vadd.f32 0.0, %v215
  %v217 = vpop.f32.mrf.mxu0
  %v218 = vadd.f32 0.0, %v217
  %219 = vmatmul.bf16.gmra.mxu0 %v87
  %v220 = vpop.f32.mrf.mxu0
  %v221 = vadd.f32 0.0, %v220
  %v222 = vpop.f32.mrf.mxu0
  %v223 = vadd.f32 0.0, %v222
  %224 = vdwg.mxu0
  %225 = vmatpush.bf16.msra.mxu0 %v159
  %226 = vmatpush.bf16.msra.mxu0 %v157
  %227 = vmatpush.bf16.msra.mxu0 %v155
  %228 = vmatpush.bf16.msra.mxu0 %v153
  %229 = vmatpush.bf16.msra.mxu0 %v151
  %230 = vmatpush.bf16.msra.mxu0 %v149
  %231 = vmatpush.bf16.msra.mxu0 %v147
  %232 = vmatpush.bf16.msra.mxu0 %v145
  %233 = vmatmul.bf16.gmra.mxu0 %v80
  %v234 = vpop.f32.mrf.mxu0
  %v235 = vadd.f32 0.0, %v234
  %v236 = vpop.f32.mrf.mxu0
  %v237 = vadd.f32 0.0, %v236
  %238 = vmatmul.bf16.gmra.mxu0 %v81
  %v239 = vpop.f32.mrf.mxu0
  %v240 = vadd.f32 0.0, %v239
  %v241 = vpop.f32.mrf.mxu0
  %v242 = vadd.f32 0.0, %v241
  %243 = vmatmul.bf16.gmra.mxu0 %v82
  %v244 = vpop.f32.mrf.mxu0
  %v245 = vadd.f32 0.0, %v244
  %v246 = vpop.f32.mrf.mxu0
  %v247 = vadd.f32 0.0, %v246
  %248 = vmatmul.bf16.gmra.mxu0 %v83
  %v249 = vpop.f32.mrf.mxu0
  %v250 = vadd.f32 0.0, %v249
  %v251 = vpop.f32.mrf.mxu0
  %v252 = vadd.f32 0.0, %v251
  %253 = vmatmul.bf16.gmra.mxu0 %v84
  %v254 = vpop.f32.mrf.mxu0
  %v255 = vadd.f32 0.0, %v254
  %v256 = vpop.f32.mrf.mxu0
  %v257 = vadd.f32 0.0, %v256
  %258 = vmatmul.bf16.gmra.mxu0 %v85
  %v259 = vpop.f32.mrf.mxu0
  %v260 = vadd.f32 0.0, %v259
  %v261 = vpop.f32.mrf.mxu0
  %v262 = vadd.f32 0.0, %v261
  %263 = vmatmul.bf16.gmra.mxu0 %v86
  %v264 = vpop.f32.mrf.mxu0
  %v265 = vadd.f32 0.0, %v264
  %v266 = vpop.f32.mrf.mxu0
  %v267 = vadd.f32 0.0, %v266
  %268 = vmatmul.bf16.gmra.mxu0 %v87
  %v269 = vpop.f32.mrf.mxu0
  %v270 = vadd.f32 0.0, %v269
  %v271 = vpop.f32.mrf.mxu0
  %v272 = vadd.f32 0.0, %v271
  %273 = vdwg.mxu0
  %v274 = vpack.c.bf16 %v186, %v186
  %v275 = vpack.c.bf16 %v188, %v188
  %v276 = vpack.c.bf16 %v191, %v191
  %v277 = vpack.c.bf16 %v193, %v193
  %v278 = vpack.c.bf16 %v196, %v196
  %v279 = vpack.c.bf16 %v198, %v198
  %v280 = vpack.c.bf16 %v201, %v201
  %v281 = vpack.c.bf16 %v203, %v203
  %v282 = vpack.c.bf16 %v206, %v206
  %v283 = vpack.c.bf16 %v208, %v208
  %v284 = vpack.c.bf16 %v211, %v211
  %v285 = vpack.c.bf16 %v213, %v213
  %v286 = vpack.c.bf16 %v216, %v216
  %v287 = vpack.c.bf16 %v218, %v218
  %v288 = vpack.c.bf16 %v221, %v221
  %v289 = vpack.c.bf16 %v223, %v223
  %290 = vst [vmem:[%s2] sm:$0xf] %v274
  %291 = vst [vmem:[%s2 + $0x4] sm:$0xf] %v275
  %292 = vst [vmem:[%s2 + $0x8] sm:$0xf] %v276
  %293 = vst [vmem:[%s2 + $0xc] sm:$0xf] %v277
  %294 = vst [vmem:[%s2 + $0x10] sm:$0xf] %v278
  %295 = vst [vmem:[%s2 + $0x14] sm:$0xf] %v279
  %296 = vst [vmem:[%s2 + $0x18] sm:$0xf] %v280
  %297 = vst [vmem:[%s2 + $0x1c] sm:$0xf] %v281
  %298 = vst [vmem:[%s2 + $0x20] sm:$0xf] %v282
  %299 = vst [vmem:[%s2 + $0x24] sm:$0xf] %v283
  %300 = vst [vmem:[%s2 + $0x28] sm:$0xf] %v284
  %301 = vst [vmem:[%s2 + $0x2c] sm:$0xf] %v285
  %302 = vst [vmem:[%s2 + $0x30] sm:$0xf] %v286
  %303 = vst [vmem:[%s2 + $0x34] sm:$0xf] %v287
  %304 = vst [vmem:[%s2 + $0x38] sm:$0xf] %v288
  %305 = vst [vmem:[%s2 + $0x3c] sm:$0xf] %v289
  %v306 = vadd.f32 %v186, %v188
  %v307 = vadd.f32 %v306, %v191
  %v308 = vadd.f32 %v307, %v193
  %v309 = vadd.f32 %v308, %v196
  %v310 = vadd.f32 %v309, %v198
  %v311 = vadd.f32 %v310, %v201
  %v312 = vadd.f32 %v311, %v203
  %v313 = vadd.f32 %v312, %v206
  %v314 = vadd.f32 %v313, %v208
  %v315 = vadd.f32 %v314, %v211
  %v316 = vadd.f32 %v315, %v213
  %v317 = vadd.f32 %v316, %v216
  %v318 = vadd.f32 %v317, %v218
  %v319 = vadd.f32 %v318, %v221
  %v320 = vadd.f32 %v319, %v223
  %v321 = vrot.slane %v320, 4
  %v322 = vadd.f32 %v320, %v321
  %v323 = vrot.slane %v322, 2
  %v324 = vadd.f32 %v322, %v323
  %v325 = vrot.slane %v324, 1
  %v326 = vadd.f32 %v324, %v325
  %327 = vst [vmem:[%s3] sm:$0x1] %v326
  %v328 = vmul.f32 %v186, %v186
  %v329 = vmul.f32 %v188, %v188
  %v330 = vmul.f32 %v191, %v191
  %v331 = vmul.f32 %v193, %v193
  %v332 = vmul.f32 %v196, %v196
  %v333 = vmul.f32 %v198, %v198
  %v334 = vmul.f32 %v201, %v201
  %v335 = vmul.f32 %v203, %v203
  %v336 = vmul.f32 %v206, %v206
  %v337 = vmul.f32 %v208, %v208
  %v338 = vmul.f32 %v211, %v211
  %v339 = vmul.f32 %v213, %v213
  %v340 = vmul.f32 %v216, %v216
  %v341 = vmul.f32 %v218, %v218
  %v342 = vmul.f32 %v221, %v221
  %v343 = vmul.f32 %v223, %v223
  %v344 = vadd.f32 %v328, %v329
  %v345 = vadd.f32 %v344, %v330
  %v346 = vadd.f32 %v345, %v331
  %v347 = vadd.f32 %v346, %v332
  %v348 = vadd.f32 %v347, %v333
  %v349 = vadd.f32 %v348, %v334
  %v350 = vadd.f32 %v349, %v335
  %v351 = vadd.f32 %v350, %v336
  %v352 = vadd.f32 %v351, %v337
  %v353 = vadd.f32 %v352, %v338
  %v354 = vadd.f32 %v353, %v339
  %v355 = vadd.f32 %v354, %v340
  %v356 = vadd.f32 %v355, %v341
  %v357 = vadd.f32 %v356, %v342
  %v358 = vadd.f32 %v357, %v343
  %v359 = vrot.slane %v358, 4
  %v360 = vadd.f32 %v358, %v359
  %v361 = vrot.slane %v360, 2
  %v362 = vadd.f32 %v360, %v361
  %v363 = vrot.slane %v362, 1
  %v364 = vadd.f32 %v362, %v363
  %365 = vst [vmem:[%s4] sm:$0x1] %v364
  %v366 = vadd.f32 %v235, %v237
  %v367 = vadd.f32 %v366, %v240
  %v368 = vadd.f32 %v367, %v242
  %v369 = vadd.f32 %v368, %v245
  %v370 = vadd.f32 %v369, %v247
  %v371 = vadd.f32 %v370, %v250
  %v372 = vadd.f32 %v371, %v252
  %v373 = vadd.f32 %v372, %v255
  %v374 = vadd.f32 %v373, %v257
  %v375 = vadd.f32 %v374, %v260
  %v376 = vadd.f32 %v375, %v262
  %v377 = vadd.f32 %v376, %v265
  %v378 = vadd.f32 %v377, %v267
  %v379 = vadd.f32 %v378, %v270
  %v380 = vadd.f32 %v379, %v272
  %v381 = vrot.slane %v380, 4
  %v382 = vadd.f32 %v380, %v381
  %v383 = vrot.slane %v382, 2
  %v384 = vadd.f32 %v382, %v383
  %v385 = vrot.slane %v384, 1
  %v386 = vadd.f32 %v384, %v385
  %387 = vst [vmem:[%s5] sm:$0x1] %v386
  %v388 = vmul.f32 %v235, %v235
  %v389 = vmul.f32 %v237, %v237
  %v390 = vmul.f32 %v240, %v240
  %v391 = vmul.f32 %v242, %v242
  %v392 = vmul.f32 %v245, %v245
  %v393 = vmul.f32 %v247, %v247
  %v394 = vmul.f32 %v250, %v250
  %v395 = vmul.f32 %v252, %v252
  %v396 = vmul.f32 %v255, %v255
  %v397 = vmul.f32 %v257, %v257
  %v398 = vmul.f32 %v260, %v260
  %v399 = vmul.f32 %v262, %v262
  %v400 = vmul.f32 %v265, %v265
  %v401 = vmul.f32 %v267, %v267
  %v402 = vmul.f32 %v270, %v270
  %v403 = vmul.f32 %v272, %v272
  %v404 = vadd.f32 %v388, %v389
  %v405 = vadd.f32 %v404, %v390
  %v406 = vadd.f32 %v405, %v391
  %v407 = vadd.f32 %v406, %v392
  %v408 = vadd.f32 %v407, %v393
  %v409 = vadd.f32 %v408, %v394
  %v410 = vadd.f32 %v409, %v395
  %v411 = vadd.f32 %v410, %v396
  %v412 = vadd.f32 %v411, %v397
  %v413 = vadd.f32 %v412, %v398
  %v414 = vadd.f32 %v413, %v399
  %v415 = vadd.f32 %v414, %v400
  %v416 = vadd.f32 %v415, %v401
  %v417 = vadd.f32 %v416, %v402
  %v418 = vadd.f32 %v417, %v403
  %v419 = vrot.slane %v418, 4
  %v420 = vadd.f32 %v418, %v419
  %v421 = vrot.slane %v420, 2
  %v422 = vadd.f32 %v420, %v421
  %v423 = vrot.slane %v422, 1
  %v424 = vadd.f32 %v422, %v423
  %425 = vst [vmem:[%s6] sm:$0x1] %v424
  // Predicated region
  $region10: #{bottleneck_forward.4} parent=0 // pred_check
    _
  $region11: #{bottleneck_forward.4} parent=0 // pred_check_branch
    %427 = sbr.rel (0) target = $region13
  $region12: #{bottleneck_forward.4} parent=0 // pred_region
    _
  $region13: #{bottleneck_forward.4} parent=0 // pred_fallthru
    _
  // Predicated region
  $region14: #{bottleneck_forward.4} parent=0 // pred_check
    _
  $region15: #{bottleneck_forward.4} parent=0 // pred_check_branch
    %429 = sbr.rel (0) target = $region17
  $region16: #{bottleneck_forward.4} parent=0 // pred_region
    _
  $region17: #{bottleneck_forward.4} parent=0 // pred_fallthru
    _
  // Predicated region
  $region18: #{bottleneck_forward.4} parent=0 // pred_check
    _
  $region19: #{bottleneck_forward.4} parent=0 // pred_check_branch
    %431 = sbr.rel (0) target = $region21
  $region20: #{bottleneck_forward.4} parent=0 // pred_region
    _
  $region21: #{bottleneck_forward.4} parent=0 // pred_fallthru
    _
  // Predicated region
  $region22: #{bottleneck_forward.4} parent=0 // pred_check
    _
  $region23: #{bottleneck_forward.4} parent=0 // pred_check_branch
    %433 = sbr.rel (0) target = $region25
  $region24: #{bottleneck_forward.4} parent=0 // pred_region
    _
  $region25: #{bottleneck_forward.4} parent=0 // pred_fallthru
    _
  // Predicated region
  $region26: #{bottleneck_forward.4} parent=0 // pred_check
    _
  $region27: #{bottleneck_forward.4} parent=0 // pred_check_branch
    %435 = sbr.rel (0) target = $region29
  $region28: #{bottleneck_forward.4} parent=0 // pred_region
    _
  $region29: #{bottleneck_forward.4} parent=0 // pred_fallthru
    _
  // Predicated region
  $region30: #{bottleneck_forward.4} parent=0 // pred_check
    _
  $region31: #{bottleneck_forward.4} parent=0 // pred_check_branch
    %437 = sbr.rel (0) target = $region33
  $region32: #{bottleneck_forward.4} parent=0 // pred_region
    _
  $region33: #{bottleneck_forward.4} parent=0 // pred_fallthru
    _
  // Predicated region
  $region34: #{bottleneck_forward.4} parent=0 // pred_check
    _
  $region35: #{bottleneck_forward.4} parent=0 // pred_check_branch
    %439 = sbr.rel (0) target = $region37
  $region36: #{bottleneck_forward.4} parent=0 // pred_region
    _
  $region37: #{bottleneck_forward.4} parent=0 // pred_fallthru
    _
  // Predicated region
  $region38: #{bottleneck_forward.4} parent=0 // pred_check
    _
  $region39: #{bottleneck_forward.4} parent=0 // pred_check_branch
    %441 = sbr.rel (0) target = $region41
  $region40: #{bottleneck_forward.4} parent=0 // pred_region
    _
  $region41: #{bottleneck_forward.4} parent=0 // pred_fallthru
    _
  // Predicated region
  $region42: #{bottleneck_forward.4} parent=0 // pred_check
    _
  $region43: #{bottleneck_forward.4} parent=0 // pred_check_branch
    %443 = sbr.rel (0) target = $region45
  $region44: #{bottleneck_forward.4} parent=0 // pred_region
    _
  $region45: #{bottleneck_forward.4} parent=0 // pred_fallthru
    _
  // Predicated region
  $region46: #{bottleneck_forward.4} parent=0 // pred_check
    _
  $region47: #{bottleneck_forward.4} parent=0 // pred_check_branch
    %445 = sbr.rel (0) target = $region49
  $region48: #{bottleneck_forward.4} parent=0 // pred_region
    _
  $region49: #{bottleneck_forward.4} parent=0 // pred_fallthru
    _

// kernel: bottleneck_forward.7
$region0: #{bottleneck_forward.7}
  #allocation0 [shape = 'u32[]', space=smem, size = 0x4, offset = 0x4, fixed_abs, tag = 'smem constant byte address 0x4 - core index']
  #allocation1 [shape = 'u32[72,128]{1,0:T(1,128)}', space=vmem, size = 0x9000, scoped, tag = 'internal scratch']
  %s0 = inlined_call_operand.vmem [shape: bf16[128,128], index: 0, kind: input, shape index: {}]
  %s1 = inlined_call_operand.vmem [shape: bf16[128,128], index: 1, kind: input, shape index: {}]
  %s2 = inlined_call_operand.vmem [shape: bf16[128,128], index: 2, kind: input, shape index: {}]
  %s3 = inlined_call_operand.vmem [shape: f32[1,128], index: 3, kind: input, shape index: {}]
  %s4 = inlined_call_operand.vmem [shape: f32[1,128], index: 4, kind: input, shape index: {}]
  %s5 = inlined_call_operand.vmem [shape: f32[1,128], index: 5, kind: input, shape index: {}]
  %s6 = inlined_call_operand.vmem [shape: f32[1,128], index: 6, kind: input, shape index: {}]
  %s7 = inlined_call_operand.hbm [shape: f32[128,128], index: 7, kind: output, shape index: {}]
  %s8 = sld [smem:[#allocation0]]
  $region38: #{bottleneck_forward.7} parent=0
    _
  %s10 = ssub.s32 1, %s8
  %s11 = scalar_select 0, %s10, %s8
  $region1: #{bottleneck_forward.7} parent=0
    #allocation2 [shape = 'u8[65536]{0}', space=vmem, size = 0x10000, scoped, tag = 'output window, operand 0, single buffered']
    #allocation3 [shape = 's32[1]{0}', space=sflag, size = 0x4, scoped, tag = 'scoped memory for bottleneck_forward.7']
    %12 = vsyncpa [#allocation3], 0
    // Predicated region
    $region2: #{bottleneck_forward.7} parent=1 // pred_check
      _
    $region3: #{bottleneck_forward.7} parent=1 // pred_check_branch
      %14 = sbr.rel (0) target = $region5
    $region4: #{bottleneck_forward.7} parent=1 // pred_region
      _
    $region5: #{bottleneck_forward.7} parent=1 // pred_fallthru
      _
    // Predicated region
    $region6: #{bottleneck_forward.7} parent=1 // pred_check
      _
    $region7: #{bottleneck_forward.7} parent=1 // pred_check_branch
      %16 = sbr.rel (0) target = $region9
    $region8: #{bottleneck_forward.7} parent=1 // pred_region
      _
    $region9: #{bottleneck_forward.7} parent=1 // pred_fallthru
      _
    // Predicated region
    $region10: #{bottleneck_forward.7} parent=1 // pred_check
      _
    $region11: #{bottleneck_forward.7} parent=1 // pred_check_branch
      %18 = sbr.rel (0) target = $region13
    $region12: #{bottleneck_forward.7} parent=1 // pred_region
      _
    $region13: #{bottleneck_forward.7} parent=1 // pred_fallthru
      _
    // Predicated region
    $region14: #{bottleneck_forward.7} parent=1 // pred_check
      _
    $region15: #{bottleneck_forward.7} parent=1 // pred_check_branch
      %20 = sbr.rel (0) target = $region17
    $region16: #{bottleneck_forward.7} parent=1 // pred_region
      _
    $region17: #{bottleneck_forward.7} parent=1 // pred_fallthru
      _
    // Predicated region
    $region18: #{bottleneck_forward.7} parent=1 // pred_check
      _
    $region19: #{bottleneck_forward.7} parent=1 // pred_check_branch
      %22 = sbr.rel (0) target = $region21
    $region20: #{bottleneck_forward.7} parent=1 // pred_region
      _
    $region21: #{bottleneck_forward.7} parent=1 // pred_fallthru
      _
    // Predicated region
    $region22: #{bottleneck_forward.7} parent=1 // pred_check
      _
    $region23: #{bottleneck_forward.7} parent=1 // pred_check_branch
      %24 = sbr.rel (0) target = $region25
    $region24: #{bottleneck_forward.7} parent=1 // pred_region
      _
    $region25: #{bottleneck_forward.7} parent=1 // pred_fallthru
      _
    // Predicated region
    $region26: #{bottleneck_forward.7} parent=1 // pred_check
      _
    $region27: #{bottleneck_forward.7} parent=1 // pred_check_branch
      %26 = sbr.rel (0) target = $region29
    $region28: #{bottleneck_forward.7} parent=1 // pred_region
      _
    $region29: #{bottleneck_forward.7} parent=1 // pred_fallthru
      _
    %v27 = vld [vmem:[%s1] sm:$0xf]
    %v28 = vld [vmem:[%s1 + $0x4] sm:$0xf]
    %v29 = vld [vmem:[%s1 + $0x8] sm:$0xf]
    %v30 = vld [vmem:[%s1 + $0xc] sm:$0xf]
    %v31 = vld [vmem:[%s1 + $0x10] sm:$0xf]
    %v32 = vld [vmem:[%s1 + $0x14] sm:$0xf]
    %v33 = vld [vmem:[%s1 + $0x18] sm:$0xf]
    %v34 = vld [vmem:[%s1 + $0x1c] sm:$0xf]
    %v35 = vld [vmem:[%s1 + $0x20] sm:$0xf]
    %v36 = vld [vmem:[%s1 + $0x24] sm:$0xf]
    %v37 = vld [vmem:[%s1 + $0x28] sm:$0xf]
    %v38 = vld [vmem:[%s1 + $0x2c] sm:$0xf]
    %v39 = vld [vmem:[%s1 + $0x30] sm:$0xf]
    %v40 = vld [vmem:[%s1 + $0x34] sm:$0xf]
    %v41 = vld [vmem:[%s1 + $0x38] sm:$0xf]
    %v42 = vld [vmem:[%s1 + $0x3c] sm:$0xf]
    %v43 = vld [vmem:[%s2] sm:$0xf]
    %v44 = vld [vmem:[%s2 + $0x4] sm:$0xf]
    %v45 = vld [vmem:[%s2 + $0x8] sm:$0xf]
    %v46 = vld [vmem:[%s2 + $0xc] sm:$0xf]
    %v47 = vld [vmem:[%s2 + $0x10] sm:$0xf]
    %v48 = vld [vmem:[%s2 + $0x14] sm:$0xf]
    %v49 = vld [vmem:[%s2 + $0x18] sm:$0xf]
    %v50 = vld [vmem:[%s2 + $0x1c] sm:$0xf]
    %v51 = vld [vmem:[%s2 + $0x20] sm:$0xf]
    %v52 = vld [vmem:[%s2 + $0x24] sm:$0xf]
    %v53 = vld [vmem:[%s2 + $0x28] sm:$0xf]
    %v54 = vld [vmem:[%s2 + $0x2c] sm:$0xf]
    %v55 = vld [vmem:[%s2 + $0x30] sm:$0xf]
    %v56 = vld [vmem:[%s2 + $0x34] sm:$0xf]
    %v57 = vld [vmem:[%s2 + $0x38] sm:$0xf]
    %v58 = vld [vmem:[%s2 + $0x3c] sm:$0xf]
    %v75 = vunpack.c.l.b16 %v27
    %v76 = vunpack.c.l.b16 %v28
    %v77 = vunpack.c.l.b16 %v29
    %v78 = vunpack.c.l.b16 %v30
    %v79 = vunpack.c.l.b16 %v31
    %v80 = vunpack.c.l.b16 %v32
    %v81 = vunpack.c.l.b16 %v33
    %v82 = vunpack.c.l.b16 %v34
    %v83 = vunpack.c.l.b16 %v35
    %v84 = vunpack.c.l.b16 %v36
    %v85 = vunpack.c.l.b16 %v37
    %v86 = vunpack.c.l.b16 %v38
    %v87 = vunpack.c.l.b16 %v39
    %v88 = vunpack.c.l.b16 %v40
    %v89 = vunpack.c.l.b16 %v41
    %v90 = vunpack.c.l.b16 %v42
    %v91 = vpack.c.b16 %v76, %v75
    %v92 = vpack.c.b16 %v78, %v77
    %v93 = vpack.c.b16 %v80, %v79
    %v94 = vpack.c.b16 %v82, %v81
    %v95 = vpack.c.b16 %v84, %v83
    %v96 = vpack.c.b16 %v86, %v85
    %v97 = vpack.c.b16 %v88, %v87
    %v98 = vpack.c.b16 %v90, %v89
    %v123 = vunpack.c.l.b16 %v43
    %v124 = vunpack.c.l.b16 %v44
    %v125 = vunpack.c.l.b16 %v45
    %v126 = vunpack.c.l.b16 %v46
    %v127 = vunpack.c.l.b16 %v47
    %v128 = vunpack.c.l.b16 %v48
    %v129 = vunpack.c.l.b16 %v49
    %v130 = vunpack.c.l.b16 %v50
    %v131 = vunpack.c.l.b16 %v51
    %v132 = vunpack.c.l.b16 %v52
    %v133 = vunpack.c.l.b16 %v53
    %v134 = vunpack.c.l.b16 %v54
    %v135 = vunpack.c.l.b16 %v55
    %v136 = vunpack.c.l.b16 %v56
    %v137 = vunpack.c.l.b16 %v57
    %v138 = vunpack.c.l.b16 %v58
    %v139 = vpack.c.b16 %v124, %v123
    %v140 = vpack.c.b16 %v126, %v125
    %v141 = vpack.c.b16 %v128, %v127
    %v142 = vpack.c.b16 %v130, %v129
    %v143 = vpack.c.b16 %v132, %v131
    %v144 = vpack.c.b16 %v134, %v133
    %v145 = vpack.c.b16 %v136, %v135
    %v146 = vpack.c.b16 %v138, %v137
    %155 = vmatpush.bf16.msra.mxu0 %v146
    %156 = vmatpush.bf16.msra.mxu0 %v145
    %157 = vmatpush.bf16.msra.mxu0 %v144
    %158 = vmatpush.bf16.msra.mxu0 %v143
    %159 = vmatpush.bf16.msra.mxu0 %v142
    %160 = vmatpush.bf16.msra.mxu0 %v141
    %161 = vmatpush.bf16.msra.mxu0 %v140
    %162 = vmatpush.bf16.msra.mxu0 %v139
    %163 = vmatmul.bf16.gmra.mxu0 %v91
    %v164 = vpop.f32.mrf.mxu0
    %v165 = vadd.f32 0.0, %v164
    %v166 = vpop.f32.mrf.mxu0
    %v167 = vadd.f32 0.0, %v166
    %168 = vmatmul.bf16.gmra.mxu0 %v92
    %v169 = vpop.f32.mrf.mxu0
    %v170 = vadd.f32 0.0, %v169
    %v171 = vpop.f32.mrf.mxu0
    %v172 = vadd.f32 0.0, %v171
    %173 = vmatmul.bf16.gmra.mxu0 %v93
    %v174 = vpop.f32.mrf.mxu0
    %v175 = vadd.f32 0.0, %v174
    %v176 = vpop.f32.mrf.mxu0
    %v177 = vadd.f32 0.0, %v176
    %178 = vmatmul.bf16.gmra.mxu0 %v94
    %v179 = vpop.f32.mrf.mxu0
    %v180 = vadd.f32 0.0, %v179
    %v181 = vpop.f32.mrf.mxu0
    %v182 = vadd.f32 0.0, %v181
    %183 = vmatmul.bf16.gmra.mxu0 %v95
    %v184 = vpop.f32.mrf.mxu0
    %v185 = vadd.f32 0.0, %v184
    %v186 = vpop.f32.mrf.mxu0
    %v187 = vadd.f32 0.0, %v186
    %188 = vmatmul.bf16.gmra.mxu0 %v96
    %v189 = vpop.f32.mrf.mxu0
    %v190 = vadd.f32 0.0, %v189
    %v191 = vpop.f32.mrf.mxu0
    %v192 = vadd.f32 0.0, %v191
    %193 = vmatmul.bf16.gmra.mxu0 %v97
    %v194 = vpop.f32.mrf.mxu0
    %v195 = vadd.f32 0.0, %v194
    %v196 = vpop.f32.mrf.mxu0
    %v197 = vadd.f32 0.0, %v196
    %198 = vmatmul.bf16.gmra.mxu0 %v98
    %v199 = vpop.f32.mrf.mxu0
    %v200 = vadd.f32 0.0, %v199
    %v201 = vpop.f32.mrf.mxu0
    %v202 = vadd.f32 0.0, %v201
    %203 = vdwg.mxu0
    %v204 = vld [vmem:[%s0] sm:$0xf]
    %v205 = vld [vmem:[%s0 + $0x4] sm:$0xf]
    %v206 = vld [vmem:[%s0 + $0x8] sm:$0xf]
    %v207 = vld [vmem:[%s0 + $0xc] sm:$0xf]
    %v208 = vld [vmem:[%s0 + $0x10] sm:$0xf]
    %v209 = vld [vmem:[%s0 + $0x14] sm:$0xf]
    %v210 = vld [vmem:[%s0 + $0x18] sm:$0xf]
    %v211 = vld [vmem:[%s0 + $0x1c] sm:$0xf]
    %v212 = vld [vmem:[%s0 + $0x20] sm:$0xf]
    %v213 = vld [vmem:[%s0 + $0x24] sm:$0xf]
    %v214 = vld [vmem:[%s0 + $0x28] sm:$0xf]
    %v215 = vld [vmem:[%s0 + $0x2c] sm:$0xf]
    %v216 = vld [vmem:[%s0 + $0x30] sm:$0xf]
    %v217 = vld [vmem:[%s0 + $0x34] sm:$0xf]
    %v218 = vld [vmem:[%s0 + $0x38] sm:$0xf]
    %v219 = vld [vmem:[%s0 + $0x3c] sm:$0xf]
    %v220 = vunpack.c.l.bf16 %v204
    %v221 = vunpack.c.l.bf16 %v205
    %v222 = vunpack.c.l.bf16 %v206
    %v223 = vunpack.c.l.bf16 %v207
    %v224 = vunpack.c.l.bf16 %v208
    %v225 = vunpack.c.l.bf16 %v209
    %v226 = vunpack.c.l.bf16 %v210
    %v227 = vunpack.c.l.bf16 %v211
    %v228 = vunpack.c.l.bf16 %v212
    %v229 = vunpack.c.l.bf16 %v213
    %v230 = vunpack.c.l.bf16 %v214
    %v231 = vunpack.c.l.bf16 %v215
    %v232 = vunpack.c.l.bf16 %v216
    %v233 = vunpack.c.l.bf16 %v217
    %v234 = vunpack.c.l.bf16 %v218
    %v235 = vunpack.c.l.bf16 %v219
    %v236 = vld [vmem:[%s3] sm:$0x1]
    %v238 = vperm.slane %v236, 0
    %v240 = vmul.f32 %v220, %v238
    %v241 = vmul.f32 %v221, %v238
    %v242 = vmul.f32 %v222, %v238
    %v243 = vmul.f32 %v223, %v238
    %v244 = vmul.f32 %v224, %v238
    %v245 = vmul.f32 %v225, %v238
    %v246 = vmul.f32 %v226, %v238
    %v247 = vmul.f32 %v227, %v238
    %v248 = vmul.f32 %v228, %v238
    %v249 = vmul.f32 %v229, %v238
    %v250 = vmul.f32 %v230, %v238
    %v251 = vmul.f32 %v231, %v238
    %v252 = vmul.f32 %v232, %v238
    %v253 = vmul.f32 %v233, %v238
    %v254 = vmul.f32 %v234, %v238
    %v255 = vmul.f32 %v235, %v238
    %v256 = vld [vmem:[%s4] sm:$0x1]
    %v258 = vperm.slane %v256, 0
    %v260 = vadd.f32 %v240, %v258
    %v261 = vadd.f32 %v241, %v258
    %v262 = vadd.f32 %v242, %v258
    %v263 = vadd.f32 %v243, %v258
    %v264 = vadd.f32 %v244, %v258
    %v265 = vadd.f32 %v245, %v258
    %v266 = vadd.f32 %v246, %v258
    %v267 = vadd.f32 %v247, %v258
    %v268 = vadd.f32 %v248, %v258
    %v269 = vadd.f32 %v249, %v258
    %v270 = vadd.f32 %v250, %v258
    %v271 = vadd.f32 %v251, %v258
    %v272 = vadd.f32 %v252, %v258
    %v273 = vadd.f32 %v253, %v258
    %v274 = vadd.f32 %v254, %v258
    %v275 = vadd.f32 %v255, %v258
    %v276 = vld [vmem:[%s5] sm:$0x1]
    %v278 = vperm.slane %v276, 0
    %v280 = vmul.f32 %v165, %v278
    %v281 = vmul.f32 %v167, %v278
    %v282 = vmul.f32 %v170, %v278
    %v283 = vmul.f32 %v172, %v278
    %v284 = vmul.f32 %v175, %v278
    %v285 = vmul.f32 %v177, %v278
    %v286 = vmul.f32 %v180, %v278
    %v287 = vmul.f32 %v182, %v278
    %v288 = vmul.f32 %v185, %v278
    %v289 = vmul.f32 %v187, %v278
    %v290 = vmul.f32 %v190, %v278
    %v291 = vmul.f32 %v192, %v278
    %v292 = vmul.f32 %v195, %v278
    %v293 = vmul.f32 %v197, %v278
    %v294 = vmul.f32 %v200, %v278
    %v295 = vmul.f32 %v202, %v278
    %v296 = vadd.f32 %v260, %v280
    %v297 = vadd.f32 %v261, %v281
    %v298 = vadd.f32 %v262, %v282
    %v299 = vadd.f32 %v263, %v283
    %v300 = vadd.f32 %v264, %v284
    %v301 = vadd.f32 %v265, %v285
    %v302 = vadd.f32 %v266, %v286
    %v303 = vadd.f32 %v267, %v287
    %v304 = vadd.f32 %v268, %v288
    %v305 = vadd.f32 %v269, %v289
    %v306 = vadd.f32 %v270, %v290
    %v307 = vadd.f32 %v271, %v291
    %v308 = vadd.f32 %v272, %v292
    %v309 = vadd.f32 %v273, %v293
    %v310 = vadd.f32 %v274, %v294
    %v311 = vadd.f32 %v275, %v295
    %v312 = vld [vmem:[%s6] sm:$0x1]
    %v314 = vperm.slane %v312, 0
    %v316 = vadd.f32 %v296, %v314
    %v317 = vadd.f32 %v297, %v314
    %v318 = vadd.f32 %v298, %v314
    %v319 = vadd.f32 %v299, %v314
    %v320 = vadd.f32 %v300, %v314
    %v321 = vadd.f32 %v301, %v314
    %v322 = vadd.f32 %v302, %v314
    %v323 = vadd.f32 %v303, %v314
    %v324 = vadd.f32 %v304, %v314
    %v325 = vadd.f32 %v305, %v314
    %v326 = vadd.f32 %v306, %v314
    %v327 = vadd.f32 %v307, %v314
    %v328 = vadd.f32 %v308, %v314
    %v329 = vadd.f32 %v309, %v314
    %v330 = vadd.f32 %v310, %v314
    %v331 = vadd.f32 %v311, %v314
    %v332 = vmax.f32 %v316, 0.0
    %v333 = vmax.f32 %v317, 0.0
    %v334 = vmax.f32 %v318, 0.0
    %v335 = vmax.f32 %v319, 0.0
    %v336 = vmax.f32 %v320, 0.0
    %v337 = vmax.f32 %v321, 0.0
    %v338 = vmax.f32 %v322, 0.0
    %v339 = vmax.f32 %v323, 0.0
    %v340 = vmax.f32 %v324, 0.0
    %v341 = vmax.f32 %v325, 0.0
    %v342 = vmax.f32 %v326, 0.0
    %v343 = vmax.f32 %v327, 0.0
    %v344 = vmax.f32 %v328, 0.0
    %v345 = vmax.f32 %v329, 0.0
    %v346 = vmax.f32 %v330, 0.0
    %v347 = vmax.f32 %v331, 0.0
    %348 = vst [vmem:[#allocation2] sm:$0xff] %v332
    %349 = vst [vmem:[#allocation2 + $0x8] sm:$0xff] %v333
    %350 = vst [vmem:[#allocation2 + $0x10] sm:$0xff] %v334
    %351 = vst [vmem:[#allocation2 + $0x18] sm:$0xff] %v335
    %352 = vst [vmem:[#allocation2 + $0x20] sm:$0xff] %v336
    %353 = vst [vmem:[#allocation2 + $0x28] sm:$0xff] %v337
    %354 = vst [vmem:[#allocation2 + $0x30] sm:$0xff] %v338
    %355 = vst [vmem:[#allocation2 + $0x38] sm:$0xff] %v339
    %356 = vst [vmem:[#allocation2 + $0x40] sm:$0xff] %v340
    %357 = vst [vmem:[#allocation2 + $0x48] sm:$0xff] %v341
    %358 = vst [vmem:[#allocation2 + $0x50] sm:$0xff] %v342
    %359 = vst [vmem:[#allocation2 + $0x58] sm:$0xff] %v343
    %360 = vst [vmem:[#allocation2 + $0x60] sm:$0xff] %v344
    %361 = vst [vmem:[#allocation2 + $0x68] sm:$0xff] %v345
    %362 = vst [vmem:[#allocation2 + $0x70] sm:$0xff] %v346
    %363 = vst [vmem:[#allocation2 + $0x78] sm:$0xff] %v347
    // Predicated region
    $region30: #{bottleneck_forward.7} parent=1 // pred_check
      _
    $region31: #{bottleneck_forward.7} parent=1 // pred_check_branch
      %365 = sbr.rel (0) target = $region33
    $region32: #{bottleneck_forward.7} parent=1 // pred_region
      %367 = vsyncadd [#allocation3], 0
      %s368 = sshll.u32 [#allocation2], 4
      %s369 = int_to_ptr.vmem [resolvable:$true] %s368
      %s370 = sshll.u32 %s7, 4
      %s371 = int_to_ptr.hbm [resolvable:$true] %s370
      %376 = dma.vmem_to_hbm [thread:$0]  %s369, 2048, %s371, [#allocation3], 128, 128, 8
    $region33: #{bottleneck_forward.7} parent=1 // pred_fallthru
      _
    // Predicated region
    $region34: #{bottleneck_forward.7} parent=1 // pred_check
      _
    $region35: #{bottleneck_forward.7} parent=1 // pred_check_branch
      %378 = sbr.rel (0) target = $region37
    $region36: #{bottleneck_forward.7} parent=1 // pred_region
      %380 = dma.done [#allocation3], 2048
    $region37: #{bottleneck_forward.7} parent=1 // pred_fallthru
      _
    %381 = vsyncpa [#allocation3], 1

// kernel: bottleneck_forward.5
$region0: #{bottleneck_forward.5}
  #allocation0 [shape = 'u32[]', space=smem, size = 0x4, offset = 0x4, fixed_abs, tag = 'smem constant byte address 0x4 - core index']
  #allocation1 [shape = 'u32[72,128]{1,0:T(1,128)}', space=vmem, size = 0x9000, scoped, tag = 'internal scratch']
  #allocation2 [shape = 'bf16[10,10,128]{2,1,0:T(8,128)(2,1)}', space=vmem, size = 0xa000, scoped, tag = 'scratch operand']
  %s0 = inlined_call_operand.vmem [shape: bf16[2,8,8,128], index: 0, kind: input, shape index: {}]
  %s1 = inlined_call_operand.vmem [shape: f32[1,128], index: 1, kind: input, shape index: {}]
  %s2 = inlined_call_operand.vmem [shape: f32[1,128], index: 2, kind: input, shape index: {}]
  %s3 = inlined_call_operand.vmem [shape: bf16[9,128,128], index: 3, kind: input, shape index: {}]
  %s4 = inlined_call_operand.vmem [shape: bf16[2,8,8,128], index: 4, kind: output, shape index: {0}]
  %s5 = inlined_call_operand.vmem [shape: f32[2,1,128], index: 5, kind: output, shape index: {1}]
  %s6 = inlined_call_operand.vmem [shape: f32[2,1,128], index: 6, kind: output, shape index: {2}]
  %7 = xla_tuple %s4, %s5, %s6
  %s8 = sld [smem:[#allocation0]]
  $region65: #{bottleneck_forward.5} parent=0
    _
  %s10 = ssub.s32 1, %s8
  %s11 = scalar_select 0, %s10, %s8
  loop: start=0, step=1, limit=4
  $region2: #{bottleneck_forward.5} parent=0 // loop_pre_header
    _
  $region3: #{bottleneck_forward.5} parent=0 // loop_header
    %s13 = sphi 0, %s17
    %p14 = scmp.ge.s32.totalorder %s13, 4
    %s23 = sphi 0, %s25
    %s26 = sphi 0, %s23
    %s27 = sphi 0, %s26
    %s43 = sphi 0, %s27
    %s47 = sphi 0, %s47
    %s49 = sphi 0, %s47
    %s50 = sphi 0, %s49
    %s64 = sphi 0, %s50
    %s68 = sphi 0, %s68
    %s70 = sphi 0, %s68
    %s71 = sphi 0, %s70
    %s85 = sphi 0, %s71
    %s89 = sphi 0, %s89
    %s91 = sphi 0, %s89
    %s92 = sphi 0, %s91
    %s106 = sphi 0, %s92
    %s112 = sphi 0, %s114
    %s115 = sphi 0, %s112
    %s116 = sphi 0, %s115
    %s132 = sphi 0, %s116
    %s138 = sphi 0, %s140
    %s141 = sphi 0, %s138
    %s142 = sphi 0, %s141
    %s158 = sphi 0, %s142
    %s164 = sphi 0, %s166
    %s167 = sphi 0, %s164
    %s168 = sphi 0, %s167
    %s184 = sphi 0, %s168
  $region4: #{bottleneck_forward.5} parent=0 // loop_header_branch
    %16 = sbr.rel (%p14) target = $region8
  $region5: #{bottleneck_forward.5} parent=0 // loop_body
    %s18 = ssub.s32 %s13, 1
    %s19 = ssub.s32 %s13, 2
    %s20 = sadd.s32 %s13, 1
    %s21 = ssub.s32 %s13, %s20
    %p22 = scmp.eq.s32.totalorder %s21, 0
    %s24 = sadd.s32 %s23, 1
    %s25 = scalar_select %p22, %s23, %s24
    %p28 = pneg %p22
    %p29 = scmp.eq.s32.totalorder %s13, 1
    %p30 = por %p28, %p29
    %p31 = scmp.ne.s32.totalorder %s23, %s26
    %p32 = scmp.eq.s32.totalorder %s13, 0
    %p33 = por %p31, %p32
    %p34 = scmp.ne.s32.totalorder %s23, %s26
    %p35 = scmp.eq.s32.totalorder %s18, 1
    %p36 = por %p34, %p35
    %p37 = scmp.ne.s32.totalorder %s26, %s27
    %p38 = scmp.eq.s32.totalorder %s18, 0
    %p39 = por %p37, %p38
    %p40 = scmp.ne.s32.totalorder %s26, %s27
    %p41 = scmp.eq.s32.totalorder %s19, 1
    %p42 = por %p40, %p41
    %p44 = scmp.ne.s32.totalorder %s27, %s43
    %p45 = scmp.eq.s32.totalorder %s19, 0
    %p46 = por %p44, %p45
    %s48 = sadd.s32 %s47, 1
    %p51 = scmp.eq.s32.totalorder %s13, 1
    %p52 = scmp.ne.s32.totalorder %s47, %s49
    %p53 = scmp.eq.s32.totalorder %s13, 0
    %p54 = por %p52, %p53
    %p55 = scmp.ne.s32.totalorder %s47, %s49
    %p56 = scmp.eq.s32.totalorder %s18, 1
    %p57 = por %p55, %p56
    %p58 = scmp.ne.s32.totalorder %s49, %s50
    %p59 = scmp.eq.s32.totalorder %s18, 0
    %p60 = por %p58, %p59
    %p61 = scmp.ne.s32.totalorder %s49, %s50
    %p62 = scmp.eq.s32.totalorder %s19, 1
    %p63 = por %p61, %p62
    %p65 = scmp.ne.s32.totalorder %s50, %s64
    %p66 = scmp.eq.s32.totalorder %s19, 0
    %p67 = por %p65, %p66
    %s69 = sadd.s32 %s68, 1
    %p72 = scmp.eq.s32.totalorder %s13, 1
    %p73 = scmp.ne.s32.totalorder %s68, %s70
    %p74 = scmp.eq.s32.totalorder %s13, 0
    %p75 = por %p73, %p74
    %p76 = scmp.ne.s32.totalorder %s68, %s70
    %p77 = scmp.eq.s32.totalorder %s18, 1
    %p78 = por %p76, %p77
    %p79 = scmp.ne.s32.totalorder %s70, %s71
    %p80 = scmp.eq.s32.totalorder %s18, 0
    %p81 = por %p79, %p80
    %p82 = scmp.ne.s32.totalorder %s70, %s71
    %p83 = scmp.eq.s32.totalorder %s19, 1
    %p84 = por %p82, %p83
    %p86 = scmp.ne.s32.totalorder %s71, %s85
    %p87 = scmp.eq.s32.totalorder %s19, 0
    %p88 = por %p86, %p87
    %s90 = sadd.s32 %s89, 1
    %p93 = scmp.eq.s32.totalorder %s13, 1
    %p94 = scmp.ne.s32.totalorder %s89, %s91
    %p95 = scmp.eq.s32.totalorder %s13, 0
    %p96 = por %p94, %p95
    %p97 = scmp.ne.s32.totalorder %s89, %s91
    %p98 = scmp.eq.s32.totalorder %s18, 1
    %p99 = por %p97, %p98
    %p100 = scmp.ne.s32.totalorder %s91, %s92
    %p101 = scmp.eq.s32.totalorder %s18, 0
    %p102 = por %p100, %p101
    %p103 = scmp.ne.s32.totalorder %s91, %s92
    %p104 = scmp.eq.s32.totalorder %s19, 1
    %p105 = por %p103, %p104
    %p107 = scmp.ne.s32.totalorder %s92, %s106
    %p108 = scmp.eq.s32.totalorder %s19, 0
    %p109 = por %p107, %p108
    %s110 = ssub.s32 %s13, %s20
    %p111 = scmp.eq.s32.totalorder %s110, 0
    %s113 = sadd.s32 %s112, 1
    %s114 = scalar_select %p111, %s112, %s113
    %p117 = pneg %p111
    %p118 = scmp.eq.s32.totalorder %s13, 1
    %p119 = por %p117, %p118
    %p120 = scmp.ne.s32.totalorder %s112, %s115
    %p121 = scmp.eq.s32.totalorder %s13, 0
    %p122 = por %p120, %p121
    %p123 = scmp.ne.s32.totalorder %s112, %s115
    %p124 = scmp.eq.s32.totalorder %s18, 1
    %p125 = por %p123, %p124
    %p126 = scmp.ne.s32.totalorder %s115, %s116
    %p127 = scmp.eq.s32.totalorder %s18, 0
    %p128 = por %p126, %p127
    %p129 = scmp.ne.s32.totalorder %s115, %s116
    %p130 = scmp.eq.s32.totalorder %s19, 1
    %p131 = por %p129, %p130
    %p133 = scmp.ne.s32.totalorder %s116, %s132
    %p134 = scmp.eq.s32.totalorder %s19, 0
    %p135 = por %p133, %p134
    %s136 = ssub.s32 %s13, %s20
    %p137 = scmp.eq.s32.totalorder %s136, 0
    %s139 = sadd.s32 %s138, 1
    %s140 = scalar_select %p137, %s138, %s139
    %p143 = pneg %p137
    %p144 = scmp.eq.s32.totalorder %s13, 1
    %p145 = por %p143, %p144
    %p146 = scmp.ne.s32.totalorder %s138, %s141
    %p147 = scmp.eq.s32.totalorder %s13, 0
    %p148 = por %p146, %p147
    %p149 = scmp.ne.s32.totalorder %s138, %s141
    %p150 = scmp.eq.s32.totalorder %s18, 1
    %p151 = por %p149, %p150
    %p152 = scmp.ne.s32.totalorder %s141, %s142
    %p153 = scmp.eq.s32.totalorder %s18, 0
    %p154 = por %p152, %p153
    %p155 = scmp.ne.s32.totalorder %s141, %s142
    %p156 = scmp.eq.s32.totalorder %s19, 1
    %p157 = por %p155, %p156
    %p159 = scmp.ne.s32.totalorder %s142, %s158
    %p160 = scmp.eq.s32.totalorder %s19, 0
    %p161 = por %p159, %p160
    %s162 = ssub.s32 %s13, %s20
    %p163 = scmp.eq.s32.totalorder %s162, 0
    %s165 = sadd.s32 %s164, 1
    %s166 = scalar_select %p163, %s164, %s165
    %p169 = pneg %p163
    %p170 = scmp.eq.s32.totalorder %s13, 1
    %p171 = por %p169, %p170
    %p172 = scmp.ne.s32.totalorder %s164, %s167
    %p173 = scmp.eq.s32.totalorder %s13, 0
    %p174 = por %p172, %p173
    %p175 = scmp.ne.s32.totalorder %s164, %s167
    %p176 = scmp.eq.s32.totalorder %s18, 1
    %p177 = por %p175, %p176
    %p178 = scmp.ne.s32.totalorder %s167, %s168
    %p179 = scmp.eq.s32.totalorder %s18, 0
    %p180 = por %p178, %p179
    %p181 = scmp.ne.s32.totalorder %s167, %s168
    %p182 = scmp.eq.s32.totalorder %s19, 1
    %p183 = por %p181, %p182
    %p185 = scmp.ne.s32.totalorder %s168, %s184
    %p186 = scmp.eq.s32.totalorder %s19, 0
    %p187 = por %p185, %p186
    %p188 = scmp.le.s32.totalorder 1, %s13
    %p189 = scmp.lt.s32.totalorder %s13, 3
    %p190 = pnand %p188, %p189
    %p191 = pneg %p190
    // Predicated region
    $region9: #{bottleneck_forward.5} parent=5 // pred_check
      _
    $region10: #{bottleneck_forward.5} parent=5 // pred_check_branch
      %193 = sbr.rel (%p190) target = $region12
    $region11: #{bottleneck_forward.5} parent=5 // pred_region
      %s194 = ssub.s32 %s13, 1
      // Predicated region
      $region13: #{bottleneck_forward.5} parent=11 // pred_check
        %p195 = pneg %p60
      $region14: #{bottleneck_forward.5} parent=11 // pred_check_branch
        %197 = sbr.rel (%p195) target = $region16
      $region15: #{bottleneck_forward.5} parent=11 // pred_region
        _
      $region16: #{bottleneck_forward.5} parent=11 // pred_fallthru
        _
      // Predicated region
      $region17: #{bottleneck_forward.5} parent=11 // pred_check
        %p198 = pneg %p81
      $region18: #{bottleneck_forward.5} parent=11 // pred_check_branch
        %200 = sbr.rel (%p198) target = $region20
      $region19: #{bottleneck_forward.5} parent=11 // pred_region
        _
      $region20: #{bottleneck_forward.5} parent=11 // pred_fallthru
        _
      // Predicated region
      $region21: #{bottleneck_forward.5} parent=11 // pred_check
        %p201 = pneg %p102
      $region22: #{bottleneck_forward.5} parent=11 // pred_check_branch
        %203 = sbr.rel (%p201) target = $region24
      $region23: #{bottleneck_forward.5} parent=11 // pred_region
        _
      $region24: #{bottleneck_forward.5} parent=11 // pred_fallthru
        _
    $region12: #{bottleneck_forward.5} parent=5 // pred_fallthru
      _
    %p204 = scmp.lt.s32.totalorder %s13, 2
    // Predicated region
    $region25: #{bottleneck_forward.5} parent=5 // pred_check
      %p205 = pneg %p204
    $region26: #{bottleneck_forward.5} parent=5 // pred_check_branch
      %207 = sbr.rel (%p205) target = $region28
    $region27: #{bottleneck_forward.5} parent=5 // pred_region
      // Predicated region
      $region29: #{bottleneck_forward.5} parent=27 // pred_check
        %p208 = pneg %p33
      $region30: #{bottleneck_forward.5} parent=27 // pred_check_branch
        %210 = sbr.rel (%p208) target = $region32
      $region31: #{bottleneck_forward.5} parent=27 // pred_region
        %p211 = scmp.lt.s32.totalorder %s13, 1
        %s212 = scalar_select %p211, %s13, 1
        %s213 = smul.addr %s212, 8
        %s214 = smul.addr %s213, 4
        %s215 = scalar_lea.vmem %s0, %s214
      $region32: #{bottleneck_forward.5} parent=27 // pred_fallthru
        _
    $region28: #{bottleneck_forward.5} parent=5 // pred_fallthru
      _
    %p216 = scmp.le.s32.totalorder 1, %s13
    %p217 = scmp.lt.s32.totalorder %s13, 3
    %p218 = pnand %p216, %p217
    %p219 = pneg %p218
    // Predicated region
    $region33: #{bottleneck_forward.5} parent=5 // pred_check
      _
    $region34: #{bottleneck_forward.5} parent=5 // pred_check_branch
      %221 = sbr.rel (%p218) target = $region36
    $region35: #{bottleneck_forward.5} parent=5 // pred_region
      %s222 = ssub.s32 %s13, 1
      %p223 = scmp.lt.s32.totalorder %s18, 1
      %s224 = scalar_select %p223, %s18, 1
      %s225 = smul.addr %s224, 8
      %s226 = smul.addr %s225, 4
      %s227 = scalar_lea.vmem %s0, %s226
      %p228 = pneg %p39
      %p229 = pneg %p36
      %p230 = pneg %p60
      %p231 = pneg %p57
      %p232 = pneg %p81
      %p233 = pneg %p78
      %p234 = pneg %p102
      %p235 = pneg %p99
      %p236 = pneg %p128
      %p237 = pneg %p125
      %p238 = scmp.lt.s32.totalorder %s18, 1
      %s239 = scalar_select %p238, %s18, 1
      %s240 = smul.addr %s239, 8
      %s241 = smul.addr %s240, 4
      %s242 = scalar_lea.vmem %s4, %s241
      %p243 = pneg %p154
      %p244 = pneg %p151
      %p245 = scmp.lt.s32.totalorder %s18, 1
      %s246 = scalar_select %p245, %s18, 1
      %s247 = scalar_lea.vmem %s5, %s246
      %p248 = pneg %p180
      %p249 = pneg %p177
      %p250 = scmp.lt.s32.totalorder %s18, 1
      %s251 = scalar_select %p250, %s18, 1
      %s252 = scalar_lea.vmem %s6, %s251
      %p253 = scmp.lt.s32.totalorder %s18, 1
      %s254 = scalar_select %p253, %s18, 1
      %s255 = smul.addr %s254, 8
      %s256 = smul.addr %s255, 4
      %s257 = scalar_lea.vmem %s0, %s256
      %p258 = scmp.lt.s32.totalorder %s18, 1
      %s259 = scalar_select %p258, %s18, 1
      %s260 = smul.addr %s259, 8
      %s261 = smul.addr %s260, 4
      %s262 = scalar_lea.vmem %s4, %s261
      %p263 = scmp.lt.s32.totalorder %s18, 1
      %s264 = scalar_select %p263, %s18, 1
      %s265 = scalar_lea.vmem %s5, %s264
      %p266 = scmp.lt.s32.totalorder %s18, 1
      %s267 = scalar_select %p266, %s18, 1
      %s268 = scalar_lea.vmem %s6, %s267
      %v270 = vld [vmem:[%s1] sm:$0x1]
      %v271 = vld [vmem:[%s2] sm:$0x1]
      %v272 = vld [vmem:[%s257] sm:$0xf]
      %v273 = vld [vmem:[%s257 + $0x4] sm:$0xf]
      %v274 = vld [vmem:[%s257 + $0x8] sm:$0xf]
      %v275 = vld [vmem:[%s257 + $0xc] sm:$0xf]
      %v276 = vld [vmem:[%s257 + $0x10] sm:$0xf]
      %v277 = vld [vmem:[%s257 + $0x14] sm:$0xf]
      %v278 = vld [vmem:[%s257 + $0x18] sm:$0xf]
      %v279 = vld [vmem:[%s257 + $0x1c] sm:$0xf]
      %v280 = vunpack.c.l.bf16 %v272
      %v281 = vunpack.c.l.bf16 %v273
      %v282 = vunpack.c.l.bf16 %v274
      %v283 = vunpack.c.l.bf16 %v275
      %v284 = vunpack.c.l.bf16 %v276
      %v285 = vunpack.c.l.bf16 %v277
      %v286 = vunpack.c.l.bf16 %v278
      %v287 = vunpack.c.l.bf16 %v279
      %v289 = vperm.slane %v270, 0
      %v291 = vmul.f32 %v280, %v289
      %v292 = vmul.f32 %v281, %v289
      %v293 = vmul.f32 %v282, %v289
      %v294 = vmul.f32 %v283, %v289
      %v295 = vmul.f32 %v284, %v289
      %v296 = vmul.f32 %v285, %v289
      %v297 = vmul.f32 %v286, %v289
      %v298 = vmul.f32 %v287, %v289
      %v300 = vperm.slane %v271, 0
      %v302 = vadd.f32 %v291, %v300
      %v303 = vadd.f32 %v292, %v300
      %v304 = vadd.f32 %v293, %v300
      %v305 = vadd.f32 %v294, %v300
      %v306 = vadd.f32 %v295, %v300
      %v307 = vadd.f32 %v296, %v300
      %v308 = vadd.f32 %v297, %v300
      %v309 = vadd.f32 %v298, %v300
      %v310 = vmax.f32 %v302, 0.0
      %v311 = vmax.f32 %v303, 0.0
      %v312 = vmax.f32 %v304, 0.0
      %v313 = vmax.f32 %v305, 0.0
      %v314 = vmax.f32 %v306, 0.0
      %v315 = vmax.f32 %v307, 0.0
      %v316 = vmax.f32 %v308, 0.0
      %v317 = vmax.f32 %v309, 0.0
      %318 = vst [vmem:[#allocation2] sm:$0xf] 0
      %319 = vst [vmem:[#allocation2 + $0x4] sm:$0x1] 0
      %320 = vst [vmem:[#allocation2 + $0x8] sm:$0xf] 0
      %321 = vst [vmem:[#allocation2 + $0xc] sm:$0x1] 0
      %322 = vst [vmem:[#allocation2 + $0x10] sm:$0xf] 0
      %323 = vst [vmem:[#allocation2 + $0x14] sm:$0x1] 0
      %324 = vst [vmem:[#allocation2 + $0x18] sm:$0xf] 0
      %325 = vst [vmem:[#allocation2 + $0x1c] sm:$0x1] 0
      %326 = vst [vmem:[#allocation2 + $0x20] sm:$0xf] 0
      %327 = vst [vmem:[#allocation2 + $0x24] sm:$0x1] 0
      %328 = vst [vmem:[#allocation2 + $0x28] sm:$0xf] 0
      %329 = vst [vmem:[#allocation2 + $0x2c] sm:$0x1] 0
      %330 = vst [vmem:[#allocation2 + $0x30] sm:$0xf] 0
      %331 = vst [vmem:[#allocation2 + $0x34] sm:$0x1] 0
      %332 = vst [vmem:[#allocation2 + $0x38] sm:$0xf] 0
      %333 = vst [vmem:[#allocation2 + $0x3c] sm:$0x1] 0
      %334 = vst [vmem:[#allocation2 + $0x40] sm:$0xf] 0
      %335 = vst [vmem:[#allocation2 + $0x44] sm:$0x1] 0
      %336 = vst [vmem:[#allocation2 + $0x48] sm:$0xf] 0
      %337 = vst [vmem:[#allocation2 + $0x4c] sm:$0x1] 0
      %v338 = vpack.c.bf16 %v310, %v310
      %v339 = vpack.c.bf16 %v311, %v311
      %v340 = vpack.c.bf16 %v312, %v312
      %v341 = vpack.c.bf16 %v313, %v313
      %v342 = vpack.c.bf16 %v314, %v314
      %v343 = vpack.c.bf16 %v315, %v315
      %v344 = vpack.c.bf16 %v316, %v316
      %v345 = vpack.c.bf16 %v317, %v317
      %v347 = vshrl.u32 %v338, 16
      %v349 = vrot.slane %v347, 7
      %v350 = vshll.u32 %v338, 16
      %v352 = vor.u32 %v349, %v350
      %v353 = vrot.slane %v349, 4
      %v355 = vshrl.u32 %v339, 16
      %v357 = vrot.slane %v355, 7
      %v358 = vshll.u32 %v339, 16
      %v360 = vor.u32 %v357, %v358
      %v361 = vrot.slane %v357, 4
      %v363 = vshrl.u32 %v340, 16
      %v365 = vrot.slane %v363, 7
      %v366 = vshll.u32 %v340, 16
      %v368 = vor.u32 %v365, %v366
      %v369 = vrot.slane %v365, 4
      %v371 = vshrl.u32 %v341, 16
      %v373 = vrot.slane %v371, 7
      %v374 = vshll.u32 %v341, 16
      %v376 = vor.u32 %v373, %v374
      %v377 = vrot.slane %v373, 4
      %v379 = vshrl.u32 %v342, 16
      %v381 = vrot.slane %v379, 7
      %v382 = vshll.u32 %v342, 16
      %v384 = vor.u32 %v381, %v382
      %v385 = vrot.slane %v381, 4
      %v387 = vshrl.u32 %v343, 16
      %v389 = vrot.slane %v387, 7
      %v390 = vshll.u32 %v343, 16
      %v392 = vor.u32 %v389, %v390
      %v393 = vrot.slane %v389, 4
      %v395 = vshrl.u32 %v344, 16
      %v397 = vrot.slane %v395, 7
      %v398 = vshll.u32 %v344, 16
      %v400 = vor.u32 %v397, %v398
      %v401 = vrot.slane %v397, 4
      %v403 = vshrl.u32 %v345, 16
      %v405 = vrot.slane %v403, 7
      %v406 = vshll.u32 %v345, 16
      %v408 = vor.u32 %v405, %v406
      %v409 = vrot.slane %v405, 4
      %s426 = scalar_lea.vmem [#allocation2], 8
      %vm427 = vcmask 1043456
      %vm428 = vsmask.f32 7938
      %vm429 = vmand %vm427, %vm428
      %v430 = vld [vmem:[%s426] sm:$0xf]
      %v431 = vsel %vm429, %v352, %v430
      %432 = vst [vmem:[%s426] sm:$0xf] %v431
      %vm433 = vcmask 1040384
      %vm434 = vsmask.f32 256
      %vm435 = vmand %vm433, %vm434
      %v436 = vld [vmem:[%s426 + $0x4] sm:$0x1]
      %v437 = vsel %vm435, %v353, %v436
      %438 = vst [vmem:[%s426 + $0x4] sm:$0x1] %v437
      %v439 = vld [vmem:[%s426 + $0x8] sm:$0xf]
      %v440 = vsel %vm429, %v360, %v439
      %441 = vst [vmem:[%s426 + $0x8] sm:$0xf] %v440
      %v442 = vld [vmem:[%s426 + $0xc] sm:$0x1]
      %v443 = vsel %vm435, %v361, %v442
      %444 = vst [vmem:[%s426 + $0xc] sm:$0x1] %v443
      %v445 = vld [vmem:[%s426 + $0x10] sm:$0xf]
      %v446 = vsel %vm429, %v368, %v445
      %447 = vst [vmem:[%s426 + $0x10] sm:$0xf] %v446
      %v448 = vld [vmem:[%s426 + $0x14] sm:$0x1]
      %v449 = vsel %vm435, %v369, %v448
      %450 = vst [vmem:[%s426 + $0x14] sm:$0x1] %v449
      %v451 = vld [vmem:[%s426 + $0x18] sm:$0xf]
      %v452 = vsel %vm429, %v376, %v451
      %453 = vst [vmem:[%s426 + $0x18] sm:$0xf] %v452
      %v454 = vld [vmem:[%s426 + $0x1c] sm:$0x1]
      %v455 = vsel %vm435, %v377, %v454
      %456 = vst [vmem:[%s426 + $0x1c] sm:$0x1] %v455
      %v457 = vld [vmem:[%s426 + $0x20] sm:$0xf]
      %v458 = vsel %vm429, %v384, %v457
      %459 = vst [vmem:[%s426 + $0x20] sm:$0xf] %v458
      %v460 = vld [vmem:[%s426 + $0x24] sm:$0x1]
      %v461 = vsel %vm435, %v385, %v460
      %462 = vst [vmem:[%s426 + $0x24] sm:$0x1] %v461
      %v463 = vld [vmem:[%s426 + $0x28] sm:$0xf]
      %v464 = vsel %vm429, %v392, %v463
      %465 = vst [vmem:[%s426 + $0x28] sm:$0xf] %v464
      %v466 = vld [vmem:[%s426 + $0x2c] sm:$0x1]
      %v467 = vsel %vm435, %v393, %v466
      %468 = vst [vmem:[%s426 + $0x2c] sm:$0x1] %v467
      %v469 = vld [vmem:[%s426 + $0x30] sm:$0xf]
      %v470 = vsel %vm429, %v400, %v469
      %471 = vst [vmem:[%s426 + $0x30] sm:$0xf] %v470
      %v472 = vld [vmem:[%s426 + $0x34] sm:$0x1]
      %v473 = vsel %vm435, %v401, %v472
      %474 = vst [vmem:[%s426 + $0x34] sm:$0x1] %v473
      %v475 = vld [vmem:[%s426 + $0x38] sm:$0xf]
      %v476 = vsel %vm429, %v408, %v475
      %477 = vst [vmem:[%s426 + $0x38] sm:$0xf] %v476
      %v478 = vld [vmem:[%s426 + $0x3c] sm:$0x1]
      %v479 = vsel %vm435, %v409, %v478
      %480 = vst [vmem:[%s426 + $0x3c] sm:$0x1] %v479
      %v481 = vld [vmem:[#allocation2] sm:$0xf]
      %v482 = vld [vmem:[#allocation2 + $0x8] sm:$0xf]
      %v483 = vld [vmem:[#allocation2 + $0x10] sm:$0xf]
      %v484 = vld [vmem:[#allocation2 + $0x18] sm:$0xf]
      %v485 = vld [vmem:[#allocation2 + $0x20] sm:$0xf]
      %v486 = vld [vmem:[#allocation2 + $0x28] sm:$0xf]
      %v487 = vld [vmem:[#allocation2 + $0x30] sm:$0xf]
      %v488 = vld [vmem:[#allocation2 + $0x38] sm:$0xf]
      %v489 = vld [vmem:[%s3] sm:$0xf]
      %v490 = vld [vmem:[%s3 + $0x4] sm:$0xf]
      %v491 = vld [vmem:[%s3 + $0x8] sm:$0xf]
      %v492 = vld [vmem:[%s3 + $0xc] sm:$0xf]
      %v493 = vld [vmem:[%s3 + $0x10] sm:$0xf]
      %v494 = vld [vmem:[%s3 + $0x14] sm:$0xf]
      %v495 = vld [vmem:[%s3 + $0x18] sm:$0xf]
      %v496 = vld [vmem:[%s3 + $0x1c] sm:$0xf]
      %v497 = vld [vmem:[%s3 + $0x20] sm:$0xf]
      %v498 = vld [vmem:[%s3 + $0x24] sm:$0xf]
      %v499 = vld [vmem:[%s3 + $0x28] sm:$0xf]
      %v500 = vld [vmem:[%s3 + $0x2c] sm:$0xf]
      %v501 = vld [vmem:[%s3 + $0x30] sm:$0xf]
      %v502 = vld [vmem:[%s3 + $0x34] sm:$0xf]
      %v503 = vld [vmem:[%s3 + $0x38] sm:$0xf]
      %v504 = vld [vmem:[%s3 + $0x3c] sm:$0xf]
      %v505 = vld [vmem:[#allocation2 + $0x4] sm:$0x1]
      %v506 = vld [vmem:[#allocation2 + $0xc] sm:$0x1]
      %v507 = vld [vmem:[#allocation2 + $0x14] sm:$0x1]
      %v508 = vld [vmem:[#allocation2 + $0x1c] sm:$0x1]
      %v509 = vld [vmem:[#allocation2 + $0x24] sm:$0x1]
      %v510 = vld [vmem:[#allocation2 + $0x2c] sm:$0x1]
      %v511 = vld [vmem:[#allocation2 + $0x34] sm:$0x1]
      %v512 = vld [vmem:[#allocation2 + $0x3c] sm:$0x1]
      %vm513 = vsmask.f32 3328
      %vm514 = vsmask.f32 7440
      %vm515 = vmor %vm513, %vm514
      %v517 = vshrl.u32 %v481, 16
      %v519 = vrot.slane %v517, 4
      %v520 = vshll.u32 %v481, 16
      %v522 = vrot.slane %v520, 5
      %v523 = vor.u32 %v519, %v522
      %v524 = vrot.slane %v523, 4
      %v526 = vshll.u32 %v505, 16
      %v528 = vrot.slane %v526, 5
      %v529 = vsel %vm515, %v524, %v528
      %v531 = vshrl.u32 %v482, 16
      %v533 = vrot.slane %v531, 4
      %v534 = vshll.u32 %v482, 16
      %v536 = vrot.slane %v534, 5
      %v537 = vor.u32 %v533, %v536
      %v538 = vrot.slane %v537, 4
      %v540 = vshll.u32 %v506, 16
      %v542 = vrot.slane %v540, 5
      %v543 = vsel %vm515, %v538, %v542
      %v545 = vshrl.u32 %v483, 16
      %v547 = vrot.slane %v545, 4
      %v548 = vshll.u32 %v483, 16
      %v550 = vrot.slane %v548, 5
      %v551 = vor.u32 %v547, %v550
      %v552 = vrot.slane %v551, 4
      %v554 = vshll.u32 %v507, 16
      %v556 = vrot.slane %v554, 5
      %v557 = vsel %vm515, %v552, %v556
      %v559 = vshrl.u32 %v484, 16
      %v561 = vrot.slane %v559, 4
      %v562 = vshll.u32 %v484, 16
      %v564 = vrot.slane %v562, 5
      %v565 = vor.u32 %v561, %v564
      %v566 = vrot.slane %v565, 4
      %v568 = vshll.u32 %v508, 16
      %v570 = vrot.slane %v568, 5
      %v571 = vsel %vm515, %v566, %v570
      %v573 = vshrl.u32 %v485, 16
      %v575 = vrot.slane %v573, 4
      %v576 = vshll.u32 %v485, 16
      %v578 = vrot.slane %v576, 5
      %v579 = vor.u32 %v575, %v578
      %v580 = vrot.slane %v579, 4
      %v582 = vshll.u32 %v509, 16
      %v584 = vrot.slane %v582, 5
      %v585 = vsel %vm515, %v580, %v584
      %v587 = vshrl.u32 %v486, 16
      %v589 = vrot.slane %v587, 4
      %v590 = vshll.u32 %v486, 16
      %v592 = vrot.slane %v590, 5
      %v593 = vor.u32 %v589, %v592
      %v594 = vrot.slane %v593, 4
      %v596 = vshll.u32 %v510, 16
      %v598 = vrot.slane %v596, 5
      %v599 = vsel %vm515, %v594, %v598
      %v601 = vshrl.u32 %v487, 16
      %v603 = vrot.slane %v601, 4
      %v604 = vshll.u32 %v487, 16
      %v606 = vrot.slane %v604, 5
      %v607 = vor.u32 %v603, %v606
      %v608 = vrot.slane %v607, 4
      %v610 = vshll.u32 %v511, 16
      %v612 = vrot.slane %v610, 5
      %v613 = vsel %vm515, %v608, %v612
      %v615 = vshrl.u32 %v488, 16
      %v617 = vrot.slane %v615, 4
      %v618 = vshll.u32 %v488, 16
      %v620 = vrot.slane %v618, 5
      %v621 = vor.u32 %v617, %v620
      %v622 = vrot.slane %v621, 4
      %v624 = vshll.u32 %v512, 16
      %v626 = vrot.slane %v624, 5
      %v627 = vsel %vm515, %v622, %v626
      %s628 = scalar_lea.vmem %s3, 64
      %v629 = vld [vmem:[%s628] sm:$0xf]
      %v630 = vld [vmem:[%s628 + $0x4] sm:$0xf]
      %v631 = vld [vmem:[%s628 + $0x8] sm:$0xf]
      %v632 = vld [vmem:[%s628 + $0xc] sm:$0xf]
      %v633 = vld [vmem:[%s628 + $0x10] sm:$0xf]
      %v634 = vld [vmem:[%s628 + $0x14] sm:$0xf]
      %v635 = vld [vmem:[%s628 + $0x18] sm:$0xf]
      %v636 = vld [vmem:[%s628 + $0x1c] sm:$0xf]
      %v637 = vld [vmem:[%s628 + $0x20] sm:$0xf]
      %v638 = vld [vmem:[%s628 + $0x24] sm:$0xf]
      %v639 = vld [vmem:[%s628 + $0x28] sm:$0xf]
      %v640 = vld [vmem:[%s628 + $0x2c] sm:$0xf]
      %v641 = vld [vmem:[%s628 + $0x30] sm:$0xf]
      %v642 = vld [vmem:[%s628 + $0x34] sm:$0xf]
      %v643 = vld [vmem:[%s628 + $0x38] sm:$0xf]
      %v644 = vld [vmem:[%s628 + $0x3c] sm:$0xf]
      %v645 = vunpack.c.l.b16 %v529
      %v646 = vunpack.c.l.b16 %v543
      %v647 = vunpack.c.l.b16 %v557
      %v648 = vunpack.c.l.b16 %v571
      %v649 = vunpack.c.l.b16 %v585
      %v650 = vunpack.c.l.b16 %v599
      %v651 = vunpack.c.l.b16 %v613
      %v652 = vunpack.c.l.b16 %v627
      %v653 = vpack.c.b16 %v646, %v645
      %v654 = vpack.c.b16 %v648, %v647
      %v655 = vpack.c.b16 %v650, %v649
      %v656 = vpack.c.b16 %v652, %v651
      %v677 = vunpack.c.l.b16 %v629
      %v678 = vunpack.c.l.b16 %v630
      %v679 = vunpack.c.l.b16 %v631
      %v680 = vunpack.c.l.b16 %v632
      %v681 = vunpack.c.l.b16 %v633
      %v682 = vunpack.c.l.b16 %v634
      %v683 = vunpack.c.l.b16 %v635
      %v684 = vunpack.c.l.b16 %v636
      %v685 = vunpack.c.l.b16 %v637
      %v686 = vunpack.c.l.b16 %v638
      %v687 = vunpack.c.l.b16 %v639
      %v688 = vunpack.c.l.b16 %v640
      %v689 = vunpack.c.l.b16 %v641
      %v690 = vunpack.c.l.b16 %v642
      %v691 = vunpack.c.l.b16 %v643
      %v692 = vunpack.c.l.b16 %v644
      %v693 = vpack.c.b16 %v678, %v677
      %v694 = vpack.c.b16 %v680, %v679
      %v695 = vpack.c.b16 %v682, %v681
      %v696 = vpack.c.b16 %v684, %v683
      %v697 = vpack.c.b16 %v686, %v685
      %v698 = vpack.c.b16 %v688, %v687
      %v699 = vpack.c.b16 %v690, %v689
      %v700 = vpack.c.b16 %v692, %v691
      %709 = vmatpush.bf16.msra.mxu0 %v700
      %710 = vmatpush.bf16.msra.mxu0 %v699
      %711 = vmatpush.bf16.msra.mxu0 %v698
      %712 = vmatpush.bf16.msra.mxu0 %v697
      %713 = vmatpush.bf16.msra.mxu0 %v696
      %714 = vmatpush.bf16.msra.mxu0 %v695
      %715 = vmatpush.bf16.msra.mxu0 %v694
      %716 = vmatpush.bf16.msra.mxu0 %v693
      %717 = vmatmul.bf16.gmra.mxu0 %v653
      %v718 = vpop.f32.mrf.mxu0
      %v719 = vadd.f32 0.0, %v718
      %v720 = vpop.f32.mrf.mxu0
      %v721 = vadd.f32 0.0, %v720
      %722 = vmatmul.bf16.gmra.mxu0 %v654
      %v723 = vpop.f32.mrf.mxu0
      %v724 = vadd.f32 0.0, %v723
      %v725 = vpop.f32.mrf.mxu0
      %v726 = vadd.f32 0.0, %v725
      %727 = vmatmul.bf16.gmra.mxu0 %v655
      %v728 = vpop.f32.mrf.mxu0
      %v729 = vadd.f32 0.0, %v728
      %v730 = vpop.f32.mrf.mxu0
      %v731 = vadd.f32 0.0, %v730
      %732 = vmatmul.bf16.gmra.mxu0 %v656
      %v733 = vpop.f32.mrf.mxu0
      %v734 = vadd.f32 0.0, %v733
      %v735 = vpop.f32.mrf.mxu0
      %v736 = vadd.f32 0.0, %v735
      %737 = vdwg.mxu0
      %v746 = vunpack.c.l.b16 %v481
      %v747 = vunpack.c.l.b16 %v482
      %v748 = vunpack.c.l.b16 %v483
      %v749 = vunpack.c.l.b16 %v484
      %v750 = vunpack.c.l.b16 %v485
      %v751 = vunpack.c.l.b16 %v486
      %v752 = vunpack.c.l.b16 %v487
      %v753 = vunpack.c.l.b16 %v488
      %v754 = vpack.c.b16 %v747, %v746
      %v755 = vpack.c.b16 %v749, %v748
      %v756 = vpack.c.b16 %v751, %v750
      %v757 = vpack.c.b16 %v753, %v752
      %v778 = vunpack.c.l.b16 %v489
      %v779 = vunpack.c.l.b16 %v490
      %v780 = vunpack.c.l.b16 %v491
      %v781 = vunpack.c.l.b16 %v492
      %v782 = vunpack.c.l.b16 %v493
      %v783 = vunpack.c.l.b16 %v494
      %v784 = vunpack.c.l.b16 %v495
      %v785 = vunpack.c.l.b16 %v496
      %v786 = vunpack.c.l.b16 %v497
      %v787 = vunpack.c.l.b16 %v498
      %v788 = vunpack.c.l.b16 %v499
      %v789 = vunpack.c.l.b16 %v500
      %v790 = vunpack.c.l.b16 %v501
      %v791 = vunpack.c.l.b16 %v502
      %v792 = vunpack.c.l.b16 %v503
      %v793 = vunpack.c.l.b16 %v504
      %v794 = vpack.c.b16 %v779, %v778
      %v795 = vpack.c.b16 %v781, %v780
      %v796 = vpack.c.b16 %v783, %v782
      %v797 = vpack.c.b16 %v785, %v784
      %v798 = vpack.c.b16 %v787, %v786
      %v799 = vpack.c.b16 %v789, %v788
      %v800 = vpack.c.b16 %v791, %v790
      %v801 = vpack.c.b16 %v793, %v792
      %810 = vmatpush.bf16.msra.mxu0 %v801
      %811 = vmatpush.bf16.msra.mxu0 %v800
      %812 = vmatpush.bf16.msra.mxu0 %v799
      %813 = vmatpush.bf16.msra.mxu0 %v798
      %814 = vmatpush.bf16.msra.mxu0 %v797
      %815 = vmatpush.bf16.msra.mxu0 %v796
      %816 = vmatpush.bf16.msra.mxu0 %v795
      %817 = vmatpush.bf16.msra.mxu0 %v794
      %818 = vmatmul.bf16.gmra.mxu0 %v754
      %v819 = vpop.f32.mrf.mxu0
      %v820 = vadd.f32 %v719, %v819
      %v821 = vpop.f32.mrf.mxu0
      %v822 = vadd.f32 %v721, %v821
      %823 = vmatmul.bf16.gmra.mxu0 %v755
      %v824 = vpop.f32.mrf.mxu0
      %v825 = vadd.f32 %v724, %v824
      %v826 = vpop.f32.mrf.mxu0
      %v827 = vadd.f32 %v726, %v826
      %828 = vmatmul.bf16.gmra.mxu0 %v756
      %v829 = vpop.f32.mrf.mxu0
      %v830 = vadd.f32 %v729, %v829
      %v831 = vpop.f32.mrf.mxu0
      %v832 = vadd.f32 %v731, %v831
      %833 = vmatmul.bf16.gmra.mxu0 %v757
      %v834 = vpop.f32.mrf.mxu0
      %v835 = vadd.f32 %v734, %v834
      %v836 = vpop.f32.mrf.mxu0
      %v837 = vadd.f32 %v736, %v836
      %838 = vdwg.mxu0
      %v839 = vld [vmem:[#allocation2] sm:$0xe]
      %v840 = vld [vmem:[#allocation2 + $0x8] sm:$0xe]
      %v841 = vld [vmem:[#allocation2 + $0x10] sm:$0xe]
      %v842 = vld [vmem:[#allocation2 + $0x18] sm:$0xe]
      %v843 = vld [vmem:[#allocation2 + $0x20] sm:$0xe]
      %v844 = vld [vmem:[#allocation2 + $0x28] sm:$0xe]
      %v845 = vld [vmem:[#allocation2 + $0x30] sm:$0xe]
      %v846 = vld [vmem:[#allocation2 + $0x38] sm:$0xe]
      %vm863 = vcmask 1042432
      %vm864 = vcmask 1046532
      %vm865 = vmor %vm863, %vm864
      %v866 = vrot.slane %v839, 5
      %v867 = vrot.slane %v866, 4
      %v868 = vrot.slane %v505, 5
      %v869 = vsel %vm865, %v867, %v868
      %v870 = vrot.slane %v840, 5
      %v871 = vrot.slane %v870, 4
      %v872 = vrot.slane %v506, 5
      %v873 = vsel %vm865, %v871, %v872
      %v874 = vrot.slane %v841, 5
      %v875 = vrot.slane %v874, 4
      %v876 = vrot.slane %v507, 5
      %v877 = vsel %vm865, %v875, %v876
      %v878 = vrot.slane %v842, 5
      %v879 = vrot.slane %v878, 4
      %v880 = vrot.slane %v508, 5
      %v881 = vsel %vm865, %v879, %v880
      %v882 = vrot.slane %v843, 5
      %v883 = vrot.slane %v882, 4
      %v884 = vrot.slane %v509, 5
      %v885 = vsel %vm865, %v883, %v884
      %v886 = vrot.slane %v844, 5
      %v887 = vrot.slane %v886, 4
      %v888 = vrot.slane %v510, 5
      %v889 = vsel %vm865, %v887, %v888
      %v890 = vrot.slane %v845, 5
      %v891 = vrot.slane %v890, 4
      %v892 = vrot.slane %v511, 5
      %v893 = vsel %vm865, %v891, %v892
      %v894 = vrot.slane %v846, 5
      %v895 = vrot.slane %v894, 4
      %v896 = vrot.slane %v512, 5
      %v897 = vsel %vm865, %v895, %v896
      %s898 = scalar_lea.vmem %s3, 128
      %v899 = vld [vmem:[%s898] sm:$0xf]
      %v900 = vld [vmem:[%s898 + $0x4] sm:$0xf]
      %v901 = vld [vmem:[%s898 + $0x8] sm:$0xf]
      %v902 = vld [vmem:[%s898 + $0xc] sm:$0xf]
      %v903 = vld [vmem:[%s898 + $0x10] sm:$0xf]
      %v904 = vld [vmem:[%s898 + $0x14] sm:$0xf]
      %v905 = vld [vmem:[%s898 + $0x18] sm:$0xf]
      %v906 = vld [vmem:[%s898 + $0x1c] sm:$0xf]
      %v907 = vld [vmem:[%s898 + $0x20] sm:$0xf]
      %v908 = vld [vmem:[%s898 + $0x24] sm:$0xf]
      %v909 = vld [vmem:[%s898 + $0x28] sm:$0xf]
      %v910 = vld [vmem:[%s898 + $0x2c] sm:$0xf]
      %v911 = vld [vmem:[%s898 + $0x30] sm:$0xf]
      %v912 = vld [vmem:[%s898 + $0x34] sm:$0xf]
      %v913 = vld [vmem:[%s898 + $0x38] sm:$0xf]
      %v914 = vld [vmem:[%s898 + $0x3c] sm:$0xf]
      %v915 = vunpack.c.l.b16 %v869
      %v916 = vunpack.c.l.b16 %v873
      %v917 = vunpack.c.l.b16 %v877
      %v918 = vunpack.c.l.b16 %v881
      %v919 = vunpack.c.l.b16 %v885
      %v920 = vunpack.c.l.b16 %v889
      %v921 = vunpack.c.l.b16 %v893
      %v922 = vunpack.c.l.b16 %v897
      %v923 = vpack.c.b16 %v916, %v915
      %v924 = vpack.c.b16 %v918, %v917
      %v925 = vpack.c.b16 %v920, %v919
      %v926 = vpack.c.b16 %v922, %v921
      %v947 = vunpack.c.l.b16 %v899
      %v948 = vunpack.c.l.b16 %v900
      %v949 = vunpack.c.l.b16 %v901
      %v950 = vunpack.c.l.b16 %v902
      %v951 = vunpack.c.l.b16 %v903
      %v952 = vunpack.c.l.b16 %v904
      %v953 = vunpack.c.l.b16 %v905
      %v954 = vunpack.c.l.b16 %v906
      %v955 = vunpack.c.l.b16 %v907
      %v956 = vunpack.c.l.b16 %v908
      %v957 = vunpack.c.l.b16 %v909
      %v958 = vunpack.c.l.b16 %v910
      %v959 = vunpack.c.l.b16 %v911
      %v960 = vunpack.c.l.b16 %v912
      %v961 = vunpack.c.l.b16 %v913
      %v962 = vunpack.c.l.b16 %v914
      %v963 = vpack.c.b16 %v948, %v947
      %v964 = vpack.c.b16 %v950, %v949
      %v965 = vpack.c.b16 %v952, %v951
      %v966 = vpack.c.b16 %v954, %v953
      %v967 = vpack.c.b16 %v956, %v955
      %v968 = vpack.c.b16 %v958, %v957
      %v969 = vpack.c.b16 %v960, %v959
      %v970 = vpack.c.b16 %v962, %v961
      %979 = vmatpush.bf16.msra.mxu0 %v970
      %980 = vmatpush.bf16.msra.mxu0 %v969
      %981 = vmatpush.bf16.msra.mxu0 %v968
      %982 = vmatpush.bf16.msra.mxu0 %v967
      %983 = vmatpush.bf16.msra.mxu0 %v966
      %984 = vmatpush.bf16.msra.mxu0 %v965
      %985 = vmatpush.bf16.msra.mxu0 %v964
      %986 = vmatpush.bf16.msra.mxu0 %v963
      %987 = vmatmul.bf16.gmra.mxu0 %v923
      %v988 = vpop.f32.mrf.mxu0
      %v989 = vadd.f32 0.0, %v988
      %v990 = vpop.f32.mrf.mxu0
      %v991 = vadd.f32 0.0, %v990
      %992 = vmatmul.bf16.gmra.mxu0 %v924
      %v993 = vpop.f32.mrf.mxu0
      %v994 = vadd.f32 0.0, %v993
      %v995 = vpop.f32.mrf.mxu0
      %v996 = vadd.f32 0.0, %v995
      %997 = vmatmul.bf16.gmra.mxu0 %v925
      %v998 = vpop.f32.mrf.mxu0
      %v999 = vadd.f32 0.0, %v998
      %v1000 = vpop.f32.mrf.mxu0
      %v1001 = vadd.f32 0.0, %v1000
      %1002 = vmatmul.bf16.gmra.mxu0 %v926
      %v1003 = vpop.f32.mrf.mxu0
      %v1004 = vadd.f32 0.0, %v1003
      %v1005 = vpop.f32.mrf.mxu0
      %v1006 = vadd.f32 0.0, %v1005
      %1007 = vdwg.mxu0
      %v1008 = vadd.f32 %v820, %v989
      %v1009 = vadd.f32 %v822, %v991
      %v1010 = vadd.f32 %v825, %v994
      %v1011 = vadd.f32 %v827, %v996
      %v1012 = vadd.f32 %v830, %v999
      %v1013 = vadd.f32 %v832, %v1001
      %v1014 = vadd.f32 %v835, %v1004
      %v1015 = vadd.f32 %v837, %v1006
      %v1016 = vld [vmem:[%s426] sm:$0xf]
      %v1017 = vld [vmem:[%s426 + $0x8] sm:$0xf]
      %v1018 = vld [vmem:[%s426 + $0x10] sm:$0xf]
      %v1019 = vld [vmem:[%s426 + $0x18] sm:$0xf]
      %v1020 = vld [vmem:[%s426 + $0x20] sm:$0xf]
      %v1021 = vld [vmem:[%s426 + $0x28] sm:$0xf]
      %v1022 = vld [vmem:[%s426 + $0x30] sm:$0xf]
      %v1023 = vld [vmem:[%s426 + $0x38] sm:$0xf]
      %s1024 = scalar_lea.vmem %s3, 192
      %v1025 = vld [vmem:[%s1024] sm:$0xf]
      %v1026 = vld [vmem:[%s1024 + $0x4] sm:$0xf]
      %v1027 = vld [vmem:[%s1024 + $0x8] sm:$0xf]
      %v1028 = vld [vmem:[%s1024 + $0xc] sm:$0xf]
      %v1029 = vld [vmem:[%s1024 + $0x10] sm:$0xf]
      %v1030 = vld [vmem:[%s1024 + $0x14] sm:$0xf]
      %v1031 = vld [vmem:[%s1024 + $0x18] sm:$0xf]
      %v1032 = vld [vmem:[%s1024 + $0x1c] sm:$0xf]
      %v1033 = vld [vmem:[%s1024 + $0x20] sm:$0xf]
      %v1034 = vld [vmem:[%s1024 + $0x24] sm:$0xf]
      %v1035 = vld [vmem:[%s1024 + $0x28] sm:$0xf]
      %v1036 = vld [vmem:[%s1024 + $0x2c] sm:$0xf]
      %v1037 = vld [vmem:[%s1024 + $0x30] sm:$0xf]
      %v1038 = vld [vmem:[%s1024 + $0x34] sm:$0xf]
      %v1039 = vld [vmem:[%s1024 + $0x38] sm:$0xf]
      %v1040 = vld [vmem:[%s1024 + $0x3c] sm:$0xf]
      %v1049 = vunpack.c.l.b16 %v1016
      %v1050 = vunpack.c.l.b16 %v1017
      %v1051 = vunpack.c.l.b16 %v1018
      %v1052 = vunpack.c.l.b16 %v1019
      %v1053 = vunpack.c.l.b16 %v1020
      %v1054 = vunpack.c.l.b16 %v1021
      %v1055 = vunpack.c.l.b16 %v1022
      %v1056 = vunpack.c.l.b16 %v1023
      %v1057 = vpack.c.b16 %v1050, %v1049
      %v1058 = vpack.c.b16 %v1052, %v1051
      %v1059 = vpack.c.b16 %v1054, %v1053
      %v1060 = vpack.c.b16 %v1056, %v1055
      %v1081 = vunpack.c.l.b16 %v1025
      %v1082 = vunpack.c.l.b16 %v1026
      %v1083 = vunpack.c.l.b16 %v1027
      %v1084 = vunpack.c.l.b16 %v1028
      %v1085 = vunpack.c.l.b16 %v1029
      %v1086 = vunpack.c.l.b16 %v1030
      %v1087 = vunpack.c.l.b16 %v1031
      %v1088 = vunpack.c.l.b16 %v1032
      %v1089 = vunpack.c.l.b16 %v1033
      %v1090 = vunpack.c.l.b16 %v1034
      %v1091 = vunpack.c.l.b16 %v1035
      %v1092 = vunpack.c.l.b16 %v1036
      %v1093 = vunpack.c.l.b16 %v1037
      %v1094 = vunpack.c.l.b16 %v1038
      %v1095 = vunpack.c.l.b16 %v1039
      %v1096 = vunpack.c.l.b16 %v1040
      %v1097 = vpack.c.b16 %v1082, %v1081
      %v1098 = vpack.c.b16 %v1084, %v1083
      %v1099 = vpack.c.b16 %v1086, %v1085
      %v1100 = vpack.c.b16 %v1088, %v1087
      %v1101 = vpack.c.b16 %v1090, %v1089
      %v1102 = vpack.c.b16 %v1092, %v1091
      %v1103 = vpack.c.b16 %v1094, %v1093
      %v1104 = vpack.c.b16 %v1096, %v1095
      %1113 = vmatpush.bf16.msra.mxu0 %v1104
      %1114 = vmatpush.bf16.msra.mxu0 %v1103
      %1115 = vmatpush.bf16.msra.mxu0 %v1102
      %1116 = vmatpush.bf16.msra.mxu0 %v1101
      %1117 = vmatpush.bf16.msra.mxu0 %v1100
      %1118 = vmatpush.bf16.msra.mxu0 %v1099
      %1119 = vmatpush.bf16.msra.mxu0 %v1098
      %1120 = vmatpush.bf16.msra.mxu0 %v1097
      %1121 = vmatmul.bf16.gmra.mxu0 %v1057
      %v1122 = vpop.f32.mrf.mxu0
      %v1123 = vadd.f32 0.0, %v1122
      %v1124 = vpop.f32.mrf.mxu0
      %v1125 = vadd.f32 0.0, %v1124
      %1126 = vmatmul.bf16.gmra.mxu0 %v1058
      %v1127 = vpop.f32.mrf.mxu0
      %v1128 = vadd.f32 0.0, %v1127
      %v1129 = vpop.f32.mrf.mxu0
      %v1130 = vadd.f32 0.0, %v1129
      %1131 = vmatmul.bf16.gmra.mxu0 %v1059
      %v1132 = vpop.f32.mrf.mxu0
      %v1133 = vadd.f32 0.0, %v1132
      %v1134 = vpop.f32.mrf.mxu0
      %v1135 = vadd.f32 0.0, %v1134
      %1136 = vmatmul.bf16.gmra.mxu0 %v1060
      %v1137 = vpop.f32.mrf.mxu0
      %v1138 = vadd.f32 0.0, %v1137
      %v1139 = vpop.f32.mrf.mxu0
      %v1140 = vadd.f32 0.0, %v1139
      %1141 = vdwg.mxu0
      %v1142 = vadd.f32 %v1008, %v1123
      %v1143 = vadd.f32 %v1009, %v1125
      %v1144 = vadd.f32 %v1010, %v1128
      %v1145 = vadd.f32 %v1011, %v1130
      %v1146 = vadd.f32 %v1012, %v1133
      %v1147 = vadd.f32 %v1013, %v1135
      %v1148 = vadd.f32 %v1014, %v1138
      %v1149 = vadd.f32 %v1015, %v1140
      %v1150 = vld [vmem:[%s426] sm:$0xf]
      %v1151 = vld [vmem:[%s426 + $0x4] sm:$0x1]
      %v1152 = vld [vmem:[%s426 + $0x8] sm:$0xf]
      %v1153 = vld [vmem:[%s426 + $0xc] sm:$0x1]
      %v1154 = vld [vmem:[%s426 + $0x10] sm:$0xf]
      %v1155 = vld [vmem:[%s426 + $0x14] sm:$0x1]
      %v1156 = vld [vmem:[%s426 + $0x18] sm:$0xf]
      %v1157 = vld [vmem:[%s426 + $0x1c] sm:$0x1]
      %v1158 = vld [vmem:[%s426 + $0x20] sm:$0xf]
      %v1159 = vld [vmem:[%s426 + $0x24] sm:$0x1]
      %v1160 = vld [vmem:[%s426 + $0x28] sm:$0xf]
      %v1161 = vld [vmem:[%s426 + $0x2c] sm:$0x1]
      %v1162 = vld [vmem:[%s426 + $0x30] sm:$0xf]
      %v1163 = vld [vmem:[%s426 + $0x34] sm:$0x1]
      %v1164 = vld [vmem:[%s426 + $0x38] sm:$0xf]
      %v1165 = vld [vmem:[%s426 + $0x3c] sm:$0x1]
      %v1167 = vshrl.u32 %v1150, 16
      %v1169 = vrot.slane %v1167, 4
      %v1170 = vshll.u32 %v1150, 16
      %v1172 = vrot.slane %v1170, 5
      %v1173 = vor.u32 %v1169, %v1172
      %v1174 = vrot.slane %v1173, 4
      %v1176 = vshll.u32 %v1151, 16
      %v1178 = vrot.slane %v1176, 5
      %v1179 = vsel %vm515, %v1174, %v1178
      %v1181 = vshrl.u32 %v1152, 16
      %v1183 = vrot.slane %v1181, 4
      %v1184 = vshll.u32 %v1152, 16
      %v1186 = vrot.slane %v1184, 5
      %v1187 = vor.u32 %v1183, %v1186
      %v1188 = vrot.slane %v1187, 4
      %v1190 = vshll.u32 %v1153, 16
      %v1192 = vrot.slane %v1190, 5
      %v1193 = vsel %vm515, %v1188, %v1192
      %v1195 = vshrl.u32 %v1154, 16
      %v1197 = vrot.slane %v1195, 4
      %v1198 = vshll.u32 %v1154, 16
      %v1200 = vrot.slane %v1198, 5
      %v1201 = vor.u32 %v1197, %v1200
      %v1202 = vrot.slane %v1201, 4
      %v1204 = vshll.u32 %v1155, 16
      %v1206 = vrot.slane %v1204, 5
      %v1207 = vsel %vm515, %v1202, %v1206
      %v1209 = vshrl.u32 %v1156, 16
      %v1211 = vrot.slane %v1209, 4
      %v1212 = vshll.u32 %v1156, 16
      %v1214 = vrot.slane %v1212, 5
      %v1215 = vor.u32 %v1211, %v1214
      %v1216 = vrot.slane %v1215, 4
      %v1218 = vshll.u32 %v1157, 16
      %v1220 = vrot.slane %v1218, 5
      %v1221 = vsel %vm515, %v1216, %v1220
      %v1223 = vshrl.u32 %v1158, 16
      %v1225 = vrot.slane %v1223, 4
      %v1226 = vshll.u32 %v1158, 16
      %v1228 = vrot.slane %v1226, 5
      %v1229 = vor.u32 %v1225, %v1228
      %v1230 = vrot.slane %v1229, 4
      %v1232 = vshll.u32 %v1159, 16
      %v1234 = vrot.slane %v1232, 5
      %v1235 = vsel %vm515, %v1230, %v1234
      %v1237 = vshrl.u32 %v1160, 16
      %v1239 = vrot.slane %v1237, 4
      %v1240 = vshll.u32 %v1160, 16
      %v1242 = vrot.slane %v1240, 5
      %v1243 = vor.u32 %v1239, %v1242
      %v1244 = vrot.slane %v1243, 4
      %v1246 = vshll.u32 %v1161, 16
      %v1248 = vrot.slane %v1246, 5
      %v1249 = vsel %vm515, %v1244, %v1248
      %v1251 = vshrl.u32 %v1162, 16
      %v1253 = vrot.slane %v1251, 4
      %v1254 = vshll.u32 %v1162, 16
      %v1256 = vrot.slane %v1254, 5
      %v1257 = vor.u32 %v1253, %v1256
      %v1258 = vrot.slane %v1257, 4
      %v1260 = vshll.u32 %v1163, 16
      %v1262 = vrot.slane %v1260, 5
      %v1263 = vsel %vm515, %v1258, %v1262
      %v1265 = vshrl.u32 %v1164, 16
      %v1267 = vrot.slane %v1265, 4
      %v1268 = vshll.u32 %v1164, 16
      %v1270 = vrot.slane %v1268, 5
      %v1271 = vor.u32 %v1267, %v1270
      %v1272 = vrot.slane %v1271, 4
      %v1274 = vshll.u32 %v1165, 16
      %v1276 = vrot.slane %v1274, 5
      %v1277 = vsel %vm515, %v1272, %v1276
      %s1278 = scalar_lea.vmem %s3, 256
      %v1279 = vld [vmem:[%s1278] sm:$0xf]
      %v1280 = vld [vmem:[%s1278 + $0x4] sm:$0xf]
      %v1281 = vld [vmem:[%s1278 + $0x8] sm:$0xf]
      %v1282 = vld [vmem:[%s1278 + $0xc] sm:$0xf]
      %v1283 = vld [vmem:[%s1278 + $0x10] sm:$0xf]
      %v1284 = vld [vmem:[%s1278 + $0x14] sm:$0xf]
      %v1285 = vld [vmem:[%s1278 + $0x18] sm:$0xf]
      %v1286 = vld [vmem:[%s1278 + $0x1c] sm:$0xf]
      %v1287 = vld [vmem:[%s1278 + $0x20] sm:$0xf]
      %v1288 = vld [vmem:[%s1278 + $0x24] sm:$0xf]
      %v1289 = vld [vmem:[%s1278 + $0x28] sm:$0xf]
      %v1290 = vld [vmem:[%s1278 + $0x2c] sm:$0xf]
      %v1291 = vld [vmem:[%s1278 + $0x30] sm:$0xf]
      %v1292 = vld [vmem:[%s1278 + $0x34] sm:$0xf]
      %v1293 = vld [vmem:[%s1278 + $0x38] sm:$0xf]
      %v1294 = vld [vmem:[%s1278 + $0x3c] sm:$0xf]
      %v1295 = vunpack.c.l.b16 %v1179
      %v1296 = vunpack.c.l.b16 %v1193
      %v1297 = vunpack.c.l.b16 %v1207
      %v1298 = vunpack.c.l.b16 %v1221
      %v1299 = vunpack.c.l.b16 %v1235
      %v1300 = vunpack.c.l.b16 %v1249
      %v1301 = vunpack.c.l.b16 %v1263
      %v1302 = vunpack.c.l.b16 %v1277
      %v1303 = vpack.c.b16 %v1296, %v1295
      %v1304 = vpack.c.b16 %v1298, %v1297
      %v1305 = vpack.c.b16 %v1300, %v1299
      %v1306 = vpack.c.b16 %v1302, %v1301
      %v1327 = vunpack.c.l.b16 %v1279
      %v1328 = vunpack.c.l.b16 %v1280
      %v1329 = vunpack.c.l.b16 %v1281
      %v1330 = vunpack.c.l.b16 %v1282
      %v1331 = vunpack.c.l.b16 %v1283
      %v1332 = vunpack.c.l.b16 %v1284
      %v1333 = vunpack.c.l.b16 %v1285
      %v1334 = vunpack.c.l.b16 %v1286
      %v1335 = vunpack.c.l.b16 %v1287
      %v1336 = vunpack.c.l.b16 %v1288
      %v1337 = vunpack.c.l.b16 %v1289
      %v1338 = vunpack.c.l.b16 %v1290
      %v1339 = vunpack.c.l.b16 %v1291
      %v1340 = vunpack.c.l.b16 %v1292
      %v1341 = vunpack.c.l.b16 %v1293
      %v1342 = vunpack.c.l.b16 %v1294
      %v1343 = vpack.c.b16 %v1328, %v1327
      %v1344 = vpack.c.b16 %v1330, %v1329
      %v1345 = vpack.c.b16 %v1332, %v1331
      %v1346 = vpack.c.b16 %v1334, %v1333
      %v1347 = vpack.c.b16 %v1336, %v1335
      %v1348 = vpack.c.b16 %v1338, %v1337
      %v1349 = vpack.c.b16 %v1340, %v1339
      %v1350 = vpack.c.b16 %v1342, %v1341
      %1359 = vmatpush.bf16.msra.mxu0 %v1350
      %1360 = vmatpush.bf16.msra.mxu0 %v1349
      %1361 = vmatpush.bf16.msra.mxu0 %v1348
      %1362 = vmatpush.bf16.msra.mxu0 %v1347
      %1363 = vmatpush.bf16.msra.mxu0 %v1346
      %1364 = vmatpush.bf16.msra.mxu0 %v1345
      %1365 = vmatpush.bf16.msra.mxu0 %v1344
      %1366 = vmatpush.bf16.msra.mxu0 %v1343
      %1367 = vmatmul.bf16.gmra.mxu0 %v1303
      %v1368 = vpop.f32.mrf.mxu0
      %v1369 = vadd.f32 0.0, %v1368
      %v1370 = vpop.f32.mrf.mxu0
      %v1371 = vadd.f32 0.0, %v1370
      %1372 = vmatmul.bf16.gmra.mxu0 %v1304
      %v1373 = vpop.f32.mrf.mxu0
      %v1374 = vadd.f32 0.0, %v1373
      %v1375 = vpop.f32.mrf.mxu0
      %v1376 = vadd.f32 0.0, %v1375
      %1377 = vmatmul.bf16.gmra.mxu0 %v1305
      %v1378 = vpop.f32.mrf.mxu0
      %v1379 = vadd.f32 0.0, %v1378
      %v1380 = vpop.f32.mrf.mxu0
      %v1381 = vadd.f32 0.0, %v1380
      %1382 = vmatmul.bf16.gmra.mxu0 %v1306
      %v1383 = vpop.f32.mrf.mxu0
      %v1384 = vadd.f32 0.0, %v1383
      %v1385 = vpop.f32.mrf.mxu0
      %v1386 = vadd.f32 0.0, %v1385
      %1387 = vdwg.mxu0
      %v1388 = vadd.f32 %v1142, %v1369
      %v1389 = vadd.f32 %v1143, %v1371
      %v1390 = vadd.f32 %v1144, %v1374
      %v1391 = vadd.f32 %v1145, %v1376
      %v1392 = vadd.f32 %v1146, %v1379
      %v1393 = vadd.f32 %v1147, %v1381
      %v1394 = vadd.f32 %v1148, %v1384
      %v1395 = vadd.f32 %v1149, %v1386
      %v1396 = vld [vmem:[%s426] sm:$0xe]
      %v1397 = vld [vmem:[%s426 + $0x8] sm:$0xe]
      %v1398 = vld [vmem:[%s426 + $0x10] sm:$0xe]
      %v1399 = vld [vmem:[%s426 + $0x18] sm:$0xe]
      %v1400 = vld [vmem:[%s426 + $0x20] sm:$0xe]
      %v1401 = vld [vmem:[%s426 + $0x28] sm:$0xe]
      %v1402 = vld [vmem:[%s426 + $0x30] sm:$0xe]
      %v1403 = vld [vmem:[%s426 + $0x38] sm:$0xe]
      %v1420 = vrot.slane %v1396, 5
      %v1421 = vrot.slane %v1420, 4
      %v1422 = vrot.slane %v1151, 5
      %v1423 = vsel %vm865, %v1421, %v1422
      %v1424 = vrot.slane %v1397, 5
      %v1425 = vrot.slane %v1424, 4
      %v1426 = vrot.slane %v1153, 5
      %v1427 = vsel %vm865, %v1425, %v1426
      %v1428 = vrot.slane %v1398, 5
      %v1429 = vrot.slane %v1428, 4
      %v1430 = vrot.slane %v1155, 5
      %v1431 = vsel %vm865, %v1429, %v1430
      %v1432 = vrot.slane %v1399, 5
      %v1433 = vrot.slane %v1432, 4
      %v1434 = vrot.slane %v1157, 5
      %v1435 = vsel %vm865, %v1433, %v1434
      %v1436 = vrot.slane %v1400, 5
      %v1437 = vrot.slane %v1436, 4
      %v1438 = vrot.slane %v1159, 5
      %v1439 = vsel %vm865, %v1437, %v1438
      %v1440 = vrot.slane %v1401, 5
      %v1441 = vrot.slane %v1440, 4
      %v1442 = vrot.slane %v1161, 5
      %v1443 = vsel %vm865, %v1441, %v1442
      %v1444 = vrot.slane %v1402, 5
      %v1445 = vrot.slane %v1444, 4
      %v1446 = vrot.slane %v1163, 5
      %v1447 = vsel %vm865, %v1445, %v1446
      %v1448 = vrot.slane %v1403, 5
      %v1449 = vrot.slane %v1448, 4
      %v1450 = vrot.slane %v1165, 5
      %v1451 = vsel %vm865, %v1449, %v1450
      %s1452 = scalar_lea.vmem %s3, 320
      %v1453 = vld [vmem:[%s1452] sm:$0xf]
      %v1454 = vld [vmem:[%s1452 + $0x4] sm:$0xf]
      %v1455 = vld [vmem:[%s1452 + $0x8] sm:$0xf]
      %v1456 = vld [vmem:[%s1452 + $0xc] sm:$0xf]
      %v1457 = vld [vmem:[%s1452 + $0x10] sm:$0xf]
      %v1458 = vld [vmem:[%s1452 + $0x14] sm:$0xf]
      %v1459 = vld [vmem:[%s1452 + $0x18] sm:$0xf]
      %v1460 = vld [vmem:[%s1452 + $0x1c] sm:$0xf]
      %v1461 = vld [vmem:[%s1452 + $0x20] sm:$0xf]
      %v1462 = vld [vmem:[%s1452 + $0x24] sm:$0xf]
      %v1463 = vld [vmem:[%s1452 + $0x28] sm:$0xf]
      %v1464 = vld [vmem:[%s1452 + $0x2c] sm:$0xf]
      %v1465 = vld [vmem:[%s1452 + $0x30] sm:$0xf]
      %v1466 = vld [vmem:[%s1452 + $0x34] sm:$0xf]
      %v1467 = vld [vmem:[%s1452 + $0x38] sm:$0xf]
      %v1468 = vld [vmem:[%s1452 + $0x3c] sm:$0xf]
      %v1469 = vunpack.c.l.b16 %v1423
      %v1470 = vunpack.c.l.b16 %v1427
      %v1471 = vunpack.c.l.b16 %v1431
      %v1472 = vunpack.c.l.b16 %v1435
      %v1473 = vunpack.c.l.b16 %v1439
      %v1474 = vunpack.c.l.b16 %v1443
      %v1475 = vunpack.c.l.b16 %v1447
      %v1476 = vunpack.c.l.b16 %v1451
      %v1477 = vpack.c.b16 %v1470, %v1469
      %v1478 = vpack.c.b16 %v1472, %v1471
      %v1479 = vpack.c.b16 %v1474, %v1473
      %v1480 = vpack.c.b16 %v1476, %v1475
      %v1501 = vunpack.c.l.b16 %v1453
      %v1502 = vunpack.c.l.b16 %v1454
      %v1503 = vunpack.c.l.b16 %v1455
      %v1504 = vunpack.c.l.b16 %v1456
      %v1505 = vunpack.c.l.b16 %v1457
      %v1506 = vunpack.c.l.b16 %v1458
      %v1507 = vunpack.c.l.b16 %v1459
      %v1508 = vunpack.c.l.b16 %v1460
      %v1509 = vunpack.c.l.b16 %v1461
      %v1510 = vunpack.c.l.b16 %v1462
      %v1511 = vunpack.c.l.b16 %v1463
      %v1512 = vunpack.c.l.b16 %v1464
      %v1513 = vunpack.c.l.b16 %v1465
      %v1514 = vunpack.c.l.b16 %v1466
      %v1515 = vunpack.c.l.b16 %v1467
      %v1516 = vunpack.c.l.b16 %v1468
      %v1517 = vpack.c.b16 %v1502, %v1501
      %v1518 = vpack.c.b16 %v1504, %v1503
      %v1519 = vpack.c.b16 %v1506, %v1505
      %v1520 = vpack.c.b16 %v1508, %v1507
      %v1521 = vpack.c.b16 %v1510, %v1509
      %v1522 = vpack.c.b16 %v1512, %v1511
      %v1523 = vpack.c.b16 %v1514, %v1513
      %v1524 = vpack.c.b16 %v1516, %v1515
      %1533 = vmatpush.bf16.msra.mxu0 %v1524
      %1534 = vmatpush.bf16.msra.mxu0 %v1523
      %1535 = vmatpush.bf16.msra.mxu0 %v1522
      %1536 = vmatpush.bf16.msra.mxu0 %v1521
      %1537 = vmatpush.bf16.msra.mxu0 %v1520
      %1538 = vmatpush.bf16.msra.mxu0 %v1519
      %1539 = vmatpush.bf16.msra.mxu0 %v1518
      %1540 = vmatpush.bf16.msra.mxu0 %v1517
      %1541 = vmatmul.bf16.gmra.mxu0 %v1477
      %v1542 = vpop.f32.mrf.mxu0
      %v1543 = vadd.f32 0.0, %v1542
      %v1544 = vpop.f32.mrf.mxu0
      %v1545 = vadd.f32 0.0, %v1544
      %1546 = vmatmul.bf16.gmra.mxu0 %v1478
      %v1547 = vpop.f32.mrf.mxu0
      %v1548 = vadd.f32 0.0, %v1547
      %v1549 = vpop.f32.mrf.mxu0
      %v1550 = vadd.f32 0.0, %v1549
      %1551 = vmatmul.bf16.gmra.mxu0 %v1479
      %v1552 = vpop.f32.mrf.mxu0
      %v1553 = vadd.f32 0.0, %v1552
      %v1554 = vpop.f32.mrf.mxu0
      %v1555 = vadd.f32 0.0, %v1554
      %1556 = vmatmul.bf16.gmra.mxu0 %v1480
      %v1557 = vpop.f32.mrf.mxu0
      %v1558 = vadd.f32 0.0, %v1557
      %v1559 = vpop.f32.mrf.mxu0
      %v1560 = vadd.f32 0.0, %v1559
      %1561 = vdwg.mxu0
      %v1562 = vadd.f32 %v1388, %v1543
      %v1563 = vadd.f32 %v1389, %v1545
      %v1564 = vadd.f32 %v1390, %v1548
      %v1565 = vadd.f32 %v1391, %v1550
      %v1566 = vadd.f32 %v1392, %v1553
      %v1567 = vadd.f32 %v1393, %v1555
      %v1568 = vadd.f32 %v1394, %v1558
      %v1569 = vadd.f32 %v1395, %v1560
      %s1570 = scalar_lea.vmem [#allocation2], 16
      %v1571 = vld [vmem:[%s1570] sm:$0xf]
      %v1572 = vld [vmem:[%s1570 + $0x8] sm:$0xf]
      %v1573 = vld [vmem:[%s1570 + $0x10] sm:$0xf]
      %v1574 = vld [vmem:[%s1570 + $0x18] sm:$0xf]
      %v1575 = vld [vmem:[%s1570 + $0x20] sm:$0xf]
      %v1576 = vld [vmem:[%s1570 + $0x28] sm:$0xf]
      %v1577 = vld [vmem:[%s1570 + $0x30] sm:$0xf]
      %v1578 = vld [vmem:[%s1570 + $0x38] sm:$0xf]
      %s1579 = scalar_lea.vmem %s3, 384
      %v1580 = vld [vmem:[%s1579] sm:$0xf]
      %v1581 = vld [vmem:[%s1579 + $0x4] sm:$0xf]
      %v1582 = vld [vmem:[%s1579 + $0x8] sm:$0xf]
      %v1583 = vld [vmem:[%s1579 + $0xc] sm:$0xf]
      %v1584 = vld [vmem:[%s1579 + $0x10] sm:$0xf]
      %v1585 = vld [vmem:[%s1579 + $0x14] sm:$0xf]
      %v1586 = vld [vmem:[%s1579 + $0x18] sm:$0xf]
      %v1587 = vld [vmem:[%s1579 + $0x1c] sm:$0xf]
      %v1588 = vld [vmem:[%s1579 + $0x20] sm:$0xf]
      %v1589 = vld [vmem:[%s1579 + $0x24] sm:$0xf]
      %v1590 = vld [vmem:[%s1579 + $0x28] sm:$0xf]
      %v1591 = vld [vmem:[%s1579 + $0x2c] sm:$0xf]
      %v1592 = vld [vmem:[%s1579 + $0x30] sm:$0xf]
      %v1593 = vld [vmem:[%s1579 + $0x34] sm:$0xf]
      %v1594 = vld [vmem:[%s1579 + $0x38] sm:$0xf]
      %v1595 = vld [vmem:[%s1579 + $0x3c] sm:$0xf]
      %v1604 = vunpack.c.l.b16 %v1571
      %v1605 = vunpack.c.l.b16 %v1572
      %v1606 = vunpack.c.l.b16 %v1573
      %v1607 = vunpack.c.l.b16 %v1574
      %v1608 = vunpack.c.l.b16 %v1575
      %v1609 = vunpack.c.l.b16 %v1576
      %v1610 = vunpack.c.l.b16 %v1577
      %v1611 = vunpack.c.l.b16 %v1578
      %v1612 = vpack.c.b16 %v1605, %v1604
      %v1613 = vpack.c.b16 %v1607, %v1606
      %v1614 = vpack.c.b16 %v1609, %v1608
      %v1615 = vpack.c.b16 %v1611, %v1610
      %v1636 = vunpack.c.l.b16 %v1580
      %v1637 = vunpack.c.l.b16 %v1581
      %v1638 = vunpack.c.l.b16 %v1582
      %v1639 = vunpack.c.l.b16 %v1583
      %v1640 = vunpack.c.l.b16 %v1584
      %v1641 = vunpack.c.l.b16 %v1585
      %v1642 = vunpack.c.l.b16 %v1586
      %v1643 = vunpack.c.l.b16 %v1587
      %v1644 = vunpack.c.l.b16 %v1588
      %v1645 = vunpack.c.l.b16 %v1589
      %v1646 = vunpack.c.l.b16 %v1590
      %v1647 = vunpack.c.l.b16 %v1591
      %v1648 = vunpack.c.l.b16 %v1592
      %v1649 = vunpack.c.l.b16 %v1593
      %v1650 = vunpack.c.l.b16 %v1594
      %v1651 = vunpack.c.l.b16 %v1595
      %v1652 = vpack.c.b16 %v1637, %v1636
      %v1653 = vpack.c.b16 %v1639, %v1638
      %v1654 = vpack.c.b16 %v1641, %v1640
      %v1655 = vpack.c.b16 %v1643, %v1642
      %v1656 = vpack.c.b16 %v1645, %v1644
      %v1657 = vpack.c.b16 %v1647, %v1646
      %v1658 = vpack.c.b16 %v1649, %v1648
      %v1659 = vpack.c.b16 %v1651, %v1650
      %1668 = vmatpush.bf16.msra.mxu0 %v1659
      %1669 = vmatpush.bf16.msra.mxu0 %v1658
      %1670 = vmatpush.bf16.msra.mxu0 %v1657
      %1671 = vmatpush.bf16.msra.mxu0 %v1656
      %1672 = vmatpush.bf16.msra.mxu0 %v1655
      %1673 = vmatpush.bf16.msra.mxu0 %v1654
      %1674 = vmatpush.bf16.msra.mxu0 %v1653
      %1675 = vmatpush.bf16.msra.mxu0 %v1652
      %1676 = vmatmul.bf16.gmra.mxu0 %v1612
      %v1677 = vpop.f32.mrf.mxu0
      %v1678 = vadd.f32 0.0, %v1677
      %v1679 = vpop.f32.mrf.mxu0
      %v1680 = vadd.f32 0.0, %v1679
      %1681 = vmatmul.bf16.gmra.mxu0 %v1613
      %v1682 = vpop.f32.mrf.mxu0
      %v1683 = vadd.f32 0.0, %v1682
      %v1684 = vpop.f32.mrf.mxu0
      %v1685 = vadd.f32 0.0, %v1684
      %1686 = vmatmul.bf16.gmra.mxu0 %v1614
      %v1687 = vpop.f32.mrf.mxu0
      %v1688 = vadd.f32 0.0, %v1687
      %v1689 = vpop.f32.mrf.mxu0
      %v1690 = vadd.f32 0.0, %v1689
      %1691 = vmatmul.bf16.gmra.mxu0 %v1615
      %v1692 = vpop.f32.mrf.mxu0
      %v1693 = vadd.f32 0.0, %v1692
      %v1694 = vpop.f32.mrf.mxu0
      %v1695 = vadd.f32 0.0, %v1694
      %1696 = vdwg.mxu0
      %v1697 = vadd.f32 %v1562, %v1678
      %v1698 = vadd.f32 %v1563, %v1680
      %v1699 = vadd.f32 %v1564, %v1683
      %v1700 = vadd.f32 %v1565, %v1685
      %v1701 = vadd.f32 %v1566, %v1688
      %v1702 = vadd.f32 %v1567, %v1690
      %v1703 = vadd.f32 %v1568, %v1693
      %v1704 = vadd.f32 %v1569, %v1695
      %v1705 = vld [vmem:[%s1570] sm:$0xf]
      %v1706 = vld [vmem:[%s1570 + $0x4] sm:$0x1]
      %v1707 = vld [vmem:[%s1570 + $0x8] sm:$0xf]
      %v1708 = vld [vmem:[%s1570 + $0xc] sm:$0x1]
      %v1709 = vld [vmem:[%s1570 + $0x10] sm:$0xf]
      %v1710 = vld [vmem:[%s1570 + $0x14] sm:$0x1]
      %v1711 = vld [vmem:[%s1570 + $0x18] sm:$0xf]
      %v1712 = vld [vmem:[%s1570 + $0x1c] sm:$0x1]
      %v1713 = vld [vmem:[%s1570 + $0x20] sm:$0xf]
      %v1714 = vld [vmem:[%s1570 + $0x24] sm:$0x1]
      %v1715 = vld [vmem:[%s1570 + $0x28] sm:$0xf]
      %v1716 = vld [vmem:[%s1570 + $0x2c] sm:$0x1]
      %v1717 = vld [vmem:[%s1570 + $0x30] sm:$0xf]
      %v1718 = vld [vmem:[%s1570 + $0x34] sm:$0x1]
      %v1719 = vld [vmem:[%s1570 + $0x38] sm:$0xf]
      %v1720 = vld [vmem:[%s1570 + $0x3c] sm:$0x1]
      %v1722 = vshrl.u32 %v1705, 16
      %v1724 = vrot.slane %v1722, 4
      %v1725 = vshll.u32 %v1705, 16
      %v1727 = vrot.slane %v1725, 5
      %v1728 = vor.u32 %v1724, %v1727
      %v1729 = vrot.slane %v1728, 4
      %v1731 = vshll.u32 %v1706, 16
      %v1733 = vrot.slane %v1731, 5
      %v1734 = vsel %vm515, %v1729, %v1733
      %v1736 = vshrl.u32 %v1707, 16
      %v1738 = vrot.slane %v1736, 4
      %v1739 = vshll.u32 %v1707, 16
      %v1741 = vrot.slane %v1739, 5
      %v1742 = vor.u32 %v1738, %v1741
      %v1743 = vrot.slane %v1742, 4
      %v1745 = vshll.u32 %v1708, 16
      %v1747 = vrot.slane %v1745, 5
      %v1748 = vsel %vm515, %v1743, %v1747
      %v1750 = vshrl.u32 %v1709, 16
      %v1752 = vrot.slane %v1750, 4
      %v1753 = vshll.u32 %v1709, 16
      %v1755 = vrot.slane %v1753, 5
      %v1756 = vor.u32 %v1752, %v1755
      %v1757 = vrot.slane %v1756, 4
      %v1759 = vshll.u32 %v1710, 16
      %v1761 = vrot.slane %v1759, 5
      %v1762 = vsel %vm515, %v1757, %v1761
      %v1764 = vshrl.u32 %v1711, 16
      %v1766 = vrot.slane %v1764, 4
      %v1767 = vshll.u32 %v1711, 16
      %v1769 = vrot.slane %v1767, 5
      %v1770 = vor.u32 %v1766, %v1769
      %v1771 = vrot.slane %v1770, 4
      %v1773 = vshll.u32 %v1712, 16
      %v1775 = vrot.slane %v1773, 5
      %v1776 = vsel %vm515, %v1771, %v1775
      %v1778 = vshrl.u32 %v1713, 16
      %v1780 = vrot.slane %v1778, 4
      %v1781 = vshll.u32 %v1713, 16
      %v1783 = vrot.slane %v1781, 5
      %v1784 = vor.u32 %v1780, %v1783
      %v1785 = vrot.slane %v1784, 4
      %v1787 = vshll.u32 %v1714, 16
      %v1789 = vrot.slane %v1787, 5
      %v1790 = vsel %vm515, %v1785, %v1789
      %v1792 = vshrl.u32 %v1715, 16
      %v1794 = vrot.slane %v1792, 4
      %v1795 = vshll.u32 %v1715, 16
      %v1797 = vrot.slane %v1795, 5
      %v1798 = vor.u32 %v1794, %v1797
      %v1799 = vrot.slane %v1798, 4
      %v1801 = vshll.u32 %v1716, 16
      %v1803 = vrot.slane %v1801, 5
      %v1804 = vsel %vm515, %v1799, %v1803
      %v1806 = vshrl.u32 %v1717, 16
      %v1808 = vrot.slane %v1806, 4
      %v1809 = vshll.u32 %v1717, 16
      %v1811 = vrot.slane %v1809, 5
      %v1812 = vor.u32 %v1808, %v1811
      %v1813 = vrot.slane %v1812, 4
      %v1815 = vshll.u32 %v1718, 16
      %v1817 = vrot.slane %v1815, 5
      %v1818 = vsel %vm515, %v1813, %v1817
      %v1820 = vshrl.u32 %v1719, 16
      %v1822 = vrot.slane %v1820, 4
      %v1823 = vshll.u32 %v1719, 16
      %v1825 = vrot.slane %v1823, 5
      %v1826 = vor.u32 %v1822, %v1825
      %v1827 = vrot.slane %v1826, 4
      %v1829 = vshll.u32 %v1720, 16
      %v1831 = vrot.slane %v1829, 5
      %v1832 = vsel %vm515, %v1827, %v1831
      %s1833 = scalar_lea.vmem %s3, 448
      %v1834 = vld [vmem:[%s1833] sm:$0xf]
      %v1835 = vld [vmem:[%s1833 + $0x4] sm:$0xf]
      %v1836 = vld [vmem:[%s1833 + $0x8] sm:$0xf]
      %v1837 = vld [vmem:[%s1833 + $0xc] sm:$0xf]
      %v1838 = vld [vmem:[%s1833 + $0x10] sm:$0xf]
      %v1839 = vld [vmem:[%s1833 + $0x14] sm:$0xf]
      %v1840 = vld [vmem:[%s1833 + $0x18] sm:$0xf]
      %v1841 = vld [vmem:[%s1833 + $0x1c] sm:$0xf]
      %v1842 = vld [vmem:[%s1833 + $0x20] sm:$0xf]
      %v1843 = vld [vmem:[%s1833 + $0x24] sm:$0xf]
      %v1844 = vld [vmem:[%s1833 + $0x28] sm:$0xf]
      %v1845 = vld [vmem:[%s1833 + $0x2c] sm:$0xf]
      %v1846 = vld [vmem:[%s1833 + $0x30] sm:$0xf]
      %v1847 = vld [vmem:[%s1833 + $0x34] sm:$0xf]
      %v1848 = vld [vmem:[%s1833 + $0x38] sm:$0xf]
      %v1849 = vld [vmem:[%s1833 + $0x3c] sm:$0xf]
      %v1850 = vunpack.c.l.b16 %v1734
      %v1851 = vunpack.c.l.b16 %v1748
      %v1852 = vunpack.c.l.b16 %v1762
      %v1853 = vunpack.c.l.b16 %v1776
      %v1854 = vunpack.c.l.b16 %v1790
      %v1855 = vunpack.c.l.b16 %v1804
      %v1856 = vunpack.c.l.b16 %v1818
      %v1857 = vunpack.c.l.b16 %v1832
      %v1858 = vpack.c.b16 %v1851, %v1850
      %v1859 = vpack.c.b16 %v1853, %v1852
      %v1860 = vpack.c.b16 %v1855, %v1854
      %v1861 = vpack.c.b16 %v1857, %v1856
      %v1882 = vunpack.c.l.b16 %v1834
      %v1883 = vunpack.c.l.b16 %v1835
      %v1884 = vunpack.c.l.b16 %v1836
      %v1885 = vunpack.c.l.b16 %v1837
      %v1886 = vunpack.c.l.b16 %v1838
      %v1887 = vunpack.c.l.b16 %v1839
      %v1888 = vunpack.c.l.b16 %v1840
      %v1889 = vunpack.c.l.b16 %v1841
      %v1890 = vunpack.c.l.b16 %v1842
      %v1891 = vunpack.c.l.b16 %v1843
      %v1892 = vunpack.c.l.b16 %v1844
      %v1893 = vunpack.c.l.b16 %v1845
      %v1894 = vunpack.c.l.b16 %v1846
      %v1895 = vunpack.c.l.b16 %v1847
      %v1896 = vunpack.c.l.b16 %v1848
      %v1897 = vunpack.c.l.b16 %v1849
      %v1898 = vpack.c.b16 %v1883, %v1882
      %v1899 = vpack.c.b16 %v1885, %v1884
      %v1900 = vpack.c.b16 %v1887, %v1886
      %v1901 = vpack.c.b16 %v1889, %v1888
      %v1902 = vpack.c.b16 %v1891, %v1890
      %v1903 = vpack.c.b16 %v1893, %v1892
      %v1904 = vpack.c.b16 %v1895, %v1894
      %v1905 = vpack.c.b16 %v1897, %v1896
      %1914 = vmatpush.bf16.msra.mxu0 %v1905
      %1915 = vmatpush.bf16.msra.mxu0 %v1904
      %1916 = vmatpush.bf16.msra.mxu0 %v1903
      %1917 = vmatpush.bf16.msra.mxu0 %v1902
      %1918 = vmatpush.bf16.msra.mxu0 %v1901
      %1919 = vmatpush.bf16.msra.mxu0 %v1900
      %1920 = vmatpush.bf16.msra.mxu0 %v1899
      %1921 = vmatpush.bf16.msra.mxu0 %v1898
      %1922 = vmatmul.bf16.gmra.mxu0 %v1858
      %v1923 = vpop.f32.mrf.mxu0
      %v1924 = vadd.f32 0.0, %v1923
      %v1925 = vpop.f32.mrf.mxu0
      %v1926 = vadd.f32 0.0, %v1925
      %1927 = vmatmul.bf16.gmra.mxu0 %v1859
      %v1928 = vpop.f32.mrf.mxu0
      %v1929 = vadd.f32 0.0, %v1928
      %v1930 = vpop.f32.mrf.mxu0
      %v1931 = vadd.f32 0.0, %v1930
      %1932 = vmatmul.bf16.gmra.mxu0 %v1860
      %v1933 = vpop.f32.mrf.mxu0
      %v1934 = vadd.f32 0.0, %v1933
      %v1935 = vpop.f32.mrf.mxu0
      %v1936 = vadd.f32 0.0, %v1935
      %1937 = vmatmul.bf16.gmra.mxu0 %v1861
      %v1938 = vpop.f32.mrf.mxu0
      %v1939 = vadd.f32 0.0, %v1938
      %v1940 = vpop.f32.mrf.mxu0
      %v1941 = vadd.f32 0.0, %v1940
      %1942 = vdwg.mxu0
      %v1943 = vadd.f32 %v1697, %v1924
      %v1944 = vadd.f32 %v1698, %v1926
      %v1945 = vadd.f32 %v1699, %v1929
      %v1946 = vadd.f32 %v1700, %v1931
      %v1947 = vadd.f32 %v1701, %v1934
      %v1948 = vadd.f32 %v1702, %v1936
      %v1949 = vadd.f32 %v1703, %v1939
      %v1950 = vadd.f32 %v1704, %v1941
      %v1951 = vld [vmem:[%s1570] sm:$0xe]
      %v1952 = vld [vmem:[%s1570 + $0x8] sm:$0xe]
      %v1953 = vld [vmem:[%s1570 + $0x10] sm:$0xe]
      %v1954 = vld [vmem:[%s1570 + $0x18] sm:$0xe]
      %v1955 = vld [vmem:[%s1570 + $0x20] sm:$0xe]
      %v1956 = vld [vmem:[%s1570 + $0x28] sm:$0xe]
      %v1957 = vld [vmem:[%s1570 + $0x30] sm:$0xe]
      %v1958 = vld [vmem:[%s1570 + $0x38] sm:$0xe]
      %v1975 = vrot.slane %v1951, 5
      %v1976 = vrot.slane %v1975, 4
      %v1977 = vrot.slane %v1706, 5
      %v1978 = vsel %vm865, %v1976, %v1977
      %v1979 = vrot.slane %v1952, 5
      %v1980 = vrot.slane %v1979, 4
      %v1981 = vrot.slane %v1708, 5
      %v1982 = vsel %vm865, %v1980, %v1981
      %v1983 = vrot.slane %v1953, 5
      %v1984 = vrot.slane %v1983, 4
      %v1985 = vrot.slane %v1710, 5
      %v1986 = vsel %vm865, %v1984, %v1985
      %v1987 = vrot.slane %v1954, 5
      %v1988 = vrot.slane %v1987, 4
      %v1989 = vrot.slane %v1712, 5
      %v1990 = vsel %vm865, %v1988, %v1989
      %v1991 = vrot.slane %v1955, 5
      %v1992 = vrot.slane %v1991, 4
      %v1993 = vrot.slane %v1714, 5
      %v1994 = vsel %vm865, %v1992, %v1993
      %v1995 = vrot.slane %v1956, 5
      %v1996 = vrot.slane %v1995, 4
      %v1997 = vrot.slane %v1716, 5
      %v1998 = vsel %vm865, %v1996, %v1997
      %v1999 = vrot.slane %v1957, 5
      %v2000 = vrot.slane %v1999, 4
      %v2001 = vrot.slane %v1718, 5
      %v2002 = vsel %vm865, %v2000, %v2001
      %v2003 = vrot.slane %v1958, 5
      %v2004 = vrot.slane %v2003, 4
      %v2005 = vrot.slane %v1720, 5
      %v2006 = vsel %vm865, %v2004, %v2005
      %s2007 = scalar_lea.vmem %s3, 512
      %v2008 = vld [vmem:[%s2007] sm:$0xf]
      %v2009 = vld [vmem:[%s2007 + $0x4] sm:$0xf]
      %v2010 = vld [vmem:[%s2007 + $0x8] sm:$0xf]
      %v2011 = vld [vmem:[%s2007 + $0xc] sm:$0xf]
      %v2012 = vld [vmem:[%s2007 + $0x10] sm:$0xf]
      %v2013 = vld [vmem:[%s2007 + $0x14] sm:$0xf]
      %v2014 = vld [vmem:[%s2007 + $0x18] sm:$0xf]
      %v2015 = vld [vmem:[%s2007 + $0x1c] sm:$0xf]
      %v2016 = vld [vmem:[%s2007 + $0x20] sm:$0xf]
      %v2017 = vld [vmem:[%s2007 + $0x24] sm:$0xf]
      %v2018 = vld [vmem:[%s2007 + $0x28] sm:$0xf]
      %v2019 = vld [vmem:[%s2007 + $0x2c] sm:$0xf]
      %v2020 = vld [vmem:[%s2007 + $0x30] sm:$0xf]
      %v2021 = vld [vmem:[%s2007 + $0x34] sm:$0xf]
      %v2022 = vld [vmem:[%s2007 + $0x38] sm:$0xf]
      %v2023 = vld [vmem:[%s2007 + $0x3c] sm:$0xf]
      %v2024 = vunpack.c.l.b16 %v1978
      %v2025 = vunpack.c.l.b16 %v1982
      %v2026 = vunpack.c.l.b16 %v1986
      %v2027 = vunpack.c.l.b16 %v1990
      %v2028 = vunpack.c.l.b16 %v1994
      %v2029 = vunpack.c.l.b16 %v1998
      %v2030 = vunpack.c.l.b16 %v2002
      %v2031 = vunpack.c.l.b16 %v2006
      %v2032 = vpack.c.b16 %v2025, %v2024
      %v2033 = vpack.c.b16 %v2027, %v2026
      %v2034 = vpack.c.b16 %v2029, %v2028
      %v2035 = vpack.c.b16 %v2031, %v2030
      %v2056 = vunpack.c.l.b16 %v2008
      %v2057 = vunpack.c.l.b16 %v2009
      %v2058 = vunpack.c.l.b16 %v2010
      %v2059 = vunpack.c.l.b16 %v2011
      %v2060 = vunpack.c.l.b16 %v2012
      %v2061 = vunpack.c.l.b16 %v2013
      %v2062 = vunpack.c.l.b16 %v2014
      %v2063 = vunpack.c.l.b16 %v2015
      %v2064 = vunpack.c.l.b16 %v2016
      %v2065 = vunpack.c.l.b16 %v2017
      %v2066 = vunpack.c.l.b16 %v2018
      %v2067 = vunpack.c.l.b16 %v2019
      %v2068 = vunpack.c.l.b16 %v2020
      %v2069 = vunpack.c.l.b16 %v2021
      %v2070 = vunpack.c.l.b16 %v2022
      %v2071 = vunpack.c.l.b16 %v2023
      %v2072 = vpack.c.b16 %v2057, %v2056
      %v2073 = vpack.c.b16 %v2059, %v2058
      %v2074 = vpack.c.b16 %v2061, %v2060
      %v2075 = vpack.c.b16 %v2063, %v2062
      %v2076 = vpack.c.b16 %v2065, %v2064
      %v2077 = vpack.c.b16 %v2067, %v2066
      %v2078 = vpack.c.b16 %v2069, %v2068
      %v2079 = vpack.c.b16 %v2071, %v2070
      %2088 = vmatpush.bf16.msra.mxu0 %v2079
      %2089 = vmatpush.bf16.msra.mxu0 %v2078
      %2090 = vmatpush.bf16.msra.mxu0 %v2077
      %2091 = vmatpush.bf16.msra.mxu0 %v2076
      %2092 = vmatpush.bf16.msra.mxu0 %v2075
      %2093 = vmatpush.bf16.msra.mxu0 %v2074
      %2094 = vmatpush.bf16.msra.mxu0 %v2073
      %2095 = vmatpush.bf16.msra.mxu0 %v2072
      %2096 = vmatmul.bf16.gmra.mxu0 %v2032
      %v2097 = vpop.f32.mrf.mxu0
      %v2098 = vadd.f32 0.0, %v2097
      %v2099 = vpop.f32.mrf.mxu0
      %v2100 = vadd.f32 0.0, %v2099
      %2101 = vmatmul.bf16.gmra.mxu0 %v2033
      %v2102 = vpop.f32.mrf.mxu0
      %v2103 = vadd.f32 0.0, %v2102
      %v2104 = vpop.f32.mrf.mxu0
      %v2105 = vadd.f32 0.0, %v2104
      %2106 = vmatmul.bf16.gmra.mxu0 %v2034
      %v2107 = vpop.f32.mrf.mxu0
      %v2108 = vadd.f32 0.0, %v2107
      %v2109 = vpop.f32.mrf.mxu0
      %v2110 = vadd.f32 0.0, %v2109
      %2111 = vmatmul.bf16.gmra.mxu0 %v2035
      %v2112 = vpop.f32.mrf.mxu0
      %v2113 = vadd.f32 0.0, %v2112
      %v2114 = vpop.f32.mrf.mxu0
      %v2115 = vadd.f32 0.0, %v2114
      %2116 = vdwg.mxu0
      %v2117 = vadd.f32 %v1943, %v2098
      %v2118 = vadd.f32 %v1944, %v2100
      %v2119 = vadd.f32 %v1945, %v2103
      %v2120 = vadd.f32 %v1946, %v2105
      %v2121 = vadd.f32 %v1947, %v2108
      %v2122 = vadd.f32 %v1948, %v2110
      %v2123 = vadd.f32 %v1949, %v2113
      %v2124 = vadd.f32 %v1950, %v2115
      %v2125 = vpack.c.bf16 %v2117, %v2117
      %v2126 = vpack.c.bf16 %v2118, %v2118
      %v2127 = vpack.c.bf16 %v2119, %v2119
      %v2128 = vpack.c.bf16 %v2120, %v2120
      %v2129 = vpack.c.bf16 %v2121, %v2121
      %v2130 = vpack.c.bf16 %v2122, %v2122
      %v2131 = vpack.c.bf16 %v2123, %v2123
      %v2132 = vpack.c.bf16 %v2124, %v2124
      %2133 = vst [vmem:[%s262] sm:$0xf] %v2125
      %2134 = vst [vmem:[%s262 + $0x4] sm:$0xf] %v2126
      %2135 = vst [vmem:[%s262 + $0x8] sm:$0xf] %v2127
      %2136 = vst [vmem:[%s262 + $0xc] sm:$0xf] %v2128
      %2137 = vst [vmem:[%s262 + $0x10] sm:$0xf] %v2129
      %2138 = vst [vmem:[%s262 + $0x14] sm:$0xf] %v2130
      %2139 = vst [vmem:[%s262 + $0x18] sm:$0xf] %v2131
      %2140 = vst [vmem:[%s262 + $0x1c] sm:$0xf] %v2132
      %v2141 = vadd.f32 %v2117, %v2118
      %v2142 = vadd.f32 %v2141, %v2119
      %v2143 = vadd.f32 %v2142, %v2120
      %v2144 = vadd.f32 %v2143, %v2121
      %v2145 = vadd.f32 %v2144, %v2122
      %v2146 = vadd.f32 %v2145, %v2123
      %v2147 = vadd.f32 %v2146, %v2124
      %v2148 = vrot.slane %v2147, 4
      %v2149 = vadd.f32 %v2147, %v2148
      %v2150 = vrot.slane %v2149, 2
      %v2151 = vadd.f32 %v2149, %v2150
      %v2152 = vrot.slane %v2151, 1
      %v2153 = vadd.f32 %v2151, %v2152
      %2154 = vst [vmem:[%s265] sm:$0x1] %v2153
      %v2155 = vmul.f32 %v2117, %v2117
      %v2156 = vmul.f32 %v2118, %v2118
      %v2157 = vmul.f32 %v2119, %v2119
      %v2158 = vmul.f32 %v2120, %v2120
      %v2159 = vmul.f32 %v2121, %v2121
      %v2160 = vmul.f32 %v2122, %v2122
      %v2161 = vmul.f32 %v2123, %v2123
      %v2162 = vmul.f32 %v2124, %v2124
      %v2163 = vadd.f32 %v2155, %v2156
      %v2164 = vadd.f32 %v2163, %v2157
      %v2165 = vadd.f32 %v2164, %v2158
      %v2166 = vadd.f32 %v2165, %v2159
      %v2167 = vadd.f32 %v2166, %v2160
      %v2168 = vadd.f32 %v2167, %v2161
      %v2169 = vadd.f32 %v2168, %v2162
      %v2170 = vrot.slane %v2169, 4
      %v2171 = vadd.f32 %v2169, %v2170
      %v2172 = vrot.slane %v2171, 2
      %v2173 = vadd.f32 %v2171, %v2172
      %v2174 = vrot.slane %v2173, 1
      %v2175 = vadd.f32 %v2173, %v2174
      %2176 = vst [vmem:[%s268] sm:$0x1] %v2175
      %p2177 = scmp.lt.s32.totalorder %s18, 1
      %s2178 = scalar_select %p2177, %s18, 1
      %s2179 = smul.addr %s2178, 8
      %s2180 = smul.addr %s2179, 4
      %s2181 = scalar_lea.vmem %s4, %s2180
      %p2182 = scmp.lt.s32.totalorder %s18, 1
      %s2183 = scalar_select %p2182, %s18, 1
      %s2184 = scalar_lea.vmem %s5, %s2183
      %p2185 = scmp.lt.s32.totalorder %s18, 1
      %s2186 = scalar_select %p2185, %s18, 1
      %s2187 = scalar_lea.vmem %s6, %s2186
      // Predicated region
      $region37: #{bottleneck_forward.5} parent=35 // pred_check
        %p2188 = pneg %p125
      $region38: #{bottleneck_forward.5} parent=35 // pred_check_branch
        %2190 = sbr.rel (%p2188) target = $region40
      $region39: #{bottleneck_forward.5} parent=35 // pred_region
        _
      $region40: #{bottleneck_forward.5} parent=35 // pred_fallthru
        _
      // Predicated region
      $region41: #{bottleneck_forward.5} parent=35 // pred_check
        %p2191 = pneg %p151
      $region42: #{bottleneck_forward.5} parent=35 // pred_check_branch
        %2193 = sbr.rel (%p2191) target = $region44
      $region43: #{bottleneck_forward.5} parent=35 // pred_region
        _
      $region44: #{bottleneck_forward.5} parent=35 // pred_fallthru
        _
      // Predicated region
      $region45: #{bottleneck_forward.5} parent=35 // pred_check
        %p2194 = pneg %p177
      $region46: #{bottleneck_forward.5} parent=35 // pred_check_branch
        %2196 = sbr.rel (%p2194) target = $region48
      $region47: #{bottleneck_forward.5} parent=35 // pred_region
        _
      $region48: #{bottleneck_forward.5} parent=35 // pred_fallthru
        _
    $region36: #{bottleneck_forward.5} parent=5 // pred_fallthru
      _
    %p2197 = scmp.le.s32.totalorder 2, %s13
    // Predicated region
    $region49: #{bottleneck_forward.5} parent=5 // pred_check
      %p2198 = pneg %p2197
    $region50: #{bottleneck_forward.5} parent=5 // pred_check_branch
      %2200 = sbr.rel (%p2198) target = $region52
    $region51: #{bottleneck_forward.5} parent=5 // pred_region
      %s2201 = ssub.s32 %s13, 2
      // Predicated region
      $region53: #{bottleneck_forward.5} parent=51 // pred_check
        %p2202 = pneg %p131
      $region54: #{bottleneck_forward.5} parent=51 // pred_check_branch
        %2204 = sbr.rel (%p2202) target = $region56
      $region55: #{bottleneck_forward.5} parent=51 // pred_region
        %p2205 = scmp.lt.s32.totalorder %s19, 1
        %s2206 = scalar_select %p2205, %s19, 1
        %s2207 = smul.addr %s2206, 8
        %s2208 = smul.addr %s2207, 4
        %s2209 = scalar_lea.vmem %s4, %s2208
      $region56: #{bottleneck_forward.5} parent=51 // pred_fallthru
        _
      // Predicated region
      $region57: #{bottleneck_forward.5} parent=51 // pred_check
        %p2210 = pneg %p157
      $region58: #{bottleneck_forward.5} parent=51 // pred_check_branch
        %2212 = sbr.rel (%p2210) target = $region60
      $region59: #{bottleneck_forward.5} parent=51 // pred_region
        %p2213 = scmp.lt.s32.totalorder %s19, 1
        %s2214 = scalar_select %p2213, %s19, 1
        %s2215 = scalar_lea.vmem %s5, %s2214
      $region60: #{bottleneck_forward.5} parent=51 // pred_fallthru
        _
      // Predicated region
      $region61: #{bottleneck_forward.5} parent=51 // pred_check
        %p2216 = pneg %p183
      $region62: #{bottleneck_forward.5} parent=51 // pred_check_branch
        %2218 = sbr.rel (%p2216) target = $region64
      $region63: #{bottleneck_forward.5} parent=51 // pred_region
        %p2219 = scmp.lt.s32.totalorder %s19, 1
        %s2220 = scalar_select %p2219, %s19, 1
        %s2221 = scalar_lea.vmem %s6, %s2220
      $region64: #{bottleneck_forward.5} parent=51 // pred_fallthru
        _
    $region52: #{bottleneck_forward.5} parent=5 // pred_fallthru
      _
  $region6: #{bottleneck_forward.5} parent=0 // loop_footer
    %s17 = sadd.s32 1, %s13
  $region7: #{bottleneck_forward.5} parent=0 // loop_footer_branch
    %12 = sbr.rel target = $region3
  $region8: #{bottleneck_forward.5} parent=0 // loop_exit
    _

</llo_original>
